<compile_context>
chip_gen: v5e
topology: v5e:2x2
jax: 0.10.0
libtpu: 0.0.40
codegen_flags: <defaults>
</compile_context>

<pallas_src>
import jax
import jax.numpy as jnp
from jax.experimental import pallas as pl
from jax.experimental.pallas import tpu as pltpu

HIDDEN = (768, 512, 256)   # Encoder hidden_dim (decoder uses the reverse)
ENC = 64                   # encoding_size
BERT_DIM = 768
CLS_OUT = 1                # output_dim_classifier
CLS_PAD = 128              # classifier output lane-padded to 128 for a dense store

# MACs per batch row (used for the CostEstimate)
_MACS_PER_ROW = (
    BERT_DIM * HIDDEN[0] + HIDDEN[0] * HIDDEN[1] + HIDDEN[1] * HIDDEN[2]  # encoder MLP
    + HIDDEN[2] * (2 * ENC)                                               # fused mu|log_var
    + ENC * HIDDEN[2] + HIDDEN[2] * HIDDEN[1] + HIDDEN[1] * HIDDEN[0]     # decoder MLP
    + HIDDEN[2] * 128 + 128 * 64 + 64 * CLS_PAD                           # classifier
)


def vae_kernel(pooled_ref, eps_ref,
               we1, be1, we2, be2, we3, be3,      # encoder MLP (weights bf16, biases f32)
               wmulv, bmulv,                      # fused codings_mean|codings_log_var
               wd1, bd1, wd2, bd2, wd3, bd3,      # decoder MLP
               wc1, bc1, wc2, bc2, wc3, bc3,      # decoder classifier (last layer lane-padded)
               x_out, mulv_out, h2_out, y_out):
    def dense(x, w_ref, b_ref, relu=True):
        # Cast only the matmul LHS to bf16 (weights already bf16); accumulate in f32.
        # Inter-layer activations remain f32 (v5e VPU/EUP have no bf16 path).
        y = jnp.dot(x.astype(jnp.bfloat16), w_ref[...],
                    preferred_element_type=jnp.float32) + b_ref[...]
        return jnp.maximum(y, 0.0) if relu else y

    # ---- Encoder MLP (pooling already done in the wrapper) ----
    # NOTE: nn.Dropout layers are identity here (eval-mode semantics).
    x = dense(pooled_ref[...], we1, be1)           # 768 -> 768, ReLU
    x = dense(x, we2, be2)                         # 768 -> 512, ReLU
    x = dense(x, we3, be3)                         # 512 -> 256, ReLU
    h2_out[...] = x                                # head_2

    # Fused mu|log_var projection: one lane-dense 128-wide matmul + unmasked store.
    mulv = dense(x, wmulv, bmulv, relu=False)      # 256 -> 128  (= [mu | log_var])
    mulv_out[...] = mulv
    mu = mulv[:, :ENC]
    lv = mulv[:, ENC:]

    # SamplingLayer: codings = mu + exp(0.5*log_var) * eps, eps ~ N(0,1) from host.
    codings = mu + jnp.exp(0.5 * lv) * eps_ref[...]

    # ---- Decoder ----
    d = dense(codings, wd1, bd1)                   # 64  -> 256, ReLU
    d = dense(d, wd2, bd2)                         # 256 -> 512, ReLU
    d = dense(d, wd3, bd3)                         # 512 -> 768, ReLU
    x_out[...] = d

    # ---- DecoderClassifier (operates on head_2) ----
    y = dense(x, wc1, bc1)                         # 256 -> 128, ReLU
    y = dense(y, wc2, bc2)                         # 128 -> 64,  ReLU
    y_out[...] = dense(y, wc3, bc3, relu=False)    # 64  -> 128 (lane-padded; col 0 is real)


def _linear(key, din, dout):
    kw, kb = jax.random.split(key)
    lim = 1.0 / float(din) ** 0.5
    w = jax.random.uniform(kw, (din, dout), jnp.float32, -lim, lim).astype(jnp.bfloat16)
    b = jax.random.uniform(kb, (1, dout), jnp.float32, -lim, lim)
    return w, b


def init_params(key, vocab=128):
    keys = jax.random.split(key, 12)
    we1, be1 = _linear(keys[0], BERT_DIM, HIDDEN[0])
    we2, be2 = _linear(keys[1], HIDDEN[0], HIDDEN[1])
    we3, be3 = _linear(keys[2], HIDDEN[1], HIDDEN[2])
    wmu, bmu = _linear(keys[3], HIDDEN[2], ENC)
    wlv, blv = _linear(keys[4], HIDDEN[2], ENC)
    # Fuse codings_mean | codings_log_var into one lane-dense [256, 128] projection.
    wmulv = jnp.concatenate([wmu, wlv], axis=1)
    bmulv = jnp.concatenate([bmu, blv], axis=1)
    wd1, bd1 = _linear(keys[5], ENC, HIDDEN[2])
    wd2, bd2 = _linear(keys[6], HIDDEN[2], HIDDEN[1])
    wd3, bd3 = _linear(keys[7], HIDDEN[1], HIDDEN[0])
    wc1, bc1 = _linear(keys[8], HIDDEN[2], 128)
    wc2, bc2 = _linear(keys[9], 128, 64)
    wc3, bc3 = _linear(keys[10], 64, CLS_OUT)
    # Pad the classifier's last layer 1 -> 128 output lanes (zero cols) => unmasked store.
    wc3p = jnp.zeros((64, CLS_PAD), wc3.dtype).at[:, :CLS_OUT].set(wc3)
    bc3p = jnp.zeros((1, CLS_PAD), bc3.dtype).at[:, :CLS_OUT].set(bc3)
    bert_emb = 0.02 * jax.random.normal(keys[11], (vocab, BERT_DIM), jnp.float32)
    weights = (we1, be1, we2, be2, we3, be3, wmulv, bmulv,
               wd1, bd1, wd2, bd2, wd3, bd3,
               wc1, bc1, wc2, bc2, wc3p, bc3p)
    return {"weights": weights, "bert_emb": bert_emb}


@jax.jit
def vae_forward(params, input_ids, attention_mask, eps):
    # TODO(synk): the pretrained BERT encoder has no clean Pallas equivalent; a
    # deterministic embedding-table lookup stands in for bert(...).last_hidden_state.
    del attention_mask  # Encoder._pool in the reference is a plain mean (mask unused).
    h = params["bert_emb"][input_ids]              # [B, S, 768] surrogate BERT
    pooled = jnp.mean(h, axis=1)                   # pool in XLA; kernel never sees [B,S,768]
    head_1 = pooled
    weights = params["weights"]
    B = pooled.shape[0]

    # Batch tiling: one block at small B, 256-row tiles (MXU M-dim) at large B.
    TB = B if B <= 256 else 256
    Bp = ((B + TB - 1) // TB) * TB
    if Bp != B:
        pad = Bp - B
        pooled_p = jnp.pad(pooled, ((0, pad), (0, 0)))
        eps_p = jnp.pad(eps, ((0, pad), (0, 0)))
    else:
        pooled_p, eps_p = pooled, eps
    nb = Bp // TB

    f32 = jnp.float32
    out_shape = (
        jax.ShapeDtypeStruct((Bp, BERT_DIM), f32),     # x  (decoder reconstruction)
        jax.ShapeDtypeStruct((Bp, 2 * ENC), f32),      # mu | log_var (fused)
        jax.ShapeDtypeStruct((Bp, HIDDEN[-1]), f32),   # head_2
        jax.ShapeDtypeStruct((Bp, CLS_PAD), f32),      # classifier (lane-padded)
    )

    def act_spec(d):
        return pl.BlockSpec((TB, d), lambda i: (i, 0))

    def w_spec(a):
        # Constant block index => weight tile stays VMEM-resident across batch tiles.
        return pl.BlockSpec(a.shape, lambda i: (0, 0))

    in_specs = [act_spec(BERT_DIM), act_spec(ENC)] + [w_spec(w) for w in weights]
    out_specs = (act_spec(BERT_DIM), act_spec(2 * ENC),
                 act_spec(HIDDEN[-1]), act_spec(CLS_PAD))

    weight_bytes = sum(int(w.size) * w.dtype.itemsize for w in weights)
    act_bytes = (pooled_p.size + eps_p.size) * 4
    out_bytes = Bp * (BERT_DIM + 2 * ENC + HIDDEN[-1] + CLS_PAD) * 4
    cost = pl.CostEstimate(
        flops=2 * Bp * _MACS_PER_ROW,
        transcendentals=Bp * ENC,                  # exp(0.5*log_var)
        bytes_accessed=weight_bytes + act_bytes + out_bytes,
    )

    x, mulv, head_2, ycls = pl.pallas_call(
        vae_kernel,
        out_shape=out_shape,
        grid_spec=pltpu.PrefetchScalarGridSpec(
            num_scalar_prefetch=0,
            grid=(nb,),
            in_specs=in_specs,
            out_specs=out_specs,
        ),
        compiler_params=pltpu.CompilerParams(
            # Weight-DMA bound at small B: keep it single-core / sequential.
            dimension_semantics=("arbitrary",),
            # ~3.5 MB bf16 weights (x2 buffering) + small activations; fits every gen
            # including v7x's 64 MiB physical VMEM.
            vmem_limit_bytes=32 << 20,
        ),
        cost_estimate=cost,
    )(pooled_p, eps_p, *weights)

    x = x[:B]
    mu = mulv[:B, :ENC]
    log_var = mulv[:B, ENC:]
    head_2 = head_2[:B]
    y = ycls[:B, :CLS_OUT]
    return x, mu, log_var, head_1, head_2, y


if __name__ == "__main__":
    key = jax.random.PRNGKey(0)
    k_param, k_ids, k_eps = jax.random.split(key, 3)
    params = init_params(k_param, vocab=128)

    B, S = 2, 8
    input_ids = jax.random.randint(k_ids, (B, S), 0, 128, dtype=jnp.int32)
    attention_mask = jnp.ones((B, S), dtype=jnp.int32)
    eps = jax.random.normal(k_eps, (B, ENC), dtype=jnp.float32)

    out = vae_forward(params, input_ids, attention_mask, eps)
    jax.block_until_ready(out)
    x, mu, log_var, head_1, head_2, y = out

    assert x.shape == (B, BERT_DIM)
    assert mu.shape == (B, ENC) and log_var.shape == (B, ENC)
    assert head_1.shape == (B, BERT_DIM) and head_2.shape == (B, HIDDEN[-1])
    assert y.shape == (B, CLS_OUT)
    print("KERNEL_OK")
</pallas_src>

<mosaic_0001>
module attributes {stable_mosaic.version = 11 : i64} {
  func.func @vae_kernel(%arg0: i32, %arg1: memref<2x768xf32, #tpu.memory_space<vmem>>, %arg2: memref<2x64xf32, #tpu.memory_space<vmem>>, %arg3: memref<768x768xbf16, #tpu.memory_space<vmem>>, %arg4: memref<1x768xf32, #tpu.memory_space<vmem>>, %arg5: memref<768x512xbf16, #tpu.memory_space<vmem>>, %arg6: memref<1x512xf32, #tpu.memory_space<vmem>>, %arg7: memref<512x256xbf16, #tpu.memory_space<vmem>>, %arg8: memref<1x256xf32, #tpu.memory_space<vmem>>, %arg9: memref<256x128xbf16, #tpu.memory_space<vmem>>, %arg10: memref<1x128xf32, #tpu.memory_space<vmem>>, %arg11: memref<64x256xbf16, #tpu.memory_space<vmem>>, %arg12: memref<1x256xf32, #tpu.memory_space<vmem>>, %arg13: memref<256x512xbf16, #tpu.memory_space<vmem>>, %arg14: memref<1x512xf32, #tpu.memory_space<vmem>>, %arg15: memref<512x768xbf16, #tpu.memory_space<vmem>>, %arg16: memref<1x768xf32, #tpu.memory_space<vmem>>, %arg17: memref<256x128xbf16, #tpu.memory_space<vmem>>, %arg18: memref<1x128xf32, #tpu.memory_space<vmem>>, %arg19: memref<128x64xbf16, #tpu.memory_space<vmem>>, %arg20: memref<1x64xf32, #tpu.memory_space<vmem>>, %arg21: memref<64x128xbf16, #tpu.memory_space<vmem>>, %arg22: memref<1x128xf32, #tpu.memory_space<vmem>>, %arg23: memref<2x768xf32, #tpu.memory_space<vmem>>, %arg24: memref<2x128xf32, #tpu.memory_space<vmem>>, %arg25: memref<2x256xf32, #tpu.memory_space<vmem>>, %arg26: memref<2x128xf32, #tpu.memory_space<vmem>>) attributes {dimension_semantics = [#tpu.dimension_semantics<arbitrary>], iteration_bounds = array<i64: 1>, scalar_prefetch = 0 : i64, scratch_operands = 0 : i64, tpu.core_type = #tpu.core_type<tc>, window_params = [{transform_indices = @transform_0, window_bounds = array<i64: 2, 768>}, {transform_indices = @transform_1, window_bounds = array<i64: 2, 64>}, {pipeline_mode = #tpu.pipeline_mode<synchronous>, transform_indices = @transform_2, window_bounds = array<i64: 768, 768>}, {pipeline_mode = #tpu.pipeline_mode<synchronous>, transform_indices = @transform_3, window_bounds = array<i64: 1, 768>}, {pipeline_mode = #tpu.pipeline_mode<synchronous>, transform_indices = @transform_4, window_bounds = array<i64: 768, 512>}, {pipeline_mode = #tpu.pipeline_mode<synchronous>, transform_indices = @transform_5, window_bounds = array<i64: 1, 512>}, {pipeline_mode = #tpu.pipeline_mode<synchronous>, transform_indices = @transform_6, window_bounds = array<i64: 512, 256>}, {pipeline_mode = #tpu.pipeline_mode<synchronous>, transform_indices = @transform_7, window_bounds = array<i64: 1, 256>}, {pipeline_mode = #tpu.pipeline_mode<synchronous>, transform_indices = @transform_8, window_bounds = array<i64: 256, 128>}, {pipeline_mode = #tpu.pipeline_mode<synchronous>, transform_indices = @transform_9, window_bounds = array<i64: 1, 128>}, {pipeline_mode = #tpu.pipeline_mode<synchronous>, transform_indices = @transform_10, window_bounds = array<i64: 64, 256>}, {pipeline_mode = #tpu.pipeline_mode<synchronous>, transform_indices = @transform_11, window_bounds = array<i64: 1, 256>}, {pipeline_mode = #tpu.pipeline_mode<synchronous>, transform_indices = @transform_12, window_bounds = array<i64: 256, 512>}, {pipeline_mode = #tpu.pipeline_mode<synchronous>, transform_indices = @transform_13, window_bounds = array<i64: 1, 512>}, {pipeline_mode = #tpu.pipeline_mode<synchronous>, transform_indices = @transform_14, window_bounds = array<i64: 512, 768>}, {pipeline_mode = #tpu.pipeline_mode<synchronous>, transform_indices = @transform_15, window_bounds = array<i64: 1, 768>}, {pipeline_mode = #tpu.pipeline_mode<synchronous>, transform_indices = @transform_16, window_bounds = array<i64: 256, 128>}, {pipeline_mode = #tpu.pipeline_mode<synchronous>, transform_indices = @transform_17, window_bounds = array<i64: 1, 128>}, {pipeline_mode = #tpu.pipeline_mode<synchronous>, transform_indices = @transform_18, window_bounds = array<i64: 128, 64>}, {pipeline_mode = #tpu.pipeline_mode<synchronous>, transform_indices = @transform_19, window_bounds = array<i64: 1, 64>}, {pipeline_mode = #tpu.pipeline_mode<synchronous>, transform_indices = @transform_20, window_bounds = array<i64: 64, 128>}, {pipeline_mode = #tpu.pipeline_mode<synchronous>, transform_indices = @transform_21, window_bounds = array<i64: 1, 128>}, {transform_indices = @transform_22, window_bounds = array<i64: 2, 768>}, {transform_indices = @transform_23, window_bounds = array<i64: 2, 128>}, {transform_indices = @transform_24, window_bounds = array<i64: 2, 256>}, {transform_indices = @transform_25, window_bounds = array<i64: 2, 128>}]} {
    %c0 = arith.constant 0 : index
    %c0_0 = arith.constant 0 : index
    %0 = vector.load %arg1[%c0, %c0_0] : memref<2x768xf32, #tpu.memory_space<vmem>>, vector<2x768xf32>
    %1 = arith.truncf %0 : vector<2x768xf32> to vector<2x768xbf16>
    %c0_1 = arith.constant 0 : index
    %c0_2 = arith.constant 0 : index
    %2 = vector.load %arg3[%c0_1, %c0_2] : memref<768x768xbf16, #tpu.memory_space<vmem>>, vector<768x768xbf16>
    %cst = arith.constant dense<0.000000e+00> : vector<2x768xf32>
    %3 = tpu.matmul %1, %2, %cst {dimension_numbers = #tpu.dot_dimension_numbers<[1], [0], [0], [1], [0, 0, 1, 1], [], []>} : vector<2x768xbf16>, vector<768x768xbf16>, vector<2x768xf32> -> vector<2x768xf32>
    %c0_3 = arith.constant 0 : index
    %c0_4 = arith.constant 0 : index
    %4 = vector.load %arg4[%c0_3, %c0_4] : memref<1x768xf32, #tpu.memory_space<vmem>>, vector<1x768xf32>
    %5 = vector.broadcast %4 : vector<1x768xf32> to vector<2x768xf32>
    %6 = arith.addf %3, %5 : vector<2x768xf32>
    %cst_5 = arith.constant 0.000000e+00 : f32
    %7 = vector.broadcast %cst_5 : f32 to vector<2x768xf32>
    %8 = arith.maximumf %6, %7 : vector<2x768xf32>
    %9 = arith.truncf %8 : vector<2x768xf32> to vector<2x768xbf16>
    %c0_6 = arith.constant 0 : index
    %c0_7 = arith.constant 0 : index
    %10 = vector.load %arg5[%c0_6, %c0_7] : memref<768x512xbf16, #tpu.memory_space<vmem>>, vector<768x512xbf16>
    %cst_8 = arith.constant dense<0.000000e+00> : vector<2x512xf32>
    %11 = tpu.matmul %9, %10, %cst_8 {dimension_numbers = #tpu.dot_dimension_numbers<[1], [0], [0], [1], [0, 0, 1, 1], [], []>} : vector<2x768xbf16>, vector<768x512xbf16>, vector<2x512xf32> -> vector<2x512xf32>
    %c0_9 = arith.constant 0 : index
    %c0_10 = arith.constant 0 : index
    %12 = vector.load %arg6[%c0_9, %c0_10] : memref<1x512xf32, #tpu.memory_space<vmem>>, vector<1x512xf32>
    %13 = vector.broadcast %12 : vector<1x512xf32> to vector<2x512xf32>
    %14 = arith.addf %11, %13 : vector<2x512xf32>
    %cst_11 = arith.constant 0.000000e+00 : f32
    %15 = vector.broadcast %cst_11 : f32 to vector<2x512xf32>
    %16 = arith.maximumf %14, %15 : vector<2x512xf32>
    %17 = arith.truncf %16 : vector<2x512xf32> to vector<2x512xbf16>
    %c0_12 = arith.constant 0 : index
    %c0_13 = arith.constant 0 : index
    %18 = vector.load %arg7[%c0_12, %c0_13] : memref<512x256xbf16, #tpu.memory_space<vmem>>, vector<512x256xbf16>
    %cst_14 = arith.constant dense<0.000000e+00> : vector<2x256xf32>
    %19 = tpu.matmul %17, %18, %cst_14 {dimension_numbers = #tpu.dot_dimension_numbers<[1], [0], [0], [1], [0, 0, 1, 1], [], []>} : vector<2x512xbf16>, vector<512x256xbf16>, vector<2x256xf32> -> vector<2x256xf32>
    %c0_15 = arith.constant 0 : index
    %c0_16 = arith.constant 0 : index
    %20 = vector.load %arg8[%c0_15, %c0_16] : memref<1x256xf32, #tpu.memory_space<vmem>>, vector<1x256xf32>
    %21 = vector.broadcast %20 : vector<1x256xf32> to vector<2x256xf32>
    %22 = arith.addf %19, %21 : vector<2x256xf32>
    %cst_17 = arith.constant 0.000000e+00 : f32
    %23 = vector.broadcast %cst_17 : f32 to vector<2x256xf32>
    %24 = arith.maximumf %22, %23 : vector<2x256xf32>
    %c0_18 = arith.constant 0 : index
    %c0_19 = arith.constant 0 : index
    %25 = vector.load %arg25[%c0_18, %c0_19] : memref<2x256xf32, #tpu.memory_space<vmem>>, vector<2x256xf32>
    tpu.vector_store %arg25[%c0_18, %c0_19], %24 {strides = array<i32>} : memref<2x256xf32, #tpu.memory_space<vmem>>, vector<2x256xf32>,
    %26 = arith.truncf %24 : vector<2x256xf32> to vector<2x256xbf16>
    %c0_20 = arith.constant 0 : index
    %c0_21 = arith.constant 0 : index
    %27 = vector.load %arg9[%c0_20, %c0_21] : memref<256x128xbf16, #tpu.memory_space<vmem>>, vector<256x128xbf16>
    %cst_22 = arith.constant dense<0.000000e+00> : vector<2x128xf32>
    %28 = tpu.matmul %26, %27, %cst_22 {dimension_numbers = #tpu.dot_dimension_numbers<[1], [0], [0], [1], [0, 0, 1, 1], [], []>} : vector<2x256xbf16>, vector<256x128xbf16>, vector<2x128xf32> -> vector<2x128xf32>
    %c0_23 = arith.constant 0 : index
    %c0_24 = arith.constant 0 : index
    %29 = vector.load %arg10[%c0_23, %c0_24] : memref<1x128xf32, #tpu.memory_space<vmem>>, vector<1x128xf32>
    %30 = vector.broadcast %29 : vector<1x128xf32> to vector<2x128xf32>
    %31 = arith.addf %28, %30 : vector<2x128xf32>
    %c0_25 = arith.constant 0 : index
    %c0_26 = arith.constant 0 : index
    %32 = vector.load %arg24[%c0_25, %c0_26] : memref<2x128xf32, #tpu.memory_space<vmem>>, vector<2x128xf32>
    tpu.vector_store %arg24[%c0_25, %c0_26], %31 {strides = array<i32>} : memref<2x128xf32, #tpu.memory_space<vmem>>, vector<2x128xf32>,
    %33 = vector.extract_strided_slice %31 {offsets = [0, 0], sizes = [2, 64], strides = [1, 1]} : vector<2x128xf32> to vector<2x64xf32>
    %34 = vector.extract_strided_slice %31 {offsets = [0, 64], sizes = [2, 64], strides = [1, 1]} : vector<2x128xf32> to vector<2x64xf32>
    %cst_27 = arith.constant 5.000000e-01 : f32
    %35 = vector.broadcast %cst_27 : f32 to vector<2x64xf32>
    %36 = arith.mulf %35, %34 : vector<2x64xf32>
    %37 = math.exp %36 : vector<2x64xf32>
    %c0_28 = arith.constant 0 : index
    %c0_29 = arith.constant 0 : index
    %38 = vector.load %arg2[%c0_28, %c0_29] : memref<2x64xf32, #tpu.memory_space<vmem>>, vector<2x64xf32>
    %39 = arith.mulf %37, %38 : vector<2x64xf32>
    %40 = arith.addf %33, %39 : vector<2x64xf32>
    %41 = arith.truncf %40 : vector<2x64xf32> to vector<2x64xbf16>
    %c0_30 = arith.constant 0 : index
    %c0_31 = arith.constant 0 : index
    %42 = vector.load %arg11[%c0_30, %c0_31] : memref<64x256xbf16, #tpu.memory_space<vmem>>, vector<64x256xbf16>
    %cst_32 = arith.constant dense<0.000000e+00> : vector<2x256xf32>
    %43 = tpu.matmul %41, %42, %cst_32 {dimension_numbers = #tpu.dot_dimension_numbers<[1], [0], [0], [1], [0, 0, 1, 1], [], []>} : vector<2x64xbf16>, vector<64x256xbf16>, vector<2x256xf32> -> vector<2x256xf32>
    %c0_33 = arith.constant 0 : index
    %c0_34 = arith.constant 0 : index
    %44 = vector.load %arg12[%c0_33, %c0_34] : memref<1x256xf32, #tpu.memory_space<vmem>>, vector<1x256xf32>
    %45 = vector.broadcast %44 : vector<1x256xf32> to vector<2x256xf32>
    %46 = arith.addf %43, %45 : vector<2x256xf32>
    %cst_35 = arith.constant 0.000000e+00 : f32
    %47 = vector.broadcast %cst_35 : f32 to vector<2x256xf32>
    %48 = arith.maximumf %46, %47 : vector<2x256xf32>
    %49 = arith.truncf %48 : vector<2x256xf32> to vector<2x256xbf16>
    %c0_36 = arith.constant 0 : index
    %c0_37 = arith.constant 0 : index
    %50 = vector.load %arg13[%c0_36, %c0_37] : memref<256x512xbf16, #tpu.memory_space<vmem>>, vector<256x512xbf16>
    %cst_38 = arith.constant dense<0.000000e+00> : vector<2x512xf32>
    %51 = tpu.matmul %49, %50, %cst_38 {dimension_numbers = #tpu.dot_dimension_numbers<[1], [0], [0], [1], [0, 0, 1, 1], [], []>} : vector<2x256xbf16>, vector<256x512xbf16>, vector<2x512xf32> -> vector<2x512xf32>
    %c0_39 = arith.constant 0 : index
    %c0_40 = arith.constant 0 : index
    %52 = vector.load %arg14[%c0_39, %c0_40] : memref<1x512xf32, #tpu.memory_space<vmem>>, vector<1x512xf32>
    %53 = vector.broadcast %52 : vector<1x512xf32> to vector<2x512xf32>
    %54 = arith.addf %51, %53 : vector<2x512xf32>
    %cst_41 = arith.constant 0.000000e+00 : f32
    %55 = vector.broadcast %cst_41 : f32 to vector<2x512xf32>
    %56 = arith.maximumf %54, %55 : vector<2x512xf32>
    %57 = arith.truncf %56 : vector<2x512xf32> to vector<2x512xbf16>
    %c0_42 = arith.constant 0 : index
    %c0_43 = arith.constant 0 : index
    %58 = vector.load %arg15[%c0_42, %c0_43] : memref<512x768xbf16, #tpu.memory_space<vmem>>, vector<512x768xbf16>
    %cst_44 = arith.constant dense<0.000000e+00> : vector<2x768xf32>
    %59 = tpu.matmul %57, %58, %cst_44 {dimension_numbers = #tpu.dot_dimension_numbers<[1], [0], [0], [1], [0, 0, 1, 1], [], []>} : vector<2x512xbf16>, vector<512x768xbf16>, vector<2x768xf32> -> vector<2x768xf32>
    %c0_45 = arith.constant 0 : index
    %c0_46 = arith.constant 0 : index
    %60 = vector.load %arg16[%c0_45, %c0_46] : memref<1x768xf32, #tpu.memory_space<vmem>>, vector<1x768xf32>
    %61 = vector.broadcast %60 : vector<1x768xf32> to vector<2x768xf32>
    %62 = arith.addf %59, %61 : vector<2x768xf32>
    %cst_47 = arith.constant 0.000000e+00 : f32
    %63 = vector.broadcast %cst_47 : f32 to vector<2x768xf32>
    %64 = arith.maximumf %62, %63 : vector<2x768xf32>
    %c0_48 = arith.constant 0 : index
    %c0_49 = arith.constant 0 : index
    %65 = vector.load %arg23[%c0_48, %c0_49] : memref<2x768xf32, #tpu.memory_space<vmem>>, vector<2x768xf32>
    tpu.vector_store %arg23[%c0_48, %c0_49], %64 {strides = array<i32>} : memref<2x768xf32, #tpu.memory_space<vmem>>, vector<2x768xf32>,
    %66 = arith.truncf %24 : vector<2x256xf32> to vector<2x256xbf16>
    %c0_50 = arith.constant 0 : index
    %c0_51 = arith.constant 0 : index
    %67 = vector.load %arg17[%c0_50, %c0_51] : memref<256x128xbf16, #tpu.memory_space<vmem>>, vector<256x128xbf16>
    %cst_52 = arith.constant dense<0.000000e+00> : vector<2x128xf32>
    %68 = tpu.matmul %66, %67, %cst_52 {dimension_numbers = #tpu.dot_dimension_numbers<[1], [0], [0], [1], [0, 0, 1, 1], [], []>} : vector<2x256xbf16>, vector<256x128xbf16>, vector<2x128xf32> -> vector<2x128xf32>
    %c0_53 = arith.constant 0 : index
    %c0_54 = arith.constant 0 : index
    %69 = vector.load %arg18[%c0_53, %c0_54] : memref<1x128xf32, #tpu.memory_space<vmem>>, vector<1x128xf32>
    %70 = vector.broadcast %69 : vector<1x128xf32> to vector<2x128xf32>
    %71 = arith.addf %68, %70 : vector<2x128xf32>
    %cst_55 = arith.constant 0.000000e+00 : f32
    %72 = vector.broadcast %cst_55 : f32 to vector<2x128xf32>
    %73 = arith.maximumf %71, %72 : vector<2x128xf32>
    %74 = arith.truncf %73 : vector<2x128xf32> to vector<2x128xbf16>
    %c0_56 = arith.constant 0 : index
    %c0_57 = arith.constant 0 : index
    %75 = vector.load %arg19[%c0_56, %c0_57] : memref<128x64xbf16, #tpu.memory_space<vmem>>, vector<128x64xbf16>
    %cst_58 = arith.constant dense<0.000000e+00> : vector<2x64xf32>
    %76 = tpu.matmul %74, %75, %cst_58 {dimension_numbers = #tpu.dot_dimension_numbers<[1], [0], [0], [1], [0, 0, 1, 1], [], []>} : vector<2x128xbf16>, vector<128x64xbf16>, vector<2x64xf32> -> vector<2x64xf32>
    %c0_59 = arith.constant 0 : index
    %c0_60 = arith.constant 0 : index
    %77 = vector.load %arg20[%c0_59, %c0_60] : memref<1x64xf32, #tpu.memory_space<vmem>>, vector<1x64xf32>
    %78 = vector.broadcast %77 : vector<1x64xf32> to vector<2x64xf32>
    %79 = arith.addf %76, %78 : vector<2x64xf32>
    %cst_61 = arith.constant 0.000000e+00 : f32
    %80 = vector.broadcast %cst_61 : f32 to vector<2x64xf32>
    %81 = arith.maximumf %79, %80 : vector<2x64xf32>
    %82 = arith.truncf %81 : vector<2x64xf32> to vector<2x64xbf16>
    %c0_62 = arith.constant 0 : index
    %c0_63 = arith.constant 0 : index
    %83 = vector.load %arg21[%c0_62, %c0_63] : memref<64x128xbf16, #tpu.memory_space<vmem>>, vector<64x128xbf16>
    %cst_64 = arith.constant dense<0.000000e+00> : vector<2x128xf32>
    %84 = tpu.matmul %82, %83, %cst_64 {dimension_numbers = #tpu.dot_dimension_numbers<[1], [0], [0], [1], [0, 0, 1, 1], [], []>} : vector<2x64xbf16>, vector<64x128xbf16>, vector<2x128xf32> -> vector<2x128xf32>
    %c0_65 = arith.constant 0 : index
    %c0_66 = arith.constant 0 : index
    %85 = vector.load %arg22[%c0_65, %c0_66] : memref<1x128xf32, #tpu.memory_space<vmem>>, vector<1x128xf32>
    %86 = vector.broadcast %85 : vector<1x128xf32> to vector<2x128xf32>
    %87 = arith.addf %84, %86 : vector<2x128xf32>
    %c0_67 = arith.constant 0 : index
    %c0_68 = arith.constant 0 : index
    %88 = vector.load %arg26[%c0_67, %c0_68] : memref<2x128xf32, #tpu.memory_space<vmem>>, vector<2x128xf32>
    tpu.vector_store %arg26[%c0_67, %c0_68], %87 {strides = array<i32>} : memref<2x128xf32, #tpu.memory_space<vmem>>, vector<2x128xf32>,
    return
  }
  func.func @transform_0(%arg0: i32) -> (i32, i32) {
    %c0_i32 = arith.constant 0 : i32
    %c0_i32_0 = arith.constant 0 : i32
    return %arg0, %c0_i32 : i32, i32
  }
  func.func @transform_1(%arg0: i32) -> (i32, i32) {
    %c0_i32 = arith.constant 0 : i32
    %c0_i32_0 = arith.constant 0 : i32
    return %arg0, %c0_i32 : i32, i32
  }
  func.func @transform_2(%arg0: i32) -> (i32, i32) {
    %c0_i32 = arith.constant 0 : i32
    %c0_i32_0 = arith.constant 0 : i32
    %c0_i32_1 = arith.constant 0 : i32
    return %c0_i32, %c0_i32_0 : i32, i32
  }
  func.func @transform_3(%arg0: i32) -> (i32, i32) {
    %c0_i32 = arith.constant 0 : i32
    %c0_i32_0 = arith.constant 0 : i32
    %c0_i32_1 = arith.constant 0 : i32
    return %c0_i32, %c0_i32_0 : i32, i32
  }
  func.func @transform_4(%arg0: i32) -> (i32, i32) {
    %c0_i32 = arith.constant 0 : i32
    %c0_i32_0 = arith.constant 0 : i32
    %c0_i32_1 = arith.constant 0 : i32
    return %c0_i32, %c0_i32_0 : i32, i32
  }
  func.func @transform_5(%arg0: i32) -> (i32, i32) {
    %c0_i32 = arith.constant 0 : i32
    %c0_i32_0 = arith.constant 0 : i32
    %c0_i32_1 = arith.constant 0 : i32
    return %c0_i32, %c0_i32_0 : i32, i32
  }
  func.func @transform_6(%arg0: i32) -> (i32, i32) {
    %c0_i32 = arith.constant 0 : i32
    %c0_i32_0 = arith.constant 0 : i32
    %c0_i32_1 = arith.constant 0 : i32
    return %c0_i32, %c0_i32_0 : i32, i32
  }
  func.func @transform_7(%arg0: i32) -> (i32, i32) {
    %c0_i32 = arith.constant 0 : i32
    %c0_i32_0 = arith.constant 0 : i32
    %c0_i32_1 = arith.constant 0 : i32
    return %c0_i32, %c0_i32_0 : i32, i32
  }
  func.func @transform_8(%arg0: i32) -> (i32, i32) {
    %c0_i32 = arith.constant 0 : i32
    %c0_i32_0 = arith.constant 0 : i32
    %c0_i32_1 = arith.constant 0 : i32
    return %c0_i32, %c0_i32_0 : i32, i32
  }
  func.func @transform_9(%arg0: i32) -> (i32, i32) {
    %c0_i32 = arith.constant 0 : i32
    %c0_i32_0 = arith.constant 0 : i32
    %c0_i32_1 = arith.constant 0 : i32
    return %c0_i32, %c0_i32_0 : i32, i32
  }
  func.func @transform_10(%arg0: i32) -> (i32, i32) {
    %c0_i32 = arith.constant 0 : i32
    %c0_i32_0 = arith.constant 0 : i32
    %c0_i32_1 = arith.constant 0 : i32
    return %c0_i32, %c0_i32_0 : i32, i32
  }
  func.func @transform_11(%arg0: i32) -> (i32, i32) {
    %c0_i32 = arith.constant 0 : i32
    %c0_i32_0 = arith.constant 0 : i32
    %c0_i32_1 = arith.constant 0 : i32
    return %c0_i32, %c0_i32_0 : i32, i32
  }
  func.func @transform_12(%arg0: i32) -> (i32, i32) {
    %c0_i32 = arith.constant 0 : i32
    %c0_i32_0 = arith.constant 0 : i32
    %c0_i32_1 = arith.constant 0 : i32
    return %c0_i32, %c0_i32_0 : i32, i32
  }
  func.func @transform_13(%arg0: i32) -> (i32, i32) {
    %c0_i32 = arith.constant 0 : i32
    %c0_i32_0 = arith.constant 0 : i32
    %c0_i32_1 = arith.constant 0 : i32
    return %c0_i32, %c0_i32_0 : i32, i32
  }
  func.func @transform_14(%arg0: i32) -> (i32, i32) {
    %c0_i32 = arith.constant 0 : i32
    %c0_i32_0 = arith.constant 0 : i32
    %c0_i32_1 = arith.constant 0 : i32
    return %c0_i32, %c0_i32_0 : i32, i32
  }
  func.func @transform_15(%arg0: i32) -> (i32, i32) {
    %c0_i32 = arith.constant 0 : i32
    %c0_i32_0 = arith.constant 0 : i32
    %c0_i32_1 = arith.constant 0 : i32
    return %c0_i32, %c0_i32_0 : i32, i32
  }
  func.func @transform_16(%arg0: i32) -> (i32, i32) {
    %c0_i32 = arith.constant 0 : i32
    %c0_i32_0 = arith.constant 0 : i32
    %c0_i32_1 = arith.constant 0 : i32
    return %c0_i32, %c0_i32_0 : i32, i32
  }
  func.func @transform_17(%arg0: i32) -> (i32, i32) {
    %c0_i32 = arith.constant 0 : i32
    %c0_i32_0 = arith.constant 0 : i32
    %c0_i32_1 = arith.constant 0 : i32
    return %c0_i32, %c0_i32_0 : i32, i32
  }
  func.func @transform_18(%arg0: i32) -> (i32, i32) {
    %c0_i32 = arith.constant 0 : i32
    %c0_i32_0 = arith.constant 0 : i32
    %c0_i32_1 = arith.constant 0 : i32
    return %c0_i32, %c0_i32_0 : i32, i32
  }
  func.func @transform_19(%arg0: i32) -> (i32, i32) {
    %c0_i32 = arith.constant 0 : i32
    %c0_i32_0 = arith.constant 0 : i32
    %c0_i32_1 = arith.constant 0 : i32
    return %c0_i32, %c0_i32_0 : i32, i32
  }
  func.func @transform_20(%arg0: i32) -> (i32, i32) {
    %c0_i32 = arith.constant 0 : i32
    %c0_i32_0 = arith.constant 0 : i32
    %c0_i32_1 = arith.constant 0 : i32
    return %c0_i32, %c0_i32_0 : i32, i32
  }
  func.func @transform_21(%arg0: i32) -> (i32, i32) {
    %c0_i32 = arith.constant 0 : i32
    %c0_i32_0 = arith.constant 0 : i32
    %c0_i32_1 = arith.constant 0 : i32
    return %c0_i32, %c0_i32_0 : i32, i32
  }
  func.func @transform_22(%arg0: i32) -> (i32, i32) {
    %c0_i32 = arith.constant 0 : i32
    %c0_i32_0 = arith.constant 0 : i32
    return %arg0, %c0_i32 : i32, i32
  }
  func.func @transform_23(%arg0: i32) -> (i32, i32) {
    %c0_i32 = arith.constant 0 : i32
    %c0_i32_0 = arith.constant 0 : i32
    return %arg0, %c0_i32 : i32, i32
  }
  func.func @transform_24(%arg0: i32) -> (i32, i32) {
    %c0_i32 = arith.constant 0 : i32
    %c0_i32_0 = arith.constant 0 : i32
    return %arg0, %c0_i32 : i32, i32
  }
  func.func @transform_25(%arg0: i32) -> (i32, i32) {
    %c0_i32 = arith.constant 0 : i32
    %c0_i32_0 = arith.constant 0 : i32
    return %arg0, %c0_i32 : i32, i32
  }
}

</mosaic_0001>

<llo_original>
// kernel: vae_forward.1
$region0: #{vae_forward.1}
  #allocation0 [shape = 'u32[]', space=smem, size = 0x4, offset = 0x4, fixed_abs, tag = 'smem constant byte address 0x4 - core index']
  #allocation1 [shape = 'u32[72,128]{1,0:T(1,128)}', space=vmem, size = 0x9000, scoped, tag = 'internal scratch']
  %s0 = inlined_call_operand.vmem [shape: f32[2,768], index: 0, kind: input, shape index: {}]
  %s1 = inlined_call_operand.hbm [shape: f32[2,64], index: 1, kind: input, shape index: {}]
  %s2 = inlined_call_operand.hbm [shape: bf16[768,768], index: 2, kind: input, shape index: {}]
  %s3 = inlined_call_operand.hbm [shape: f32[1,768], index: 3, kind: input, shape index: {}]
  %s4 = inlined_call_operand.hbm [shape: bf16[768,512], index: 4, kind: input, shape index: {}]
  %s5 = inlined_call_operand.hbm [shape: f32[1,512], index: 5, kind: input, shape index: {}]
  %s6 = inlined_call_operand.hbm [shape: bf16[512,256], index: 6, kind: input, shape index: {}]
  %s7 = inlined_call_operand.hbm [shape: f32[1,256], index: 7, kind: input, shape index: {}]
  %s8 = inlined_call_operand.hbm [shape: bf16[256,128], index: 8, kind: input, shape index: {}]
  %s9 = inlined_call_operand.hbm [shape: f32[1,128], index: 9, kind: input, shape index: {}]
  %s10 = inlined_call_operand.hbm [shape: bf16[64,256], index: 10, kind: input, shape index: {}]
  %s11 = inlined_call_operand.hbm [shape: f32[1,256], index: 11, kind: input, shape index: {}]
  %s12 = inlined_call_operand.hbm [shape: bf16[256,512], index: 12, kind: input, shape index: {}]
  %s13 = inlined_call_operand.hbm [shape: f32[1,512], index: 13, kind: input, shape index: {}]
  %s14 = inlined_call_operand.hbm [shape: bf16[512,768], index: 14, kind: input, shape index: {}]
  %s15 = inlined_call_operand.hbm [shape: f32[1,768], index: 15, kind: input, shape index: {}]
  %s16 = inlined_call_operand.hbm [shape: bf16[256,128], index: 16, kind: input, shape index: {}]
  %s17 = inlined_call_operand.hbm [shape: f32[1,128], index: 17, kind: input, shape index: {}]
  %s18 = inlined_call_operand.vmem [shape: bf16[128,64], index: 18, kind: input, shape index: {}]
  %s19 = inlined_call_operand.hbm [shape: f32[1,64], index: 19, kind: input, shape index: {}]
  %s20 = inlined_call_operand.hbm [shape: bf16[64,128], index: 20, kind: input, shape index: {}]
  %s21 = inlined_call_operand.hbm [shape: f32[1,128], index: 21, kind: input, shape index: {}]
  %s22 = inlined_call_operand.hbm [shape: f32[2,768], index: 22, kind: output, shape index: {0}]
  %s23 = inlined_call_operand.vmem [shape: f32[2,128], index: 23, kind: output, shape index: {1}]
  %s24 = inlined_call_operand.hbm [shape: f32[2,256], index: 24, kind: output, shape index: {2}]
  %s25 = inlined_call_operand.vmem [shape: f32[2,128], index: 25, kind: output, shape index: {3}]
  %26 = xla_tuple %s22, %s23, %s24, %s25
  %s27 = sld [smem:[#allocation0]]
  $region202: #{vae_forward.1} parent=0
    _
  %s29 = ssub.s32 1, %s27
  %s30 = scalar_select 0, %s29, %s27
  $region1: #{vae_forward.1} parent=0
    #allocation2 [shape = 'u8[1024]{0}', space=vmem, size = 0x400, scoped, tag = 'input window, operand 1, single buffered']
    #allocation3 [shape = 's32[1]{0}', space=sflag, size = 0x4, scoped, tag = 'scoped memory for vae_forward.1']
    #allocation4 [shape = 's32[1]{0}', space=sflag, size = 0x4, scoped, tag = 'scoped memory for vae_forward.1']
    #allocation5 [shape = 'u8[1179648]{0}', space=vmem, size = 0x120000, scoped, tag = 'input window, operand 2, single buffered']
    #allocation6 [shape = 's32[1]{0}', space=sflag, size = 0x4, scoped, tag = 'scoped memory for vae_forward.1']
    #allocation7 [shape = 'u8[3072]{0}', space=vmem, size = 0xc00, scoped, tag = 'input window, operand 3, single buffered']
    #allocation8 [shape = 'u8[786432]{0}', space=vmem, size = 0xc0000, scoped, tag = 'input window, operand 4, single buffered']
    #allocation9 [shape = 's32[1]{0}', space=sflag, size = 0x4, scoped, tag = 'scoped memory for vae_forward.1']
    #allocation10 [shape = 'u8[2048]{0}', space=vmem, size = 0x800, scoped, tag = 'input window, operand 5, single buffered']
    #allocation11 [shape = 'u8[262144]{0}', space=vmem, size = 0x40000, scoped, tag = 'input window, operand 6, single buffered']
    #allocation12 [shape = 's32[1]{0}', space=sflag, size = 0x4, scoped, tag = 'scoped memory for vae_forward.1']
    #allocation13 [shape = 'u8[1024]{0}', space=vmem, size = 0x400, scoped, tag = 'input window, operand 7, single buffered']
    #allocation14 [shape = 'u8[65536]{0}', space=vmem, size = 0x10000, scoped, tag = 'input window, operand 8, single buffered']
    #allocation15 [shape = 's32[1]{0}', space=sflag, size = 0x4, scoped, tag = 'scoped memory for vae_forward.1']
    #allocation16 [shape = 'u8[512]{0}', space=vmem, size = 0x400, scoped, tag = 'input window, operand 9, single buffered']
    #allocation17 [shape = 'u8[32768]{0}', space=vmem, size = 0x8000, scoped, tag = 'input window, operand 10, single buffered']
    #allocation18 [shape = 's32[1]{0}', space=sflag, size = 0x4, scoped, tag = 'scoped memory for vae_forward.1']
    #allocation19 [shape = 'u8[1024]{0}', space=vmem, size = 0x400, scoped, tag = 'input window, operand 11, single buffered']
    #allocation20 [shape = 'u8[262144]{0}', space=vmem, size = 0x40000, scoped, tag = 'input window, operand 12, single buffered']
    #allocation21 [shape = 's32[1]{0}', space=sflag, size = 0x4, scoped, tag = 'scoped memory for vae_forward.1']
    #allocation22 [shape = 'u8[2048]{0}', space=vmem, size = 0x800, scoped, tag = 'input window, operand 13, single buffered']
    #allocation23 [shape = 'u8[786432]{0}', space=vmem, size = 0xc0000, scoped, tag = 'input window, operand 14, single buffered']
    #allocation24 [shape = 's32[1]{0}', space=sflag, size = 0x4, scoped, tag = 'scoped memory for vae_forward.1']
    #allocation25 [shape = 'u8[3072]{0}', space=vmem, size = 0xc00, scoped, tag = 'input window, operand 15, single buffered']
    #allocation26 [shape = 'u8[65536]{0}', space=vmem, size = 0x10000, scoped, tag = 'input window, operand 16, single buffered']
    #allocation27 [shape = 's32[1]{0}', space=sflag, size = 0x4, scoped, tag = 'scoped memory for vae_forward.1']
    #allocation28 [shape = 'u8[512]{0}', space=vmem, size = 0x400, scoped, tag = 'input window, operand 17, single buffered']
    #allocation29 [shape = 'u8[512]{0}', space=vmem, size = 0x400, scoped, tag = 'input window, operand 19, single buffered']
    #allocation30 [shape = 's32[1]{0}', space=sflag, size = 0x4, scoped, tag = 'scoped memory for vae_forward.1']
    #allocation31 [shape = 'u8[16384]{0}', space=vmem, size = 0x4000, scoped, tag = 'input window, operand 20, single buffered']
    #allocation32 [shape = 'u8[512]{0}', space=vmem, size = 0x400, scoped, tag = 'input window, operand 21, single buffered']
    #allocation33 [shape = 's32[1]{0}', space=sflag, size = 0x4, scoped, tag = 'scoped memory for vae_forward.1']
    #allocation34 [shape = 'u8[6144]{0}', space=vmem, size = 0x1800, scoped, tag = 'output window, operand 0, single buffered']
    #allocation35 [shape = 'u8[2048]{0}', space=vmem, size = 0x800, scoped, tag = 'output window, operand 2, single buffered']
    #allocation36 [shape = 's32[1]{0}', space=sflag, size = 0x4, scoped, tag = 'scoped memory for vae_forward.1']
    %31 = vsyncpa [#allocation3], 0
    %32 = vsyncpa [#allocation6], 0
    %33 = vsyncpa [#allocation9], 0
    %34 = vsyncpa [#allocation12], 0
    %35 = vsyncpa [#allocation15], 0
    %36 = vsyncpa [#allocation18], 0
    %37 = vsyncpa [#allocation21], 0
    %38 = vsyncpa [#allocation24], 0
    %39 = vsyncpa [#allocation27], 0
    %40 = vsyncpa [#allocation30], 0
    %41 = vsyncpa [#allocation33], 0
    %42 = vsyncpa [#allocation4], 0
    %43 = vsyncpa [#allocation36], 0
    // Predicated region
    $region2: #{vae_forward.1} parent=1 // pred_check
      _
    $region3: #{vae_forward.1} parent=1 // pred_check_branch
      %45 = sbr.rel (0) target = $region5
    $region4: #{vae_forward.1} parent=1 // pred_region
      _
    $region5: #{vae_forward.1} parent=1 // pred_fallthru
      _
    // Predicated region
    $region6: #{vae_forward.1} parent=1 // pred_check
      _
    $region7: #{vae_forward.1} parent=1 // pred_check_branch
      %47 = sbr.rel (0) target = $region9
    $region8: #{vae_forward.1} parent=1 // pred_region
      %49 = vsyncadd [#allocation3], 0
      %s51 = sshll.u32 %s1, 4
      %s52 = int_to_ptr.hbm [resolvable:$true] %s51
      %s53 = sshll.u32 [#allocation2], 4
      %s54 = int_to_ptr.vmem [resolvable:$true] %s53
      %56 = dma.hbm_to_vmem [thread:$0]  %s52, 32, %s54, [#allocation3]
    $region9: #{vae_forward.1} parent=1 // pred_fallthru
      _
    // Predicated region
    $region10: #{vae_forward.1} parent=1 // pred_check
      _
    $region11: #{vae_forward.1} parent=1 // pred_check_branch
      %58 = sbr.rel (0) target = $region13
    $region12: #{vae_forward.1} parent=1 // pred_region
      %60 = vsyncadd [#allocation6], 0
      %s61 = sshll.u32 %s2, 4
      %s62 = int_to_ptr.hbm [resolvable:$true] %s61
      %s63 = sshll.u32 [#allocation5], 4
      %s64 = int_to_ptr.vmem [resolvable:$true] %s63
      %69 = dma.hbm_to_vmem [thread:$0]  %s62, 36864, %s64, [#allocation6], 384, 384, 24
    $region13: #{vae_forward.1} parent=1 // pred_fallthru
      _
    // Predicated region
    $region14: #{vae_forward.1} parent=1 // pred_check
      _
    $region15: #{vae_forward.1} parent=1 // pred_check_branch
      %71 = sbr.rel (0) target = $region17
    $region16: #{vae_forward.1} parent=1 // pred_region
      %73 = vsyncadd [#allocation6], 0
      %s75 = sshll.u32 %s3, 4
      %s76 = int_to_ptr.hbm [resolvable:$true] %s75
      %s77 = sshll.u32 [#allocation7], 4
      %s78 = int_to_ptr.vmem [resolvable:$true] %s77
      %80 = dma.hbm_to_vmem [thread:$0]  %s76, 96, %s78, [#allocation6]
    $region17: #{vae_forward.1} parent=1 // pred_fallthru
      _
    // Predicated region
    $region18: #{vae_forward.1} parent=1 // pred_check
      _
    $region19: #{vae_forward.1} parent=1 // pred_check_branch
      %82 = sbr.rel (0) target = $region21
    $region20: #{vae_forward.1} parent=1 // pred_region
      %84 = vsyncadd [#allocation9], 0
      %s85 = sshll.u32 %s4, 4
      %s86 = int_to_ptr.hbm [resolvable:$true] %s85
      %s87 = sshll.u32 [#allocation8], 4
      %s88 = int_to_ptr.vmem [resolvable:$true] %s87
      %93 = dma.hbm_to_vmem [thread:$0]  %s86, 24576, %s88, [#allocation9], 256, 256, 16
    $region21: #{vae_forward.1} parent=1 // pred_fallthru
      _
    // Predicated region
    $region22: #{vae_forward.1} parent=1 // pred_check
      _
    $region23: #{vae_forward.1} parent=1 // pred_check_branch
      %95 = sbr.rel (0) target = $region25
    $region24: #{vae_forward.1} parent=1 // pred_region
      %97 = vsyncadd [#allocation9], 0
      %s99 = sshll.u32 %s5, 4
      %s100 = int_to_ptr.hbm [resolvable:$true] %s99
      %s101 = sshll.u32 [#allocation10], 4
      %s102 = int_to_ptr.vmem [resolvable:$true] %s101
      %104 = dma.hbm_to_vmem [thread:$0]  %s100, 64, %s102, [#allocation9]
    $region25: #{vae_forward.1} parent=1 // pred_fallthru
      _
    // Predicated region
    $region26: #{vae_forward.1} parent=1 // pred_check
      _
    $region27: #{vae_forward.1} parent=1 // pred_check_branch
      %106 = sbr.rel (0) target = $region29
    $region28: #{vae_forward.1} parent=1 // pred_region
      %108 = vsyncadd [#allocation12], 0
      %s109 = sshll.u32 %s6, 4
      %s110 = int_to_ptr.hbm [resolvable:$true] %s109
      %s111 = sshll.u32 [#allocation11], 4
      %s112 = int_to_ptr.vmem [resolvable:$true] %s111
      %117 = dma.hbm_to_vmem [thread:$0]  %s110, 8192, %s112, [#allocation12], 128, 128, 8
    $region29: #{vae_forward.1} parent=1 // pred_fallthru
      _
    // Predicated region
    $region30: #{vae_forward.1} parent=1 // pred_check
      _
    $region31: #{vae_forward.1} parent=1 // pred_check_branch
      %119 = sbr.rel (0) target = $region33
    $region32: #{vae_forward.1} parent=1 // pred_region
      %121 = vsyncadd [#allocation12], 0
      %s123 = sshll.u32 %s7, 4
      %s124 = int_to_ptr.hbm [resolvable:$true] %s123
      %s125 = sshll.u32 [#allocation13], 4
      %s126 = int_to_ptr.vmem [resolvable:$true] %s125
      %128 = dma.hbm_to_vmem [thread:$0]  %s124, 32, %s126, [#allocation12]
    $region33: #{vae_forward.1} parent=1 // pred_fallthru
      _
    // Predicated region
    $region34: #{vae_forward.1} parent=1 // pred_check
      _
    $region35: #{vae_forward.1} parent=1 // pred_check_branch
      %130 = sbr.rel (0) target = $region37
    $region36: #{vae_forward.1} parent=1 // pred_region
      %132 = vsyncadd [#allocation15], 0
      %s133 = sshll.u32 %s8, 4
      %s134 = int_to_ptr.hbm [resolvable:$true] %s133
      %s135 = sshll.u32 [#allocation14], 4
      %s136 = int_to_ptr.vmem [resolvable:$true] %s135
      %141 = dma.hbm_to_vmem [thread:$0]  %s134, 2048, %s136, [#allocation15], 64, 64, 4
    $region37: #{vae_forward.1} parent=1 // pred_fallthru
      _
    // Predicated region
    $region38: #{vae_forward.1} parent=1 // pred_check
      _
    $region39: #{vae_forward.1} parent=1 // pred_check_branch
      %143 = sbr.rel (0) target = $region41
    $region40: #{vae_forward.1} parent=1 // pred_region
      %145 = vsyncadd [#allocation15], 0
      %s147 = sshll.u32 %s9, 4
      %s148 = int_to_ptr.hbm [resolvable:$true] %s147
      %s149 = sshll.u32 [#allocation16], 4
      %s150 = int_to_ptr.vmem [resolvable:$true] %s149
      %152 = dma.hbm_to_vmem [thread:$0]  %s148, 16, %s150, [#allocation15]
    $region41: #{vae_forward.1} parent=1 // pred_fallthru
      _
    // Predicated region
    $region42: #{vae_forward.1} parent=1 // pred_check
      _
    $region43: #{vae_forward.1} parent=1 // pred_check_branch
      %154 = sbr.rel (0) target = $region45
    $region44: #{vae_forward.1} parent=1 // pred_region
      %156 = vsyncadd [#allocation18], 0
      %s157 = sshll.u32 %s10, 4
      %s158 = int_to_ptr.hbm [resolvable:$true] %s157
      %s159 = sshll.u32 [#allocation17], 4
      %s160 = int_to_ptr.vmem [resolvable:$true] %s159
      %165 = dma.hbm_to_vmem [thread:$0]  %s158, 1024, %s160, [#allocation18], 128, 128, 8
    $region45: #{vae_forward.1} parent=1 // pred_fallthru
      _
    // Predicated region
    $region46: #{vae_forward.1} parent=1 // pred_check
      _
    $region47: #{vae_forward.1} parent=1 // pred_check_branch
      %167 = sbr.rel (0) target = $region49
    $region48: #{vae_forward.1} parent=1 // pred_region
      %169 = vsyncadd [#allocation18], 0
      %s171 = sshll.u32 %s11, 4
      %s172 = int_to_ptr.hbm [resolvable:$true] %s171
      %s173 = sshll.u32 [#allocation19], 4
      %s174 = int_to_ptr.vmem [resolvable:$true] %s173
      %176 = dma.hbm_to_vmem [thread:$0]  %s172, 32, %s174, [#allocation18]
    $region49: #{vae_forward.1} parent=1 // pred_fallthru
      _
    // Predicated region
    $region50: #{vae_forward.1} parent=1 // pred_check
      _
    $region51: #{vae_forward.1} parent=1 // pred_check_branch
      %178 = sbr.rel (0) target = $region53
    $region52: #{vae_forward.1} parent=1 // pred_region
      %180 = vsyncadd [#allocation21], 0
      %s181 = sshll.u32 %s12, 4
      %s182 = int_to_ptr.hbm [resolvable:$true] %s181
      %s183 = sshll.u32 [#allocation20], 4
      %s184 = int_to_ptr.vmem [resolvable:$true] %s183
      %189 = dma.hbm_to_vmem [thread:$0]  %s182, 8192, %s184, [#allocation21], 256, 256, 16
    $region53: #{vae_forward.1} parent=1 // pred_fallthru
      _
    // Predicated region
    $region54: #{vae_forward.1} parent=1 // pred_check
      _
    $region55: #{vae_forward.1} parent=1 // pred_check_branch
      %191 = sbr.rel (0) target = $region57
    $region56: #{vae_forward.1} parent=1 // pred_region
      %193 = vsyncadd [#allocation21], 0
      %s195 = sshll.u32 %s13, 4
      %s196 = int_to_ptr.hbm [resolvable:$true] %s195
      %s197 = sshll.u32 [#allocation22], 4
      %s198 = int_to_ptr.vmem [resolvable:$true] %s197
      %200 = dma.hbm_to_vmem [thread:$0]  %s196, 64, %s198, [#allocation21]
    $region57: #{vae_forward.1} parent=1 // pred_fallthru
      _
    // Predicated region
    $region58: #{vae_forward.1} parent=1 // pred_check
      _
    $region59: #{vae_forward.1} parent=1 // pred_check_branch
      %202 = sbr.rel (0) target = $region61
    $region60: #{vae_forward.1} parent=1 // pred_region
      %204 = vsyncadd [#allocation24], 0
      %s205 = sshll.u32 %s14, 4
      %s206 = int_to_ptr.hbm [resolvable:$true] %s205
      %s207 = sshll.u32 [#allocation23], 4
      %s208 = int_to_ptr.vmem [resolvable:$true] %s207
      %213 = dma.hbm_to_vmem [thread:$0]  %s206, 24576, %s208, [#allocation24], 384, 384, 24
    $region61: #{vae_forward.1} parent=1 // pred_fallthru
      _
    // Predicated region
    $region62: #{vae_forward.1} parent=1 // pred_check
      _
    $region63: #{vae_forward.1} parent=1 // pred_check_branch
      %215 = sbr.rel (0) target = $region65
    $region64: #{vae_forward.1} parent=1 // pred_region
      %217 = vsyncadd [#allocation24], 0
      %s219 = sshll.u32 %s15, 4
      %s220 = int_to_ptr.hbm [resolvable:$true] %s219
      %s221 = sshll.u32 [#allocation25], 4
      %s222 = int_to_ptr.vmem [resolvable:$true] %s221
      %224 = dma.hbm_to_vmem [thread:$0]  %s220, 96, %s222, [#allocation24]
    $region65: #{vae_forward.1} parent=1 // pred_fallthru
      _
    // Predicated region
    $region66: #{vae_forward.1} parent=1 // pred_check
      _
    $region67: #{vae_forward.1} parent=1 // pred_check_branch
      %226 = sbr.rel (0) target = $region69
    $region68: #{vae_forward.1} parent=1 // pred_region
      %228 = vsyncadd [#allocation27], 0
      %s229 = sshll.u32 %s16, 4
      %s230 = int_to_ptr.hbm [resolvable:$true] %s229
      %s231 = sshll.u32 [#allocation26], 4
      %s232 = int_to_ptr.vmem [resolvable:$true] %s231
      %237 = dma.hbm_to_vmem [thread:$0]  %s230, 2048, %s232, [#allocation27], 64, 64, 4
    $region69: #{vae_forward.1} parent=1 // pred_fallthru
      _
    // Predicated region
    $region70: #{vae_forward.1} parent=1 // pred_check
      _
    $region71: #{vae_forward.1} parent=1 // pred_check_branch
      %239 = sbr.rel (0) target = $region73
    $region72: #{vae_forward.1} parent=1 // pred_region
      %241 = vsyncadd [#allocation27], 0
      %s243 = sshll.u32 %s17, 4
      %s244 = int_to_ptr.hbm [resolvable:$true] %s243
      %s245 = sshll.u32 [#allocation28], 4
      %s246 = int_to_ptr.vmem [resolvable:$true] %s245
      %248 = dma.hbm_to_vmem [thread:$0]  %s244, 16, %s246, [#allocation27]
    $region73: #{vae_forward.1} parent=1 // pred_fallthru
      _
    // Predicated region
    $region74: #{vae_forward.1} parent=1 // pred_check
      _
    $region75: #{vae_forward.1} parent=1 // pred_check_branch
      %250 = sbr.rel (0) target = $region77
    $region76: #{vae_forward.1} parent=1 // pred_region
      _
    $region77: #{vae_forward.1} parent=1 // pred_fallthru
      _
    // Predicated region
    $region78: #{vae_forward.1} parent=1 // pred_check
      _
    $region79: #{vae_forward.1} parent=1 // pred_check_branch
      %252 = sbr.rel (0) target = $region81
    $region80: #{vae_forward.1} parent=1 // pred_region
      %254 = vsyncadd [#allocation30], 0
      %s256 = sshll.u32 %s19, 4
      %s257 = int_to_ptr.hbm [resolvable:$true] %s256
      %s258 = sshll.u32 [#allocation29], 4
      %s259 = int_to_ptr.vmem [resolvable:$true] %s258
      %261 = dma.hbm_to_vmem [thread:$0]  %s257, 16, %s259, [#allocation30]
    $region81: #{vae_forward.1} parent=1 // pred_fallthru
      _
    // Predicated region
    $region82: #{vae_forward.1} parent=1 // pred_check
      _
    $region83: #{vae_forward.1} parent=1 // pred_check_branch
      %263 = sbr.rel (0) target = $region85
    $region84: #{vae_forward.1} parent=1 // pred_region
      %265 = vsyncadd [#allocation30], 0
      %s266 = sshll.u32 %s20, 4
      %s267 = int_to_ptr.hbm [resolvable:$true] %s266
      %s268 = sshll.u32 [#allocation31], 4
      %s269 = int_to_ptr.vmem [resolvable:$true] %s268
      %274 = dma.hbm_to_vmem [thread:$0]  %s267, 512, %s269, [#allocation30], 64, 64, 4
    $region85: #{vae_forward.1} parent=1 // pred_fallthru
      _
    // Predicated region
    $region86: #{vae_forward.1} parent=1 // pred_check
      _
    $region87: #{vae_forward.1} parent=1 // pred_check_branch
      %276 = sbr.rel (0) target = $region89
    $region88: #{vae_forward.1} parent=1 // pred_region
      %278 = vsyncadd [#allocation33], 0
      %s280 = sshll.u32 %s21, 4
      %s281 = int_to_ptr.hbm [resolvable:$true] %s280
      %s282 = sshll.u32 [#allocation32], 4
      %s283 = int_to_ptr.vmem [resolvable:$true] %s282
      %285 = dma.hbm_to_vmem [thread:$0]  %s281, 16, %s283, [#allocation33]
    $region89: #{vae_forward.1} parent=1 // pred_fallthru
      _
    // Predicated region
    $region90: #{vae_forward.1} parent=1 // pred_check
      _
    $region91: #{vae_forward.1} parent=1 // pred_check_branch
      %287 = sbr.rel (0) target = $region93
    $region92: #{vae_forward.1} parent=1 // pred_region
      %289 = dma.done [#allocation3], 32
    $region93: #{vae_forward.1} parent=1 // pred_fallthru
      _
    // Predicated region
    $region94: #{vae_forward.1} parent=1 // pred_check
      _
    $region95: #{vae_forward.1} parent=1 // pred_check_branch
      %291 = sbr.rel (0) target = $region97
    $region96: #{vae_forward.1} parent=1 // pred_region
      %293 = dma.done [#allocation6], 36864
    $region97: #{vae_forward.1} parent=1 // pred_fallthru
      _
    // Predicated region
    $region98: #{vae_forward.1} parent=1 // pred_check
      _
    $region99: #{vae_forward.1} parent=1 // pred_check_branch
      %295 = sbr.rel (0) target = $region101
    $region100: #{vae_forward.1} parent=1 // pred_region
      %297 = dma.done [#allocation6], 96
    $region101: #{vae_forward.1} parent=1 // pred_fallthru
      _
    // Predicated region
    $region102: #{vae_forward.1} parent=1 // pred_check
      _
    $region103: #{vae_forward.1} parent=1 // pred_check_branch
      %299 = sbr.rel (0) target = $region105
    $region104: #{vae_forward.1} parent=1 // pred_region
      %301 = dma.done [#allocation9], 24576
    $region105: #{vae_forward.1} parent=1 // pred_fallthru
      _
    // Predicated region
    $region106: #{vae_forward.1} parent=1 // pred_check
      _
    $region107: #{vae_forward.1} parent=1 // pred_check_branch
      %303 = sbr.rel (0) target = $region109
    $region108: #{vae_forward.1} parent=1 // pred_region
      %305 = dma.done [#allocation9], 64
    $region109: #{vae_forward.1} parent=1 // pred_fallthru
      _
    // Predicated region
    $region110: #{vae_forward.1} parent=1 // pred_check
      _
    $region111: #{vae_forward.1} parent=1 // pred_check_branch
      %307 = sbr.rel (0) target = $region113
    $region112: #{vae_forward.1} parent=1 // pred_region
      %309 = dma.done [#allocation12], 8192
    $region113: #{vae_forward.1} parent=1 // pred_fallthru
      _
    // Predicated region
    $region114: #{vae_forward.1} parent=1 // pred_check
      _
    $region115: #{vae_forward.1} parent=1 // pred_check_branch
      %311 = sbr.rel (0) target = $region117
    $region116: #{vae_forward.1} parent=1 // pred_region
      %313 = dma.done [#allocation12], 32
    $region117: #{vae_forward.1} parent=1 // pred_fallthru
      _
    // Predicated region
    $region118: #{vae_forward.1} parent=1 // pred_check
      _
    $region119: #{vae_forward.1} parent=1 // pred_check_branch
      %315 = sbr.rel (0) target = $region121
    $region120: #{vae_forward.1} parent=1 // pred_region
      %317 = dma.done [#allocation15], 2048
    $region121: #{vae_forward.1} parent=1 // pred_fallthru
      _
    // Predicated region
    $region122: #{vae_forward.1} parent=1 // pred_check
      _
    $region123: #{vae_forward.1} parent=1 // pred_check_branch
      %319 = sbr.rel (0) target = $region125
    $region124: #{vae_forward.1} parent=1 // pred_region
      %321 = dma.done [#allocation15], 16
    $region125: #{vae_forward.1} parent=1 // pred_fallthru
      _
    // Predicated region
    $region126: #{vae_forward.1} parent=1 // pred_check
      _
    $region127: #{vae_forward.1} parent=1 // pred_check_branch
      %323 = sbr.rel (0) target = $region129
    $region128: #{vae_forward.1} parent=1 // pred_region
      %325 = dma.done [#allocation18], 1024
    $region129: #{vae_forward.1} parent=1 // pred_fallthru
      _
    // Predicated region
    $region130: #{vae_forward.1} parent=1 // pred_check
      _
    $region131: #{vae_forward.1} parent=1 // pred_check_branch
      %327 = sbr.rel (0) target = $region133
    $region132: #{vae_forward.1} parent=1 // pred_region
      %329 = dma.done [#allocation18], 32
    $region133: #{vae_forward.1} parent=1 // pred_fallthru
      _
    // Predicated region
    $region134: #{vae_forward.1} parent=1 // pred_check
      _
    $region135: #{vae_forward.1} parent=1 // pred_check_branch
      %331 = sbr.rel (0) target = $region137
    $region136: #{vae_forward.1} parent=1 // pred_region
      %333 = dma.done [#allocation21], 8192
    $region137: #{vae_forward.1} parent=1 // pred_fallthru
      _
    // Predicated region
    $region138: #{vae_forward.1} parent=1 // pred_check
      _
    $region139: #{vae_forward.1} parent=1 // pred_check_branch
      %335 = sbr.rel (0) target = $region141
    $region140: #{vae_forward.1} parent=1 // pred_region
      %337 = dma.done [#allocation21], 64
    $region141: #{vae_forward.1} parent=1 // pred_fallthru
      _
    // Predicated region
    $region142: #{vae_forward.1} parent=1 // pred_check
      _
    $region143: #{vae_forward.1} parent=1 // pred_check_branch
      %339 = sbr.rel (0) target = $region145
    $region144: #{vae_forward.1} parent=1 // pred_region
      %341 = dma.done [#allocation24], 24576
    $region145: #{vae_forward.1} parent=1 // pred_fallthru
      _
    // Predicated region
    $region146: #{vae_forward.1} parent=1 // pred_check
      _
    $region147: #{vae_forward.1} parent=1 // pred_check_branch
      %343 = sbr.rel (0) target = $region149
    $region148: #{vae_forward.1} parent=1 // pred_region
      %345 = dma.done [#allocation24], 96
    $region149: #{vae_forward.1} parent=1 // pred_fallthru
      _
    // Predicated region
    $region150: #{vae_forward.1} parent=1 // pred_check
      _
    $region151: #{vae_forward.1} parent=1 // pred_check_branch
      %347 = sbr.rel (0) target = $region153
    $region152: #{vae_forward.1} parent=1 // pred_region
      %349 = dma.done [#allocation27], 2048
    $region153: #{vae_forward.1} parent=1 // pred_fallthru
      _
    // Predicated region
    $region154: #{vae_forward.1} parent=1 // pred_check
      _
    $region155: #{vae_forward.1} parent=1 // pred_check_branch
      %351 = sbr.rel (0) target = $region157
    $region156: #{vae_forward.1} parent=1 // pred_region
      %353 = dma.done [#allocation27], 16
    $region157: #{vae_forward.1} parent=1 // pred_fallthru
      _
    // Predicated region
    $region158: #{vae_forward.1} parent=1 // pred_check
      _
    $region159: #{vae_forward.1} parent=1 // pred_check_branch
      %355 = sbr.rel (0) target = $region161
    $region160: #{vae_forward.1} parent=1 // pred_region
      %357 = dma.done [#allocation30], 16
    $region161: #{vae_forward.1} parent=1 // pred_fallthru
      _
    // Predicated region
    $region162: #{vae_forward.1} parent=1 // pred_check
      _
    $region163: #{vae_forward.1} parent=1 // pred_check_branch
      %359 = sbr.rel (0) target = $region165
    $region164: #{vae_forward.1} parent=1 // pred_region
      %361 = dma.done [#allocation30], 512
    $region165: #{vae_forward.1} parent=1 // pred_fallthru
      _
    // Predicated region
    $region166: #{vae_forward.1} parent=1 // pred_check
      _
    $region167: #{vae_forward.1} parent=1 // pred_check_branch
      %363 = sbr.rel (0) target = $region169
    $region168: #{vae_forward.1} parent=1 // pred_region
      %365 = dma.done [#allocation33], 16
    $region169: #{vae_forward.1} parent=1 // pred_fallthru
      _
    %v367 = vld [vmem:[%s0] sm:$0xff]
    %v368 = vld [vmem:[%s0 + $0x8] sm:$0xf]
    %371 = vst [vmem:[#allocation1] ss:$4 sm:$0xff] %v367
    %s372 = scalar_lea.vmem [#allocation1], 32
    %373 = vst [vmem:[%s372] ss:$4 sm:$0xff] %v368
    %v374 = vld.sshfl [vmem:[#allocation1] sm:$0xff pattern:$0x73625140]
    %v375 = vld.sshfl [vmem:[#allocation1 + $0x8] sm:$0xff pattern:$0x73625140]
    %v376 = vld.sshfl [vmem:[#allocation1 + $0x10] sm:$0xff pattern:$0x73625140]
    %v377 = vld.sshfl [vmem:[#allocation1 + $0x18] sm:$0xff pattern:$0x73625140]
    %v378 = vld.sshfl [vmem:[#allocation1 + $0x20] sm:$0xff pattern:$0x73625140]
    %v379 = vld.sshfl [vmem:[#allocation1 + $0x28] sm:$0xff pattern:$0x73625140]
    %v386 = vpack.c.bf16 %v374, %v374
    %v387 = vpack.c.bf16 %v375, %v375
    %v388 = vpack.c.bf16 %v376, %v376
    %v389 = vpack.c.bf16 %v377, %v377
    %v390 = vpack.c.bf16 %v378, %v378
    %v391 = vpack.c.bf16 %v379, %v379
    %v392 = vld [vmem:[#allocation5] sm:$0xff]
    %v393 = vld [vmem:[#allocation5 + $0x8] sm:$0xff]
    %v394 = vld [vmem:[#allocation5 + $0x10] sm:$0xff]
    %v395 = vld [vmem:[#allocation5 + $0x18] sm:$0xff]
    %v396 = vld [vmem:[#allocation5 + $0x20] sm:$0xff]
    %v397 = vld [vmem:[#allocation5 + $0x28] sm:$0xff]
    %v398 = vld [vmem:[#allocation5 + $0x30] sm:$0xff]
    %v399 = vld [vmem:[#allocation5 + $0x38] sm:$0xff]
    %v400 = vld [vmem:[#allocation5 + $0x40] sm:$0xff]
    %v401 = vld [vmem:[#allocation5 + $0x48] sm:$0xff]
    %v402 = vld [vmem:[#allocation5 + $0x50] sm:$0xff]
    %v403 = vld [vmem:[#allocation5 + $0x58] sm:$0xff]
    %v404 = vld [vmem:[#allocation5 + $0x60] sm:$0xff]
    %v405 = vld [vmem:[#allocation5 + $0x68] sm:$0xff]
    %v406 = vld [vmem:[#allocation5 + $0x70] sm:$0xff]
    %v407 = vld [vmem:[#allocation5 + $0x78] sm:$0xff]
    %v408 = vld [vmem:[#allocation5 + $0x80] sm:$0xff]
    %v409 = vld [vmem:[#allocation5 + $0x88] sm:$0xff]
    %v410 = vld [vmem:[#allocation5 + $0x90] sm:$0xff]
    %v411 = vld [vmem:[#allocation5 + $0x98] sm:$0xff]
    %v412 = vld [vmem:[#allocation5 + $0xa0] sm:$0xff]
    %v413 = vld [vmem:[#allocation5 + $0xa8] sm:$0xff]
    %v414 = vld [vmem:[#allocation5 + $0xb0] sm:$0xff]
    %v415 = vld [vmem:[#allocation5 + $0xb8] sm:$0xff]
    %v416 = vld [vmem:[#allocation5 + $0xc0] sm:$0xff]
    %v417 = vld [vmem:[#allocation5 + $0xc8] sm:$0xff]
    %v418 = vld [vmem:[#allocation5 + $0xd0] sm:$0xff]
    %v419 = vld [vmem:[#allocation5 + $0xd8] sm:$0xff]
    %v420 = vld [vmem:[#allocation5 + $0xe0] sm:$0xff]
    %v421 = vld [vmem:[#allocation5 + $0xe8] sm:$0xff]
    %v422 = vld [vmem:[#allocation5 + $0xf0] sm:$0xff]
    %v423 = vld [vmem:[#allocation5 + $0xf8] sm:$0xff]
    %v424 = vld [vmem:[#allocation5 + $0x100] sm:$0xff]
    %v425 = vld [vmem:[#allocation5 + $0x108] sm:$0xff]
    %v426 = vld [vmem:[#allocation5 + $0x110] sm:$0xff]
    %v427 = vld [vmem:[#allocation5 + $0x118] sm:$0xff]
    %v428 = vld [vmem:[#allocation5 + $0x120] sm:$0xff]
    %v429 = vld [vmem:[#allocation5 + $0x128] sm:$0xff]
    %v430 = vld [vmem:[#allocation5 + $0x130] sm:$0xff]
    %v431 = vld [vmem:[#allocation5 + $0x138] sm:$0xff]
    %v432 = vld [vmem:[#allocation5 + $0x140] sm:$0xff]
    %v433 = vld [vmem:[#allocation5 + $0x148] sm:$0xff]
    %v434 = vld [vmem:[#allocation5 + $0x150] sm:$0xff]
    %v435 = vld [vmem:[#allocation5 + $0x158] sm:$0xff]
    %v436 = vld [vmem:[#allocation5 + $0x160] sm:$0xff]
    %v437 = vld [vmem:[#allocation5 + $0x168] sm:$0xff]
    %v438 = vld [vmem:[#allocation5 + $0x170] sm:$0xff]
    %v439 = vld [vmem:[#allocation5 + $0x178] sm:$0xff]
    %v440 = vld [vmem:[#allocation5 + $0x180] sm:$0xff]
    %v441 = vld [vmem:[#allocation5 + $0x188] sm:$0xff]
    %v442 = vld [vmem:[#allocation5 + $0x190] sm:$0xff]
    %v443 = vld [vmem:[#allocation5 + $0x198] sm:$0xff]
    %v444 = vld [vmem:[#allocation5 + $0x1a0] sm:$0xff]
    %v445 = vld [vmem:[#allocation5 + $0x1a8] sm:$0xff]
    %v446 = vld [vmem:[#allocation5 + $0x1b0] sm:$0xff]
    %v447 = vld [vmem:[#allocation5 + $0x1b8] sm:$0xff]
    %v448 = vld [vmem:[#allocation5 + $0x1c0] sm:$0xff]
    %v449 = vld [vmem:[#allocation5 + $0x1c8] sm:$0xff]
    %v450 = vld [vmem:[#allocation5 + $0x1d0] sm:$0xff]
    %v451 = vld [vmem:[#allocation5 + $0x1d8] sm:$0xff]
    %v452 = vld [vmem:[#allocation5 + $0x1e0] sm:$0xff]
    %v453 = vld [vmem:[#allocation5 + $0x1e8] sm:$0xff]
    %v454 = vld [vmem:[#allocation5 + $0x1f0] sm:$0xff]
    %v455 = vld [vmem:[#allocation5 + $0x1f8] sm:$0xff]
    %v456 = vld [vmem:[#allocation5 + $0x200] sm:$0xff]
    %v457 = vld [vmem:[#allocation5 + $0x208] sm:$0xff]
    %v458 = vld [vmem:[#allocation5 + $0x210] sm:$0xff]
    %v459 = vld [vmem:[#allocation5 + $0x218] sm:$0xff]
    %v460 = vld [vmem:[#allocation5 + $0x220] sm:$0xff]
    %v461 = vld [vmem:[#allocation5 + $0x228] sm:$0xff]
    %v462 = vld [vmem:[#allocation5 + $0x230] sm:$0xff]
    %v463 = vld [vmem:[#allocation5 + $0x238] sm:$0xff]
    %v464 = vld [vmem:[#allocation5 + $0x240] sm:$0xff]
    %v465 = vld [vmem:[#allocation5 + $0x248] sm:$0xff]
    %v466 = vld [vmem:[#allocation5 + $0x250] sm:$0xff]
    %v467 = vld [vmem:[#allocation5 + $0x258] sm:$0xff]
    %v468 = vld [vmem:[#allocation5 + $0x260] sm:$0xff]
    %v469 = vld [vmem:[#allocation5 + $0x268] sm:$0xff]
    %v470 = vld [vmem:[#allocation5 + $0x270] sm:$0xff]
    %v471 = vld [vmem:[#allocation5 + $0x278] sm:$0xff]
    %v472 = vld [vmem:[#allocation5 + $0x280] sm:$0xff]
    %v473 = vld [vmem:[#allocation5 + $0x288] sm:$0xff]
    %v474 = vld [vmem:[#allocation5 + $0x290] sm:$0xff]
    %v475 = vld [vmem:[#allocation5 + $0x298] sm:$0xff]
    %v476 = vld [vmem:[#allocation5 + $0x2a0] sm:$0xff]
    %v477 = vld [vmem:[#allocation5 + $0x2a8] sm:$0xff]
    %v478 = vld [vmem:[#allocation5 + $0x2b0] sm:$0xff]
    %v479 = vld [vmem:[#allocation5 + $0x2b8] sm:$0xff]
    %v480 = vld [vmem:[#allocation5 + $0x2c0] sm:$0xff]
    %v481 = vld [vmem:[#allocation5 + $0x2c8] sm:$0xff]
    %v482 = vld [vmem:[#allocation5 + $0x2d0] sm:$0xff]
    %v483 = vld [vmem:[#allocation5 + $0x2d8] sm:$0xff]
    %v484 = vld [vmem:[#allocation5 + $0x2e0] sm:$0xff]
    %v485 = vld [vmem:[#allocation5 + $0x2e8] sm:$0xff]
    %v486 = vld [vmem:[#allocation5 + $0x2f0] sm:$0xff]
    %v487 = vld [vmem:[#allocation5 + $0x2f8] sm:$0xff]
    %v488 = vld [vmem:[#allocation5 + $0x300] sm:$0xff]
    %v489 = vld [vmem:[#allocation5 + $0x308] sm:$0xff]
    %v490 = vld [vmem:[#allocation5 + $0x310] sm:$0xff]
    %v491 = vld [vmem:[#allocation5 + $0x318] sm:$0xff]
    %v492 = vld [vmem:[#allocation5 + $0x320] sm:$0xff]
    %v493 = vld [vmem:[#allocation5 + $0x328] sm:$0xff]
    %v494 = vld [vmem:[#allocation5 + $0x330] sm:$0xff]
    %v495 = vld [vmem:[#allocation5 + $0x338] sm:$0xff]
    %v496 = vld [vmem:[#allocation5 + $0x340] sm:$0xff]
    %v497 = vld [vmem:[#allocation5 + $0x348] sm:$0xff]
    %v498 = vld [vmem:[#allocation5 + $0x350] sm:$0xff]
    %v499 = vld [vmem:[#allocation5 + $0x358] sm:$0xff]
    %v500 = vld [vmem:[#allocation5 + $0x360] sm:$0xff]
    %v501 = vld [vmem:[#allocation5 + $0x368] sm:$0xff]
    %v502 = vld [vmem:[#allocation5 + $0x370] sm:$0xff]
    %v503 = vld [vmem:[#allocation5 + $0x378] sm:$0xff]
    %v504 = vld [vmem:[#allocation5 + $0x380] sm:$0xff]
    %v505 = vld [vmem:[#allocation5 + $0x388] sm:$0xff]
    %v506 = vld [vmem:[#allocation5 + $0x390] sm:$0xff]
    %v507 = vld [vmem:[#allocation5 + $0x398] sm:$0xff]
    %v508 = vld [vmem:[#allocation5 + $0x3a0] sm:$0xff]
    %v509 = vld [vmem:[#allocation5 + $0x3a8] sm:$0xff]
    %v510 = vld [vmem:[#allocation5 + $0x3b0] sm:$0xff]
    %v511 = vld [vmem:[#allocation5 + $0x3b8] sm:$0xff]
    %v512 = vld [vmem:[#allocation5 + $0x3c0] sm:$0xff]
    %v513 = vld [vmem:[#allocation5 + $0x3c8] sm:$0xff]
    %v514 = vld [vmem:[#allocation5 + $0x3d0] sm:$0xff]
    %v515 = vld [vmem:[#allocation5 + $0x3d8] sm:$0xff]
    %v516 = vld [vmem:[#allocation5 + $0x3e0] sm:$0xff]
    %v517 = vld [vmem:[#allocation5 + $0x3e8] sm:$0xff]
    %v518 = vld [vmem:[#allocation5 + $0x3f0] sm:$0xff]
    %v519 = vld [vmem:[#allocation5 + $0x3f8] sm:$0xff]
    %v520 = vld [vmem:[#allocation5 + $0x400] sm:$0xff]
    %v521 = vld [vmem:[#allocation5 + $0x408] sm:$0xff]
    %v522 = vld [vmem:[#allocation5 + $0x410] sm:$0xff]
    %v523 = vld [vmem:[#allocation5 + $0x418] sm:$0xff]
    %v524 = vld [vmem:[#allocation5 + $0x420] sm:$0xff]
    %v525 = vld [vmem:[#allocation5 + $0x428] sm:$0xff]
    %v526 = vld [vmem:[#allocation5 + $0x430] sm:$0xff]
    %v527 = vld [vmem:[#allocation5 + $0x438] sm:$0xff]
    %v528 = vld [vmem:[#allocation5 + $0x440] sm:$0xff]
    %v529 = vld [vmem:[#allocation5 + $0x448] sm:$0xff]
    %v530 = vld [vmem:[#allocation5 + $0x450] sm:$0xff]
    %v531 = vld [vmem:[#allocation5 + $0x458] sm:$0xff]
    %v532 = vld [vmem:[#allocation5 + $0x460] sm:$0xff]
    %v533 = vld [vmem:[#allocation5 + $0x468] sm:$0xff]
    %v534 = vld [vmem:[#allocation5 + $0x470] sm:$0xff]
    %v535 = vld [vmem:[#allocation5 + $0x478] sm:$0xff]
    %v536 = vld [vmem:[#allocation5 + $0x480] sm:$0xff]
    %v537 = vld [vmem:[#allocation5 + $0x488] sm:$0xff]
    %v538 = vld [vmem:[#allocation5 + $0x490] sm:$0xff]
    %v539 = vld [vmem:[#allocation5 + $0x498] sm:$0xff]
    %v540 = vld [vmem:[#allocation5 + $0x4a0] sm:$0xff]
    %v541 = vld [vmem:[#allocation5 + $0x4a8] sm:$0xff]
    %v542 = vld [vmem:[#allocation5 + $0x4b0] sm:$0xff]
    %v543 = vld [vmem:[#allocation5 + $0x4b8] sm:$0xff]
    %v544 = vld [vmem:[#allocation5 + $0x4c0] sm:$0xff]
    %v545 = vld [vmem:[#allocation5 + $0x4c8] sm:$0xff]
    %v546 = vld [vmem:[#allocation5 + $0x4d0] sm:$0xff]
    %v547 = vld [vmem:[#allocation5 + $0x4d8] sm:$0xff]
    %v548 = vld [vmem:[#allocation5 + $0x4e0] sm:$0xff]
    %v549 = vld [vmem:[#allocation5 + $0x4e8] sm:$0xff]
    %v550 = vld [vmem:[#allocation5 + $0x4f0] sm:$0xff]
    %v551 = vld [vmem:[#allocation5 + $0x4f8] sm:$0xff]
    %v552 = vld [vmem:[#allocation5 + $0x500] sm:$0xff]
    %v553 = vld [vmem:[#allocation5 + $0x508] sm:$0xff]
    %v554 = vld [vmem:[#allocation5 + $0x510] sm:$0xff]
    %v555 = vld [vmem:[#allocation5 + $0x518] sm:$0xff]
    %v556 = vld [vmem:[#allocation5 + $0x520] sm:$0xff]
    %v557 = vld [vmem:[#allocation5 + $0x528] sm:$0xff]
    %v558 = vld [vmem:[#allocation5 + $0x530] sm:$0xff]
    %v559 = vld [vmem:[#allocation5 + $0x538] sm:$0xff]
    %v560 = vld [vmem:[#allocation5 + $0x540] sm:$0xff]
    %v561 = vld [vmem:[#allocation5 + $0x548] sm:$0xff]
    %v562 = vld [vmem:[#allocation5 + $0x550] sm:$0xff]
    %v563 = vld [vmem:[#allocation5 + $0x558] sm:$0xff]
    %v564 = vld [vmem:[#allocation5 + $0x560] sm:$0xff]
    %v565 = vld [vmem:[#allocation5 + $0x568] sm:$0xff]
    %v566 = vld [vmem:[#allocation5 + $0x570] sm:$0xff]
    %v567 = vld [vmem:[#allocation5 + $0x578] sm:$0xff]
    %v568 = vld [vmem:[#allocation5 + $0x580] sm:$0xff]
    %v569 = vld [vmem:[#allocation5 + $0x588] sm:$0xff]
    %v570 = vld [vmem:[#allocation5 + $0x590] sm:$0xff]
    %v571 = vld [vmem:[#allocation5 + $0x598] sm:$0xff]
    %v572 = vld [vmem:[#allocation5 + $0x5a0] sm:$0xff]
    %v573 = vld [vmem:[#allocation5 + $0x5a8] sm:$0xff]
    %v574 = vld [vmem:[#allocation5 + $0x5b0] sm:$0xff]
    %v575 = vld [vmem:[#allocation5 + $0x5b8] sm:$0xff]
    %v576 = vld [vmem:[#allocation5 + $0x5c0] sm:$0xff]
    %v577 = vld [vmem:[#allocation5 + $0x5c8] sm:$0xff]
    %v578 = vld [vmem:[#allocation5 + $0x5d0] sm:$0xff]
    %v579 = vld [vmem:[#allocation5 + $0x5d8] sm:$0xff]
    %v580 = vld [vmem:[#allocation5 + $0x5e0] sm:$0xff]
    %v581 = vld [vmem:[#allocation5 + $0x5e8] sm:$0xff]
    %v582 = vld [vmem:[#allocation5 + $0x5f0] sm:$0xff]
    %v583 = vld [vmem:[#allocation5 + $0x5f8] sm:$0xff]
    %v584 = vld [vmem:[#allocation5 + $0x600] sm:$0xff]
    %v585 = vld [vmem:[#allocation5 + $0x608] sm:$0xff]
    %v586 = vld [vmem:[#allocation5 + $0x610] sm:$0xff]
    %v587 = vld [vmem:[#allocation5 + $0x618] sm:$0xff]
    %v588 = vld [vmem:[#allocation5 + $0x620] sm:$0xff]
    %v589 = vld [vmem:[#allocation5 + $0x628] sm:$0xff]
    %v590 = vld [vmem:[#allocation5 + $0x630] sm:$0xff]
    %v591 = vld [vmem:[#allocation5 + $0x638] sm:$0xff]
    %v592 = vld [vmem:[#allocation5 + $0x640] sm:$0xff]
    %v593 = vld [vmem:[#allocation5 + $0x648] sm:$0xff]
    %v594 = vld [vmem:[#allocation5 + $0x650] sm:$0xff]
    %v595 = vld [vmem:[#allocation5 + $0x658] sm:$0xff]
    %v596 = vld [vmem:[#allocation5 + $0x660] sm:$0xff]
    %v597 = vld [vmem:[#allocation5 + $0x668] sm:$0xff]
    %v598 = vld [vmem:[#allocation5 + $0x670] sm:$0xff]
    %v599 = vld [vmem:[#allocation5 + $0x678] sm:$0xff]
    %v600 = vld [vmem:[#allocation5 + $0x680] sm:$0xff]
    %v601 = vld [vmem:[#allocation5 + $0x688] sm:$0xff]
    %v602 = vld [vmem:[#allocation5 + $0x690] sm:$0xff]
    %v603 = vld [vmem:[#allocation5 + $0x698] sm:$0xff]
    %v604 = vld [vmem:[#allocation5 + $0x6a0] sm:$0xff]
    %v605 = vld [vmem:[#allocation5 + $0x6a8] sm:$0xff]
    %v606 = vld [vmem:[#allocation5 + $0x6b0] sm:$0xff]
    %v607 = vld [vmem:[#allocation5 + $0x6b8] sm:$0xff]
    %v608 = vld [vmem:[#allocation5 + $0x6c0] sm:$0xff]
    %v609 = vld [vmem:[#allocation5 + $0x6c8] sm:$0xff]
    %v610 = vld [vmem:[#allocation5 + $0x6d0] sm:$0xff]
    %v611 = vld [vmem:[#allocation5 + $0x6d8] sm:$0xff]
    %v612 = vld [vmem:[#allocation5 + $0x6e0] sm:$0xff]
    %v613 = vld [vmem:[#allocation5 + $0x6e8] sm:$0xff]
    %v614 = vld [vmem:[#allocation5 + $0x6f0] sm:$0xff]
    %v615 = vld [vmem:[#allocation5 + $0x6f8] sm:$0xff]
    %v616 = vld [vmem:[#allocation5 + $0x700] sm:$0xff]
    %v617 = vld [vmem:[#allocation5 + $0x708] sm:$0xff]
    %v618 = vld [vmem:[#allocation5 + $0x710] sm:$0xff]
    %v619 = vld [vmem:[#allocation5 + $0x718] sm:$0xff]
    %v620 = vld [vmem:[#allocation5 + $0x720] sm:$0xff]
    %v621 = vld [vmem:[#allocation5 + $0x728] sm:$0xff]
    %v622 = vld [vmem:[#allocation5 + $0x730] sm:$0xff]
    %v623 = vld [vmem:[#allocation5 + $0x738] sm:$0xff]
    %v624 = vld [vmem:[#allocation5 + $0x740] sm:$0xff]
    %v625 = vld [vmem:[#allocation5 + $0x748] sm:$0xff]
    %v626 = vld [vmem:[#allocation5 + $0x750] sm:$0xff]
    %v627 = vld [vmem:[#allocation5 + $0x758] sm:$0xff]
    %v628 = vld [vmem:[#allocation5 + $0x760] sm:$0xff]
    %v629 = vld [vmem:[#allocation5 + $0x768] sm:$0xff]
    %v630 = vld [vmem:[#allocation5 + $0x770] sm:$0xff]
    %v631 = vld [vmem:[#allocation5 + $0x778] sm:$0xff]
    %v632 = vld [vmem:[#allocation5 + $0x780] sm:$0xff]
    %v633 = vld [vmem:[#allocation5 + $0x788] sm:$0xff]
    %v634 = vld [vmem:[#allocation5 + $0x790] sm:$0xff]
    %v635 = vld [vmem:[#allocation5 + $0x798] sm:$0xff]
    %v636 = vld [vmem:[#allocation5 + $0x7a0] sm:$0xff]
    %v637 = vld [vmem:[#allocation5 + $0x7a8] sm:$0xff]
    %v638 = vld [vmem:[#allocation5 + $0x7b0] sm:$0xff]
    %v639 = vld [vmem:[#allocation5 + $0x7b8] sm:$0xff]
    %v640 = vld [vmem:[#allocation5 + $0x7c0] sm:$0xff]
    %v641 = vld [vmem:[#allocation5 + $0x7c8] sm:$0xff]
    %v642 = vld [vmem:[#allocation5 + $0x7d0] sm:$0xff]
    %v643 = vld [vmem:[#allocation5 + $0x7d8] sm:$0xff]
    %v644 = vld [vmem:[#allocation5 + $0x7e0] sm:$0xff]
    %v645 = vld [vmem:[#allocation5 + $0x7e8] sm:$0xff]
    %v646 = vld [vmem:[#allocation5 + $0x7f0] sm:$0xff]
    %v647 = vld [vmem:[#allocation5 + $0x7f8] sm:$0xff]
    %v648 = vld [vmem:[#allocation5 + $0x800] sm:$0xff]
    %v649 = vld [vmem:[#allocation5 + $0x808] sm:$0xff]
    %v650 = vld [vmem:[#allocation5 + $0x810] sm:$0xff]
    %v651 = vld [vmem:[#allocation5 + $0x818] sm:$0xff]
    %v652 = vld [vmem:[#allocation5 + $0x820] sm:$0xff]
    %v653 = vld [vmem:[#allocation5 + $0x828] sm:$0xff]
    %v654 = vld [vmem:[#allocation5 + $0x830] sm:$0xff]
    %v655 = vld [vmem:[#allocation5 + $0x838] sm:$0xff]
    %v656 = vld [vmem:[#allocation5 + $0x840] sm:$0xff]
    %v657 = vld [vmem:[#allocation5 + $0x848] sm:$0xff]
    %v658 = vld [vmem:[#allocation5 + $0x850] sm:$0xff]
    %v659 = vld [vmem:[#allocation5 + $0x858] sm:$0xff]
    %v660 = vld [vmem:[#allocation5 + $0x860] sm:$0xff]
    %v661 = vld [vmem:[#allocation5 + $0x868] sm:$0xff]
    %v662 = vld [vmem:[#allocation5 + $0x870] sm:$0xff]
    %v663 = vld [vmem:[#allocation5 + $0x878] sm:$0xff]
    %v664 = vld [vmem:[#allocation5 + $0x880] sm:$0xff]
    %v665 = vld [vmem:[#allocation5 + $0x888] sm:$0xff]
    %v666 = vld [vmem:[#allocation5 + $0x890] sm:$0xff]
    %v667 = vld [vmem:[#allocation5 + $0x898] sm:$0xff]
    %v668 = vld [vmem:[#allocation5 + $0x8a0] sm:$0xff]
    %v669 = vld [vmem:[#allocation5 + $0x8a8] sm:$0xff]
    %v670 = vld [vmem:[#allocation5 + $0x8b0] sm:$0xff]
    %v671 = vld [vmem:[#allocation5 + $0x8b8] sm:$0xff]
    %v672 = vld [vmem:[#allocation5 + $0x8c0] sm:$0xff]
    %v673 = vld [vmem:[#allocation5 + $0x8c8] sm:$0xff]
    %v674 = vld [vmem:[#allocation5 + $0x8d0] sm:$0xff]
    %v675 = vld [vmem:[#allocation5 + $0x8d8] sm:$0xff]
    %v676 = vld [vmem:[#allocation5 + $0x8e0] sm:$0xff]
    %v677 = vld [vmem:[#allocation5 + $0x8e8] sm:$0xff]
    %v678 = vld [vmem:[#allocation5 + $0x8f0] sm:$0xff]
    %v679 = vld [vmem:[#allocation5 + $0x8f8] sm:$0xff]
    %v680 = vld [vmem:[#allocation7] sm:$0x3f]
    %v682 = vperm.slane %v680, 0
    %v683 = vperm.slane %v680, 1
    %v684 = vperm.slane %v680, 2
    %v685 = vperm.slane %v680, 3
    %v686 = vperm.slane %v680, 4
    %v687 = vperm.slane %v680, 5
    %v982 = vunpack.c.l.b16 %v392
    %v983 = vunpack.c.h.b16 %v392
    %v984 = vunpack.c.l.b16 %v393
    %v985 = vunpack.c.h.b16 %v393
    %v986 = vunpack.c.l.b16 %v394
    %v987 = vunpack.c.h.b16 %v394
    %v988 = vunpack.c.l.b16 %v395
    %v989 = vunpack.c.h.b16 %v395
    %v990 = vunpack.c.l.b16 %v396
    %v991 = vunpack.c.h.b16 %v396
    %v992 = vunpack.c.l.b16 %v397
    %v993 = vunpack.c.h.b16 %v397
    %v994 = vunpack.c.l.b16 %v398
    %v995 = vunpack.c.h.b16 %v398
    %v996 = vunpack.c.l.b16 %v399
    %v997 = vunpack.c.h.b16 %v399
    %v998 = vunpack.c.l.b16 %v400
    %v999 = vunpack.c.h.b16 %v400
    %v1000 = vunpack.c.l.b16 %v401
    %v1001 = vunpack.c.h.b16 %v401
    %v1002 = vunpack.c.l.b16 %v402
    %v1003 = vunpack.c.h.b16 %v402
    %v1004 = vunpack.c.l.b16 %v403
    %v1005 = vunpack.c.h.b16 %v403
    %v1006 = vunpack.c.l.b16 %v404
    %v1007 = vunpack.c.h.b16 %v404
    %v1008 = vunpack.c.l.b16 %v405
    %v1009 = vunpack.c.h.b16 %v405
    %v1010 = vunpack.c.l.b16 %v406
    %v1011 = vunpack.c.h.b16 %v406
    %v1012 = vunpack.c.l.b16 %v407
    %v1013 = vunpack.c.h.b16 %v407
    %v1014 = vunpack.c.l.b16 %v408
    %v1015 = vunpack.c.h.b16 %v408
    %v1016 = vunpack.c.l.b16 %v409
    %v1017 = vunpack.c.h.b16 %v409
    %v1018 = vunpack.c.l.b16 %v410
    %v1019 = vunpack.c.h.b16 %v410
    %v1020 = vunpack.c.l.b16 %v411
    %v1021 = vunpack.c.h.b16 %v411
    %v1022 = vunpack.c.l.b16 %v412
    %v1023 = vunpack.c.h.b16 %v412
    %v1024 = vunpack.c.l.b16 %v413
    %v1025 = vunpack.c.h.b16 %v413
    %v1026 = vunpack.c.l.b16 %v414
    %v1027 = vunpack.c.h.b16 %v414
    %v1028 = vunpack.c.l.b16 %v415
    %v1029 = vunpack.c.h.b16 %v415
    %v1030 = vunpack.c.l.b16 %v416
    %v1031 = vunpack.c.h.b16 %v416
    %v1032 = vunpack.c.l.b16 %v417
    %v1033 = vunpack.c.h.b16 %v417
    %v1034 = vunpack.c.l.b16 %v418
    %v1035 = vunpack.c.h.b16 %v418
    %v1036 = vunpack.c.l.b16 %v419
    %v1037 = vunpack.c.h.b16 %v419
    %v1038 = vunpack.c.l.b16 %v420
    %v1039 = vunpack.c.h.b16 %v420
    %v1040 = vunpack.c.l.b16 %v421
    %v1041 = vunpack.c.h.b16 %v421
    %v1042 = vunpack.c.l.b16 %v422
    %v1043 = vunpack.c.h.b16 %v422
    %v1044 = vunpack.c.l.b16 %v423
    %v1045 = vunpack.c.h.b16 %v423
    %v1046 = vunpack.c.l.b16 %v424
    %v1047 = vunpack.c.h.b16 %v424
    %v1048 = vunpack.c.l.b16 %v425
    %v1049 = vunpack.c.h.b16 %v425
    %v1050 = vunpack.c.l.b16 %v426
    %v1051 = vunpack.c.h.b16 %v426
    %v1052 = vunpack.c.l.b16 %v427
    %v1053 = vunpack.c.h.b16 %v427
    %v1054 = vunpack.c.l.b16 %v428
    %v1055 = vunpack.c.h.b16 %v428
    %v1056 = vunpack.c.l.b16 %v429
    %v1057 = vunpack.c.h.b16 %v429
    %v1058 = vunpack.c.l.b16 %v430
    %v1059 = vunpack.c.h.b16 %v430
    %v1060 = vunpack.c.l.b16 %v431
    %v1061 = vunpack.c.h.b16 %v431
    %v1062 = vunpack.c.l.b16 %v432
    %v1063 = vunpack.c.h.b16 %v432
    %v1064 = vunpack.c.l.b16 %v433
    %v1065 = vunpack.c.h.b16 %v433
    %v1066 = vunpack.c.l.b16 %v434
    %v1067 = vunpack.c.h.b16 %v434
    %v1068 = vunpack.c.l.b16 %v435
    %v1069 = vunpack.c.h.b16 %v435
    %v1070 = vunpack.c.l.b16 %v436
    %v1071 = vunpack.c.h.b16 %v436
    %v1072 = vunpack.c.l.b16 %v437
    %v1073 = vunpack.c.h.b16 %v437
    %v1074 = vunpack.c.l.b16 %v438
    %v1075 = vunpack.c.h.b16 %v438
    %v1076 = vunpack.c.l.b16 %v439
    %v1077 = vunpack.c.h.b16 %v439
    %v1078 = vunpack.c.l.b16 %v440
    %v1079 = vunpack.c.h.b16 %v440
    %v1080 = vunpack.c.l.b16 %v441
    %v1081 = vunpack.c.h.b16 %v441
    %v1082 = vunpack.c.l.b16 %v442
    %v1083 = vunpack.c.h.b16 %v442
    %v1084 = vunpack.c.l.b16 %v443
    %v1085 = vunpack.c.h.b16 %v443
    %v1086 = vunpack.c.l.b16 %v444
    %v1087 = vunpack.c.h.b16 %v444
    %v1088 = vunpack.c.l.b16 %v445
    %v1089 = vunpack.c.h.b16 %v445
    %v1090 = vunpack.c.l.b16 %v446
    %v1091 = vunpack.c.h.b16 %v446
    %v1092 = vunpack.c.l.b16 %v447
    %v1093 = vunpack.c.h.b16 %v447
    %v1094 = vunpack.c.l.b16 %v448
    %v1095 = vunpack.c.h.b16 %v448
    %v1096 = vunpack.c.l.b16 %v449
    %v1097 = vunpack.c.h.b16 %v449
    %v1098 = vunpack.c.l.b16 %v450
    %v1099 = vunpack.c.h.b16 %v450
    %v1100 = vunpack.c.l.b16 %v451
    %v1101 = vunpack.c.h.b16 %v451
    %v1102 = vunpack.c.l.b16 %v452
    %v1103 = vunpack.c.h.b16 %v452
    %v1104 = vunpack.c.l.b16 %v453
    %v1105 = vunpack.c.h.b16 %v453
    %v1106 = vunpack.c.l.b16 %v454
    %v1107 = vunpack.c.h.b16 %v454
    %v1108 = vunpack.c.l.b16 %v455
    %v1109 = vunpack.c.h.b16 %v455
    %v1110 = vunpack.c.l.b16 %v456
    %v1111 = vunpack.c.h.b16 %v456
    %v1112 = vunpack.c.l.b16 %v457
    %v1113 = vunpack.c.h.b16 %v457
    %v1114 = vunpack.c.l.b16 %v458
    %v1115 = vunpack.c.h.b16 %v458
    %v1116 = vunpack.c.l.b16 %v459
    %v1117 = vunpack.c.h.b16 %v459
    %v1118 = vunpack.c.l.b16 %v460
    %v1119 = vunpack.c.h.b16 %v460
    %v1120 = vunpack.c.l.b16 %v461
    %v1121 = vunpack.c.h.b16 %v461
    %v1122 = vunpack.c.l.b16 %v462
    %v1123 = vunpack.c.h.b16 %v462
    %v1124 = vunpack.c.l.b16 %v463
    %v1125 = vunpack.c.h.b16 %v463
    %v1126 = vunpack.c.l.b16 %v464
    %v1127 = vunpack.c.h.b16 %v464
    %v1128 = vunpack.c.l.b16 %v465
    %v1129 = vunpack.c.h.b16 %v465
    %v1130 = vunpack.c.l.b16 %v466
    %v1131 = vunpack.c.h.b16 %v466
    %v1132 = vunpack.c.l.b16 %v467
    %v1133 = vunpack.c.h.b16 %v467
    %v1134 = vunpack.c.l.b16 %v468
    %v1135 = vunpack.c.h.b16 %v468
    %v1136 = vunpack.c.l.b16 %v469
    %v1137 = vunpack.c.h.b16 %v469
    %v1138 = vunpack.c.l.b16 %v470
    %v1139 = vunpack.c.h.b16 %v470
    %v1140 = vunpack.c.l.b16 %v471
    %v1141 = vunpack.c.h.b16 %v471
    %v1142 = vunpack.c.l.b16 %v472
    %v1143 = vunpack.c.h.b16 %v472
    %v1144 = vunpack.c.l.b16 %v473
    %v1145 = vunpack.c.h.b16 %v473
    %v1146 = vunpack.c.l.b16 %v474
    %v1147 = vunpack.c.h.b16 %v474
    %v1148 = vunpack.c.l.b16 %v475
    %v1149 = vunpack.c.h.b16 %v475
    %v1150 = vunpack.c.l.b16 %v476
    %v1151 = vunpack.c.h.b16 %v476
    %v1152 = vunpack.c.l.b16 %v477
    %v1153 = vunpack.c.h.b16 %v477
    %v1154 = vunpack.c.l.b16 %v478
    %v1155 = vunpack.c.h.b16 %v478
    %v1156 = vunpack.c.l.b16 %v479
    %v1157 = vunpack.c.h.b16 %v479
    %v1158 = vunpack.c.l.b16 %v480
    %v1159 = vunpack.c.h.b16 %v480
    %v1160 = vunpack.c.l.b16 %v481
    %v1161 = vunpack.c.h.b16 %v481
    %v1162 = vunpack.c.l.b16 %v482
    %v1163 = vunpack.c.h.b16 %v482
    %v1164 = vunpack.c.l.b16 %v483
    %v1165 = vunpack.c.h.b16 %v483
    %v1166 = vunpack.c.l.b16 %v484
    %v1167 = vunpack.c.h.b16 %v484
    %v1168 = vunpack.c.l.b16 %v485
    %v1169 = vunpack.c.h.b16 %v485
    %v1170 = vunpack.c.l.b16 %v486
    %v1171 = vunpack.c.h.b16 %v486
    %v1172 = vunpack.c.l.b16 %v487
    %v1173 = vunpack.c.h.b16 %v487
    %v1174 = vunpack.c.l.b16 %v488
    %v1175 = vunpack.c.h.b16 %v488
    %v1176 = vunpack.c.l.b16 %v489
    %v1177 = vunpack.c.h.b16 %v489
    %v1178 = vunpack.c.l.b16 %v490
    %v1179 = vunpack.c.h.b16 %v490
    %v1180 = vunpack.c.l.b16 %v491
    %v1181 = vunpack.c.h.b16 %v491
    %v1182 = vunpack.c.l.b16 %v492
    %v1183 = vunpack.c.h.b16 %v492
    %v1184 = vunpack.c.l.b16 %v493
    %v1185 = vunpack.c.h.b16 %v493
    %v1186 = vunpack.c.l.b16 %v494
    %v1187 = vunpack.c.h.b16 %v494
    %v1188 = vunpack.c.l.b16 %v495
    %v1189 = vunpack.c.h.b16 %v495
    %v1190 = vunpack.c.l.b16 %v496
    %v1191 = vunpack.c.h.b16 %v496
    %v1192 = vunpack.c.l.b16 %v497
    %v1193 = vunpack.c.h.b16 %v497
    %v1194 = vunpack.c.l.b16 %v498
    %v1195 = vunpack.c.h.b16 %v498
    %v1196 = vunpack.c.l.b16 %v499
    %v1197 = vunpack.c.h.b16 %v499
    %v1198 = vunpack.c.l.b16 %v500
    %v1199 = vunpack.c.h.b16 %v500
    %v1200 = vunpack.c.l.b16 %v501
    %v1201 = vunpack.c.h.b16 %v501
    %v1202 = vunpack.c.l.b16 %v502
    %v1203 = vunpack.c.h.b16 %v502
    %v1204 = vunpack.c.l.b16 %v503
    %v1205 = vunpack.c.h.b16 %v503
    %v1206 = vunpack.c.l.b16 %v504
    %v1207 = vunpack.c.h.b16 %v504
    %v1208 = vunpack.c.l.b16 %v505
    %v1209 = vunpack.c.h.b16 %v505
    %v1210 = vunpack.c.l.b16 %v506
    %v1211 = vunpack.c.h.b16 %v506
    %v1212 = vunpack.c.l.b16 %v507
    %v1213 = vunpack.c.h.b16 %v507
    %v1214 = vunpack.c.l.b16 %v508
    %v1215 = vunpack.c.h.b16 %v508
    %v1216 = vunpack.c.l.b16 %v509
    %v1217 = vunpack.c.h.b16 %v509
    %v1218 = vunpack.c.l.b16 %v510
    %v1219 = vunpack.c.h.b16 %v510
    %v1220 = vunpack.c.l.b16 %v511
    %v1221 = vunpack.c.h.b16 %v511
    %v1222 = vunpack.c.l.b16 %v512
    %v1223 = vunpack.c.h.b16 %v512
    %v1224 = vunpack.c.l.b16 %v513
    %v1225 = vunpack.c.h.b16 %v513
    %v1226 = vunpack.c.l.b16 %v514
    %v1227 = vunpack.c.h.b16 %v514
    %v1228 = vunpack.c.l.b16 %v515
    %v1229 = vunpack.c.h.b16 %v515
    %v1230 = vunpack.c.l.b16 %v516
    %v1231 = vunpack.c.h.b16 %v516
    %v1232 = vunpack.c.l.b16 %v517
    %v1233 = vunpack.c.h.b16 %v517
    %v1234 = vunpack.c.l.b16 %v518
    %v1235 = vunpack.c.h.b16 %v518
    %v1236 = vunpack.c.l.b16 %v519
    %v1237 = vunpack.c.h.b16 %v519
    %v1238 = vunpack.c.l.b16 %v520
    %v1239 = vunpack.c.h.b16 %v520
    %v1240 = vunpack.c.l.b16 %v521
    %v1241 = vunpack.c.h.b16 %v521
    %v1242 = vunpack.c.l.b16 %v522
    %v1243 = vunpack.c.h.b16 %v522
    %v1244 = vunpack.c.l.b16 %v523
    %v1245 = vunpack.c.h.b16 %v523
    %v1246 = vunpack.c.l.b16 %v524
    %v1247 = vunpack.c.h.b16 %v524
    %v1248 = vunpack.c.l.b16 %v525
    %v1249 = vunpack.c.h.b16 %v525
    %v1250 = vunpack.c.l.b16 %v526
    %v1251 = vunpack.c.h.b16 %v526
    %v1252 = vunpack.c.l.b16 %v527
    %v1253 = vunpack.c.h.b16 %v527
    %v1254 = vunpack.c.l.b16 %v528
    %v1255 = vunpack.c.h.b16 %v528
    %v1256 = vunpack.c.l.b16 %v529
    %v1257 = vunpack.c.h.b16 %v529
    %v1258 = vunpack.c.l.b16 %v530
    %v1259 = vunpack.c.h.b16 %v530
    %v1260 = vunpack.c.l.b16 %v531
    %v1261 = vunpack.c.h.b16 %v531
    %v1262 = vunpack.c.l.b16 %v532
    %v1263 = vunpack.c.h.b16 %v532
    %v1264 = vunpack.c.l.b16 %v533
    %v1265 = vunpack.c.h.b16 %v533
    %v1266 = vunpack.c.l.b16 %v534
    %v1267 = vunpack.c.h.b16 %v534
    %v1268 = vunpack.c.l.b16 %v535
    %v1269 = vunpack.c.h.b16 %v535
    %v1270 = vunpack.c.l.b16 %v536
    %v1271 = vunpack.c.h.b16 %v536
    %v1272 = vunpack.c.l.b16 %v537
    %v1273 = vunpack.c.h.b16 %v537
    %v1274 = vunpack.c.l.b16 %v538
    %v1275 = vunpack.c.h.b16 %v538
    %v1276 = vunpack.c.l.b16 %v539
    %v1277 = vunpack.c.h.b16 %v539
    %v1278 = vunpack.c.l.b16 %v540
    %v1279 = vunpack.c.h.b16 %v540
    %v1280 = vunpack.c.l.b16 %v541
    %v1281 = vunpack.c.h.b16 %v541
    %v1282 = vunpack.c.l.b16 %v542
    %v1283 = vunpack.c.h.b16 %v542
    %v1284 = vunpack.c.l.b16 %v543
    %v1285 = vunpack.c.h.b16 %v543
    %v1286 = vunpack.c.l.b16 %v544
    %v1287 = vunpack.c.h.b16 %v544
    %v1288 = vunpack.c.l.b16 %v545
    %v1289 = vunpack.c.h.b16 %v545
    %v1290 = vunpack.c.l.b16 %v546
    %v1291 = vunpack.c.h.b16 %v546
    %v1292 = vunpack.c.l.b16 %v547
    %v1293 = vunpack.c.h.b16 %v547
    %v1294 = vunpack.c.l.b16 %v548
    %v1295 = vunpack.c.h.b16 %v548
    %v1296 = vunpack.c.l.b16 %v549
    %v1297 = vunpack.c.h.b16 %v549
    %v1298 = vunpack.c.l.b16 %v550
    %v1299 = vunpack.c.h.b16 %v550
    %v1300 = vunpack.c.l.b16 %v551
    %v1301 = vunpack.c.h.b16 %v551
    %v1302 = vunpack.c.l.b16 %v552
    %v1303 = vunpack.c.h.b16 %v552
    %v1304 = vunpack.c.l.b16 %v553
    %v1305 = vunpack.c.h.b16 %v553
    %v1306 = vunpack.c.l.b16 %v554
    %v1307 = vunpack.c.h.b16 %v554
    %v1308 = vunpack.c.l.b16 %v555
    %v1309 = vunpack.c.h.b16 %v555
    %v1310 = vunpack.c.l.b16 %v556
    %v1311 = vunpack.c.h.b16 %v556
    %v1312 = vunpack.c.l.b16 %v557
    %v1313 = vunpack.c.h.b16 %v557
    %v1314 = vunpack.c.l.b16 %v558
    %v1315 = vunpack.c.h.b16 %v558
    %v1316 = vunpack.c.l.b16 %v559
    %v1317 = vunpack.c.h.b16 %v559
    %v1318 = vunpack.c.l.b16 %v560
    %v1319 = vunpack.c.h.b16 %v560
    %v1320 = vunpack.c.l.b16 %v561
    %v1321 = vunpack.c.h.b16 %v561
    %v1322 = vunpack.c.l.b16 %v562
    %v1323 = vunpack.c.h.b16 %v562
    %v1324 = vunpack.c.l.b16 %v563
    %v1325 = vunpack.c.h.b16 %v563
    %v1326 = vunpack.c.l.b16 %v564
    %v1327 = vunpack.c.h.b16 %v564
    %v1328 = vunpack.c.l.b16 %v565
    %v1329 = vunpack.c.h.b16 %v565
    %v1330 = vunpack.c.l.b16 %v566
    %v1331 = vunpack.c.h.b16 %v566
    %v1332 = vunpack.c.l.b16 %v567
    %v1333 = vunpack.c.h.b16 %v567
    %v1334 = vunpack.c.l.b16 %v568
    %v1335 = vunpack.c.h.b16 %v568
    %v1336 = vunpack.c.l.b16 %v569
    %v1337 = vunpack.c.h.b16 %v569
    %v1338 = vunpack.c.l.b16 %v570
    %v1339 = vunpack.c.h.b16 %v570
    %v1340 = vunpack.c.l.b16 %v571
    %v1341 = vunpack.c.h.b16 %v571
    %v1342 = vunpack.c.l.b16 %v572
    %v1343 = vunpack.c.h.b16 %v572
    %v1344 = vunpack.c.l.b16 %v573
    %v1345 = vunpack.c.h.b16 %v573
    %v1346 = vunpack.c.l.b16 %v574
    %v1347 = vunpack.c.h.b16 %v574
    %v1348 = vunpack.c.l.b16 %v575
    %v1349 = vunpack.c.h.b16 %v575
    %v1350 = vunpack.c.l.b16 %v576
    %v1351 = vunpack.c.h.b16 %v576
    %v1352 = vunpack.c.l.b16 %v577
    %v1353 = vunpack.c.h.b16 %v577
    %v1354 = vunpack.c.l.b16 %v578
    %v1355 = vunpack.c.h.b16 %v578
    %v1356 = vunpack.c.l.b16 %v579
    %v1357 = vunpack.c.h.b16 %v579
    %v1358 = vunpack.c.l.b16 %v580
    %v1359 = vunpack.c.h.b16 %v580
    %v1360 = vunpack.c.l.b16 %v581
    %v1361 = vunpack.c.h.b16 %v581
    %v1362 = vunpack.c.l.b16 %v582
    %v1363 = vunpack.c.h.b16 %v582
    %v1364 = vunpack.c.l.b16 %v583
    %v1365 = vunpack.c.h.b16 %v583
    %v1366 = vunpack.c.l.b16 %v584
    %v1367 = vunpack.c.h.b16 %v584
    %v1368 = vunpack.c.l.b16 %v585
    %v1369 = vunpack.c.h.b16 %v585
    %v1370 = vunpack.c.l.b16 %v586
    %v1371 = vunpack.c.h.b16 %v586
    %v1372 = vunpack.c.l.b16 %v587
    %v1373 = vunpack.c.h.b16 %v587
    %v1374 = vunpack.c.l.b16 %v588
    %v1375 = vunpack.c.h.b16 %v588
    %v1376 = vunpack.c.l.b16 %v589
    %v1377 = vunpack.c.h.b16 %v589
    %v1378 = vunpack.c.l.b16 %v590
    %v1379 = vunpack.c.h.b16 %v590
    %v1380 = vunpack.c.l.b16 %v591
    %v1381 = vunpack.c.h.b16 %v591
    %v1382 = vunpack.c.l.b16 %v592
    %v1383 = vunpack.c.h.b16 %v592
    %v1384 = vunpack.c.l.b16 %v593
    %v1385 = vunpack.c.h.b16 %v593
    %v1386 = vunpack.c.l.b16 %v594
    %v1387 = vunpack.c.h.b16 %v594
    %v1388 = vunpack.c.l.b16 %v595
    %v1389 = vunpack.c.h.b16 %v595
    %v1390 = vunpack.c.l.b16 %v596
    %v1391 = vunpack.c.h.b16 %v596
    %v1392 = vunpack.c.l.b16 %v597
    %v1393 = vunpack.c.h.b16 %v597
    %v1394 = vunpack.c.l.b16 %v598
    %v1395 = vunpack.c.h.b16 %v598
    %v1396 = vunpack.c.l.b16 %v599
    %v1397 = vunpack.c.h.b16 %v599
    %v1398 = vunpack.c.l.b16 %v600
    %v1399 = vunpack.c.h.b16 %v600
    %v1400 = vunpack.c.l.b16 %v601
    %v1401 = vunpack.c.h.b16 %v601
    %v1402 = vunpack.c.l.b16 %v602
    %v1403 = vunpack.c.h.b16 %v602
    %v1404 = vunpack.c.l.b16 %v603
    %v1405 = vunpack.c.h.b16 %v603
    %v1406 = vunpack.c.l.b16 %v604
    %v1407 = vunpack.c.h.b16 %v604
    %v1408 = vunpack.c.l.b16 %v605
    %v1409 = vunpack.c.h.b16 %v605
    %v1410 = vunpack.c.l.b16 %v606
    %v1411 = vunpack.c.h.b16 %v606
    %v1412 = vunpack.c.l.b16 %v607
    %v1413 = vunpack.c.h.b16 %v607
    %v1414 = vunpack.c.l.b16 %v608
    %v1415 = vunpack.c.h.b16 %v608
    %v1416 = vunpack.c.l.b16 %v609
    %v1417 = vunpack.c.h.b16 %v609
    %v1418 = vunpack.c.l.b16 %v610
    %v1419 = vunpack.c.h.b16 %v610
    %v1420 = vunpack.c.l.b16 %v611
    %v1421 = vunpack.c.h.b16 %v611
    %v1422 = vunpack.c.l.b16 %v612
    %v1423 = vunpack.c.h.b16 %v612
    %v1424 = vunpack.c.l.b16 %v613
    %v1425 = vunpack.c.h.b16 %v613
    %v1426 = vunpack.c.l.b16 %v614
    %v1427 = vunpack.c.h.b16 %v614
    %v1428 = vunpack.c.l.b16 %v615
    %v1429 = vunpack.c.h.b16 %v615
    %v1430 = vunpack.c.l.b16 %v616
    %v1431 = vunpack.c.h.b16 %v616
    %v1432 = vunpack.c.l.b16 %v617
    %v1433 = vunpack.c.h.b16 %v617
    %v1434 = vunpack.c.l.b16 %v618
    %v1435 = vunpack.c.h.b16 %v618
    %v1436 = vunpack.c.l.b16 %v619
    %v1437 = vunpack.c.h.b16 %v619
    %v1438 = vunpack.c.l.b16 %v620
    %v1439 = vunpack.c.h.b16 %v620
    %v1440 = vunpack.c.l.b16 %v621
    %v1441 = vunpack.c.h.b16 %v621
    %v1442 = vunpack.c.l.b16 %v622
    %v1443 = vunpack.c.h.b16 %v622
    %v1444 = vunpack.c.l.b16 %v623
    %v1445 = vunpack.c.h.b16 %v623
    %v1446 = vunpack.c.l.b16 %v624
    %v1447 = vunpack.c.h.b16 %v624
    %v1448 = vunpack.c.l.b16 %v625
    %v1449 = vunpack.c.h.b16 %v625
    %v1450 = vunpack.c.l.b16 %v626
    %v1451 = vunpack.c.h.b16 %v626
    %v1452 = vunpack.c.l.b16 %v627
    %v1453 = vunpack.c.h.b16 %v627
    %v1454 = vunpack.c.l.b16 %v628
    %v1455 = vunpack.c.h.b16 %v628
    %v1456 = vunpack.c.l.b16 %v629
    %v1457 = vunpack.c.h.b16 %v629
    %v1458 = vunpack.c.l.b16 %v630
    %v1459 = vunpack.c.h.b16 %v630
    %v1460 = vunpack.c.l.b16 %v631
    %v1461 = vunpack.c.h.b16 %v631
    %v1462 = vunpack.c.l.b16 %v632
    %v1463 = vunpack.c.h.b16 %v632
    %v1464 = vunpack.c.l.b16 %v633
    %v1465 = vunpack.c.h.b16 %v633
    %v1466 = vunpack.c.l.b16 %v634
    %v1467 = vunpack.c.h.b16 %v634
    %v1468 = vunpack.c.l.b16 %v635
    %v1469 = vunpack.c.h.b16 %v635
    %v1470 = vunpack.c.l.b16 %v636
    %v1471 = vunpack.c.h.b16 %v636
    %v1472 = vunpack.c.l.b16 %v637
    %v1473 = vunpack.c.h.b16 %v637
    %v1474 = vunpack.c.l.b16 %v638
    %v1475 = vunpack.c.h.b16 %v638
    %v1476 = vunpack.c.l.b16 %v639
    %v1477 = vunpack.c.h.b16 %v639
    %v1478 = vunpack.c.l.b16 %v640
    %v1479 = vunpack.c.h.b16 %v640
    %v1480 = vunpack.c.l.b16 %v641
    %v1481 = vunpack.c.h.b16 %v641
    %v1482 = vunpack.c.l.b16 %v642
    %v1483 = vunpack.c.h.b16 %v642
    %v1484 = vunpack.c.l.b16 %v643
    %v1485 = vunpack.c.h.b16 %v643
    %v1486 = vunpack.c.l.b16 %v644
    %v1487 = vunpack.c.h.b16 %v644
    %v1488 = vunpack.c.l.b16 %v645
    %v1489 = vunpack.c.h.b16 %v645
    %v1490 = vunpack.c.l.b16 %v646
    %v1491 = vunpack.c.h.b16 %v646
    %v1492 = vunpack.c.l.b16 %v647
    %v1493 = vunpack.c.h.b16 %v647
    %v1494 = vunpack.c.l.b16 %v648
    %v1495 = vunpack.c.h.b16 %v648
    %v1496 = vunpack.c.l.b16 %v649
    %v1497 = vunpack.c.h.b16 %v649
    %v1498 = vunpack.c.l.b16 %v650
    %v1499 = vunpack.c.h.b16 %v650
    %v1500 = vunpack.c.l.b16 %v651
    %v1501 = vunpack.c.h.b16 %v651
    %v1502 = vunpack.c.l.b16 %v652
    %v1503 = vunpack.c.h.b16 %v652
    %v1504 = vunpack.c.l.b16 %v653
    %v1505 = vunpack.c.h.b16 %v653
    %v1506 = vunpack.c.l.b16 %v654
    %v1507 = vunpack.c.h.b16 %v654
    %v1508 = vunpack.c.l.b16 %v655
    %v1509 = vunpack.c.h.b16 %v655
    %v1510 = vunpack.c.l.b16 %v656
    %v1511 = vunpack.c.h.b16 %v656
    %v1512 = vunpack.c.l.b16 %v657
    %v1513 = vunpack.c.h.b16 %v657
    %v1514 = vunpack.c.l.b16 %v658
    %v1515 = vunpack.c.h.b16 %v658
    %v1516 = vunpack.c.l.b16 %v659
    %v1517 = vunpack.c.h.b16 %v659
    %v1518 = vunpack.c.l.b16 %v660
    %v1519 = vunpack.c.h.b16 %v660
    %v1520 = vunpack.c.l.b16 %v661
    %v1521 = vunpack.c.h.b16 %v661
    %v1522 = vunpack.c.l.b16 %v662
    %v1523 = vunpack.c.h.b16 %v662
    %v1524 = vunpack.c.l.b16 %v663
    %v1525 = vunpack.c.h.b16 %v663
    %v1526 = vunpack.c.l.b16 %v664
    %v1527 = vunpack.c.h.b16 %v664
    %v1528 = vunpack.c.l.b16 %v665
    %v1529 = vunpack.c.h.b16 %v665
    %v1530 = vunpack.c.l.b16 %v666
    %v1531 = vunpack.c.h.b16 %v666
    %v1532 = vunpack.c.l.b16 %v667
    %v1533 = vunpack.c.h.b16 %v667
    %v1534 = vunpack.c.l.b16 %v668
    %v1535 = vunpack.c.h.b16 %v668
    %v1536 = vunpack.c.l.b16 %v669
    %v1537 = vunpack.c.h.b16 %v669
    %v1538 = vunpack.c.l.b16 %v670
    %v1539 = vunpack.c.h.b16 %v670
    %v1540 = vunpack.c.l.b16 %v671
    %v1541 = vunpack.c.h.b16 %v671
    %v1542 = vunpack.c.l.b16 %v672
    %v1543 = vunpack.c.h.b16 %v672
    %v1544 = vunpack.c.l.b16 %v673
    %v1545 = vunpack.c.h.b16 %v673
    %v1546 = vunpack.c.l.b16 %v674
    %v1547 = vunpack.c.h.b16 %v674
    %v1548 = vunpack.c.l.b16 %v675
    %v1549 = vunpack.c.h.b16 %v675
    %v1550 = vunpack.c.l.b16 %v676
    %v1551 = vunpack.c.h.b16 %v676
    %v1552 = vunpack.c.l.b16 %v677
    %v1553 = vunpack.c.h.b16 %v677
    %v1554 = vunpack.c.l.b16 %v678
    %v1555 = vunpack.c.h.b16 %v678
    %v1556 = vunpack.c.l.b16 %v679
    %v1557 = vunpack.c.h.b16 %v679
    %v1558 = vpack.c.b16 %v988, %v982
    %v1559 = vpack.c.b16 %v989, %v983
    %v1560 = vpack.c.b16 %v990, %v984
    %v1561 = vpack.c.b16 %v991, %v985
    %v1562 = vpack.c.b16 %v992, %v986
    %v1563 = vpack.c.b16 %v993, %v987
    %v1564 = vpack.c.b16 %v1000, %v994
    %v1565 = vpack.c.b16 %v1001, %v995
    %v1566 = vpack.c.b16 %v1002, %v996
    %v1567 = vpack.c.b16 %v1003, %v997
    %v1568 = vpack.c.b16 %v1004, %v998
    %v1569 = vpack.c.b16 %v1005, %v999
    %v1570 = vpack.c.b16 %v1012, %v1006
    %v1571 = vpack.c.b16 %v1013, %v1007
    %v1572 = vpack.c.b16 %v1014, %v1008
    %v1573 = vpack.c.b16 %v1015, %v1009
    %v1574 = vpack.c.b16 %v1016, %v1010
    %v1575 = vpack.c.b16 %v1017, %v1011
    %v1576 = vpack.c.b16 %v1024, %v1018
    %v1577 = vpack.c.b16 %v1025, %v1019
    %v1578 = vpack.c.b16 %v1026, %v1020
    %v1579 = vpack.c.b16 %v1027, %v1021
    %v1580 = vpack.c.b16 %v1028, %v1022
    %v1581 = vpack.c.b16 %v1029, %v1023
    %v1582 = vpack.c.b16 %v1036, %v1030
    %v1583 = vpack.c.b16 %v1037, %v1031
    %v1584 = vpack.c.b16 %v1038, %v1032
    %v1585 = vpack.c.b16 %v1039, %v1033
    %v1586 = vpack.c.b16 %v1040, %v1034
    %v1587 = vpack.c.b16 %v1041, %v1035
    %v1588 = vpack.c.b16 %v1048, %v1042
    %v1589 = vpack.c.b16 %v1049, %v1043
    %v1590 = vpack.c.b16 %v1050, %v1044
    %v1591 = vpack.c.b16 %v1051, %v1045
    %v1592 = vpack.c.b16 %v1052, %v1046
    %v1593 = vpack.c.b16 %v1053, %v1047
    %v1594 = vpack.c.b16 %v1060, %v1054
    %v1595 = vpack.c.b16 %v1061, %v1055
    %v1596 = vpack.c.b16 %v1062, %v1056
    %v1597 = vpack.c.b16 %v1063, %v1057
    %v1598 = vpack.c.b16 %v1064, %v1058
    %v1599 = vpack.c.b16 %v1065, %v1059
    %v1600 = vpack.c.b16 %v1072, %v1066
    %v1601 = vpack.c.b16 %v1073, %v1067
    %v1602 = vpack.c.b16 %v1074, %v1068
    %v1603 = vpack.c.b16 %v1075, %v1069
    %v1604 = vpack.c.b16 %v1076, %v1070
    %v1605 = vpack.c.b16 %v1077, %v1071
    %v1606 = vpack.c.b16 %v1084, %v1078
    %v1607 = vpack.c.b16 %v1085, %v1079
    %v1608 = vpack.c.b16 %v1086, %v1080
    %v1609 = vpack.c.b16 %v1087, %v1081
    %v1610 = vpack.c.b16 %v1088, %v1082
    %v1611 = vpack.c.b16 %v1089, %v1083
    %v1612 = vpack.c.b16 %v1096, %v1090
    %v1613 = vpack.c.b16 %v1097, %v1091
    %v1614 = vpack.c.b16 %v1098, %v1092
    %v1615 = vpack.c.b16 %v1099, %v1093
    %v1616 = vpack.c.b16 %v1100, %v1094
    %v1617 = vpack.c.b16 %v1101, %v1095
    %v1618 = vpack.c.b16 %v1108, %v1102
    %v1619 = vpack.c.b16 %v1109, %v1103
    %v1620 = vpack.c.b16 %v1110, %v1104
    %v1621 = vpack.c.b16 %v1111, %v1105
    %v1622 = vpack.c.b16 %v1112, %v1106
    %v1623 = vpack.c.b16 %v1113, %v1107
    %v1624 = vpack.c.b16 %v1120, %v1114
    %v1625 = vpack.c.b16 %v1121, %v1115
    %v1626 = vpack.c.b16 %v1122, %v1116
    %v1627 = vpack.c.b16 %v1123, %v1117
    %v1628 = vpack.c.b16 %v1124, %v1118
    %v1629 = vpack.c.b16 %v1125, %v1119
    %v1630 = vpack.c.b16 %v1132, %v1126
    %v1631 = vpack.c.b16 %v1133, %v1127
    %v1632 = vpack.c.b16 %v1134, %v1128
    %v1633 = vpack.c.b16 %v1135, %v1129
    %v1634 = vpack.c.b16 %v1136, %v1130
    %v1635 = vpack.c.b16 %v1137, %v1131
    %v1636 = vpack.c.b16 %v1144, %v1138
    %v1637 = vpack.c.b16 %v1145, %v1139
    %v1638 = vpack.c.b16 %v1146, %v1140
    %v1639 = vpack.c.b16 %v1147, %v1141
    %v1640 = vpack.c.b16 %v1148, %v1142
    %v1641 = vpack.c.b16 %v1149, %v1143
    %v1642 = vpack.c.b16 %v1156, %v1150
    %v1643 = vpack.c.b16 %v1157, %v1151
    %v1644 = vpack.c.b16 %v1158, %v1152
    %v1645 = vpack.c.b16 %v1159, %v1153
    %v1646 = vpack.c.b16 %v1160, %v1154
    %v1647 = vpack.c.b16 %v1161, %v1155
    %v1648 = vpack.c.b16 %v1168, %v1162
    %v1649 = vpack.c.b16 %v1169, %v1163
    %v1650 = vpack.c.b16 %v1170, %v1164
    %v1651 = vpack.c.b16 %v1171, %v1165
    %v1652 = vpack.c.b16 %v1172, %v1166
    %v1653 = vpack.c.b16 %v1173, %v1167
    %v1654 = vpack.c.b16 %v1180, %v1174
    %v1655 = vpack.c.b16 %v1181, %v1175
    %v1656 = vpack.c.b16 %v1182, %v1176
    %v1657 = vpack.c.b16 %v1183, %v1177
    %v1658 = vpack.c.b16 %v1184, %v1178
    %v1659 = vpack.c.b16 %v1185, %v1179
    %v1660 = vpack.c.b16 %v1192, %v1186
    %v1661 = vpack.c.b16 %v1193, %v1187
    %v1662 = vpack.c.b16 %v1194, %v1188
    %v1663 = vpack.c.b16 %v1195, %v1189
    %v1664 = vpack.c.b16 %v1196, %v1190
    %v1665 = vpack.c.b16 %v1197, %v1191
    %v1666 = vpack.c.b16 %v1204, %v1198
    %v1667 = vpack.c.b16 %v1205, %v1199
    %v1668 = vpack.c.b16 %v1206, %v1200
    %v1669 = vpack.c.b16 %v1207, %v1201
    %v1670 = vpack.c.b16 %v1208, %v1202
    %v1671 = vpack.c.b16 %v1209, %v1203
    %v1672 = vpack.c.b16 %v1216, %v1210
    %v1673 = vpack.c.b16 %v1217, %v1211
    %v1674 = vpack.c.b16 %v1218, %v1212
    %v1675 = vpack.c.b16 %v1219, %v1213
    %v1676 = vpack.c.b16 %v1220, %v1214
    %v1677 = vpack.c.b16 %v1221, %v1215
    %v1678 = vpack.c.b16 %v1228, %v1222
    %v1679 = vpack.c.b16 %v1229, %v1223
    %v1680 = vpack.c.b16 %v1230, %v1224
    %v1681 = vpack.c.b16 %v1231, %v1225
    %v1682 = vpack.c.b16 %v1232, %v1226
    %v1683 = vpack.c.b16 %v1233, %v1227
    %v1684 = vpack.c.b16 %v1240, %v1234
    %v1685 = vpack.c.b16 %v1241, %v1235
    %v1686 = vpack.c.b16 %v1242, %v1236
    %v1687 = vpack.c.b16 %v1243, %v1237
    %v1688 = vpack.c.b16 %v1244, %v1238
    %v1689 = vpack.c.b16 %v1245, %v1239
    %v1690 = vpack.c.b16 %v1252, %v1246
    %v1691 = vpack.c.b16 %v1253, %v1247
    %v1692 = vpack.c.b16 %v1254, %v1248
    %v1693 = vpack.c.b16 %v1255, %v1249
    %v1694 = vpack.c.b16 %v1256, %v1250
    %v1695 = vpack.c.b16 %v1257, %v1251
    %v1696 = vpack.c.b16 %v1264, %v1258
    %v1697 = vpack.c.b16 %v1265, %v1259
    %v1698 = vpack.c.b16 %v1266, %v1260
    %v1699 = vpack.c.b16 %v1267, %v1261
    %v1700 = vpack.c.b16 %v1268, %v1262
    %v1701 = vpack.c.b16 %v1269, %v1263
    %v1702 = vpack.c.b16 %v1276, %v1270
    %v1703 = vpack.c.b16 %v1277, %v1271
    %v1704 = vpack.c.b16 %v1278, %v1272
    %v1705 = vpack.c.b16 %v1279, %v1273
    %v1706 = vpack.c.b16 %v1280, %v1274
    %v1707 = vpack.c.b16 %v1281, %v1275
    %v1708 = vpack.c.b16 %v1288, %v1282
    %v1709 = vpack.c.b16 %v1289, %v1283
    %v1710 = vpack.c.b16 %v1290, %v1284
    %v1711 = vpack.c.b16 %v1291, %v1285
    %v1712 = vpack.c.b16 %v1292, %v1286
    %v1713 = vpack.c.b16 %v1293, %v1287
    %v1714 = vpack.c.b16 %v1300, %v1294
    %v1715 = vpack.c.b16 %v1301, %v1295
    %v1716 = vpack.c.b16 %v1302, %v1296
    %v1717 = vpack.c.b16 %v1303, %v1297
    %v1718 = vpack.c.b16 %v1304, %v1298
    %v1719 = vpack.c.b16 %v1305, %v1299
    %v1720 = vpack.c.b16 %v1312, %v1306
    %v1721 = vpack.c.b16 %v1313, %v1307
    %v1722 = vpack.c.b16 %v1314, %v1308
    %v1723 = vpack.c.b16 %v1315, %v1309
    %v1724 = vpack.c.b16 %v1316, %v1310
    %v1725 = vpack.c.b16 %v1317, %v1311
    %v1726 = vpack.c.b16 %v1324, %v1318
    %v1727 = vpack.c.b16 %v1325, %v1319
    %v1728 = vpack.c.b16 %v1326, %v1320
    %v1729 = vpack.c.b16 %v1327, %v1321
    %v1730 = vpack.c.b16 %v1328, %v1322
    %v1731 = vpack.c.b16 %v1329, %v1323
    %v1732 = vpack.c.b16 %v1336, %v1330
    %v1733 = vpack.c.b16 %v1337, %v1331
    %v1734 = vpack.c.b16 %v1338, %v1332
    %v1735 = vpack.c.b16 %v1339, %v1333
    %v1736 = vpack.c.b16 %v1340, %v1334
    %v1737 = vpack.c.b16 %v1341, %v1335
    %v1738 = vpack.c.b16 %v1348, %v1342
    %v1739 = vpack.c.b16 %v1349, %v1343
    %v1740 = vpack.c.b16 %v1350, %v1344
    %v1741 = vpack.c.b16 %v1351, %v1345
    %v1742 = vpack.c.b16 %v1352, %v1346
    %v1743 = vpack.c.b16 %v1353, %v1347
    %v1744 = vpack.c.b16 %v1360, %v1354
    %v1745 = vpack.c.b16 %v1361, %v1355
    %v1746 = vpack.c.b16 %v1362, %v1356
    %v1747 = vpack.c.b16 %v1363, %v1357
    %v1748 = vpack.c.b16 %v1364, %v1358
    %v1749 = vpack.c.b16 %v1365, %v1359
    %v1750 = vpack.c.b16 %v1372, %v1366
    %v1751 = vpack.c.b16 %v1373, %v1367
    %v1752 = vpack.c.b16 %v1374, %v1368
    %v1753 = vpack.c.b16 %v1375, %v1369
    %v1754 = vpack.c.b16 %v1376, %v1370
    %v1755 = vpack.c.b16 %v1377, %v1371
    %v1756 = vpack.c.b16 %v1384, %v1378
    %v1757 = vpack.c.b16 %v1385, %v1379
    %v1758 = vpack.c.b16 %v1386, %v1380
    %v1759 = vpack.c.b16 %v1387, %v1381
    %v1760 = vpack.c.b16 %v1388, %v1382
    %v1761 = vpack.c.b16 %v1389, %v1383
    %v1762 = vpack.c.b16 %v1396, %v1390
    %v1763 = vpack.c.b16 %v1397, %v1391
    %v1764 = vpack.c.b16 %v1398, %v1392
    %v1765 = vpack.c.b16 %v1399, %v1393
    %v1766 = vpack.c.b16 %v1400, %v1394
    %v1767 = vpack.c.b16 %v1401, %v1395
    %v1768 = vpack.c.b16 %v1408, %v1402
    %v1769 = vpack.c.b16 %v1409, %v1403
    %v1770 = vpack.c.b16 %v1410, %v1404
    %v1771 = vpack.c.b16 %v1411, %v1405
    %v1772 = vpack.c.b16 %v1412, %v1406
    %v1773 = vpack.c.b16 %v1413, %v1407
    %v1774 = vpack.c.b16 %v1420, %v1414
    %v1775 = vpack.c.b16 %v1421, %v1415
    %v1776 = vpack.c.b16 %v1422, %v1416
    %v1777 = vpack.c.b16 %v1423, %v1417
    %v1778 = vpack.c.b16 %v1424, %v1418
    %v1779 = vpack.c.b16 %v1425, %v1419
    %v1780 = vpack.c.b16 %v1432, %v1426
    %v1781 = vpack.c.b16 %v1433, %v1427
    %v1782 = vpack.c.b16 %v1434, %v1428
    %v1783 = vpack.c.b16 %v1435, %v1429
    %v1784 = vpack.c.b16 %v1436, %v1430
    %v1785 = vpack.c.b16 %v1437, %v1431
    %v1786 = vpack.c.b16 %v1444, %v1438
    %v1787 = vpack.c.b16 %v1445, %v1439
    %v1788 = vpack.c.b16 %v1446, %v1440
    %v1789 = vpack.c.b16 %v1447, %v1441
    %v1790 = vpack.c.b16 %v1448, %v1442
    %v1791 = vpack.c.b16 %v1449, %v1443
    %v1792 = vpack.c.b16 %v1456, %v1450
    %v1793 = vpack.c.b16 %v1457, %v1451
    %v1794 = vpack.c.b16 %v1458, %v1452
    %v1795 = vpack.c.b16 %v1459, %v1453
    %v1796 = vpack.c.b16 %v1460, %v1454
    %v1797 = vpack.c.b16 %v1461, %v1455
    %v1798 = vpack.c.b16 %v1468, %v1462
    %v1799 = vpack.c.b16 %v1469, %v1463
    %v1800 = vpack.c.b16 %v1470, %v1464
    %v1801 = vpack.c.b16 %v1471, %v1465
    %v1802 = vpack.c.b16 %v1472, %v1466
    %v1803 = vpack.c.b16 %v1473, %v1467
    %v1804 = vpack.c.b16 %v1480, %v1474
    %v1805 = vpack.c.b16 %v1481, %v1475
    %v1806 = vpack.c.b16 %v1482, %v1476
    %v1807 = vpack.c.b16 %v1483, %v1477
    %v1808 = vpack.c.b16 %v1484, %v1478
    %v1809 = vpack.c.b16 %v1485, %v1479
    %v1810 = vpack.c.b16 %v1492, %v1486
    %v1811 = vpack.c.b16 %v1493, %v1487
    %v1812 = vpack.c.b16 %v1494, %v1488
    %v1813 = vpack.c.b16 %v1495, %v1489
    %v1814 = vpack.c.b16 %v1496, %v1490
    %v1815 = vpack.c.b16 %v1497, %v1491
    %v1816 = vpack.c.b16 %v1504, %v1498
    %v1817 = vpack.c.b16 %v1505, %v1499
    %v1818 = vpack.c.b16 %v1506, %v1500
    %v1819 = vpack.c.b16 %v1507, %v1501
    %v1820 = vpack.c.b16 %v1508, %v1502
    %v1821 = vpack.c.b16 %v1509, %v1503
    %v1822 = vpack.c.b16 %v1516, %v1510
    %v1823 = vpack.c.b16 %v1517, %v1511
    %v1824 = vpack.c.b16 %v1518, %v1512
    %v1825 = vpack.c.b16 %v1519, %v1513
    %v1826 = vpack.c.b16 %v1520, %v1514
    %v1827 = vpack.c.b16 %v1521, %v1515
    %v1828 = vpack.c.b16 %v1528, %v1522
    %v1829 = vpack.c.b16 %v1529, %v1523
    %v1830 = vpack.c.b16 %v1530, %v1524
    %v1831 = vpack.c.b16 %v1531, %v1525
    %v1832 = vpack.c.b16 %v1532, %v1526
    %v1833 = vpack.c.b16 %v1533, %v1527
    %v1834 = vpack.c.b16 %v1540, %v1534
    %v1835 = vpack.c.b16 %v1541, %v1535
    %v1836 = vpack.c.b16 %v1542, %v1536
    %v1837 = vpack.c.b16 %v1543, %v1537
    %v1838 = vpack.c.b16 %v1544, %v1538
    %v1839 = vpack.c.b16 %v1545, %v1539
    %v1840 = vpack.c.b16 %v1552, %v1546
    %v1841 = vpack.c.b16 %v1553, %v1547
    %v1842 = vpack.c.b16 %v1554, %v1548
    %v1843 = vpack.c.b16 %v1555, %v1549
    %v1844 = vpack.c.b16 %v1556, %v1550
    %v1845 = vpack.c.b16 %v1557, %v1551
    %2134 = vmatpush.bf16.msra.mxu0 %v1600
    %2135 = vmatpush.bf16.msra.mxu0 %v1594
    %2136 = vmatpush.bf16.msra.mxu0 %v1588
    %2137 = vmatpush.bf16.msra.mxu0 %v1582
    %2138 = vmatpush.bf16.msra.mxu0 %v1576
    %2139 = vmatpush.bf16.msra.mxu0 %v1570
    %2140 = vmatpush.bf16.msra.mxu0 %v1564
    %2141 = vmatpush.bf16.msra.mxu0 %v1558
    %2142 = vmatmul.bf16.gmra.mxu0 %v386
    %v2143 = vpop.f32.mrf.mxu0
    %v2144 = vadd.f32 %v682, %v2143
    %v2145 = vpop.f32.mrf.mxu0
    %2146 = vdwg.mxu0
    %2147 = vmatpush.bf16.msra.mxu0 %v1648
    %2148 = vmatpush.bf16.msra.mxu0 %v1642
    %2149 = vmatpush.bf16.msra.mxu0 %v1636
    %2150 = vmatpush.bf16.msra.mxu0 %v1630
    %2151 = vmatpush.bf16.msra.mxu0 %v1624
    %2152 = vmatpush.bf16.msra.mxu0 %v1618
    %2153 = vmatpush.bf16.msra.mxu0 %v1612
    %2154 = vmatpush.bf16.msra.mxu0 %v1606
    %2155 = vmatmul.bf16.gmra.mxu0 %v387
    %v2156 = vpop.f32.mrf.mxu0
    %v2157 = vadd.f32 %v2144, %v2156
    %v2158 = vpop.f32.mrf.mxu0
    %2159 = vdwg.mxu0
    %2160 = vmatpush.bf16.msra.mxu0 %v1696
    %2161 = vmatpush.bf16.msra.mxu0 %v1690
    %2162 = vmatpush.bf16.msra.mxu0 %v1684
    %2163 = vmatpush.bf16.msra.mxu0 %v1678
    %2164 = vmatpush.bf16.msra.mxu0 %v1672
    %2165 = vmatpush.bf16.msra.mxu0 %v1666
    %2166 = vmatpush.bf16.msra.mxu0 %v1660
    %2167 = vmatpush.bf16.msra.mxu0 %v1654
    %2168 = vmatmul.bf16.gmra.mxu0 %v388
    %v2169 = vpop.f32.mrf.mxu0
    %v2170 = vadd.f32 %v2157, %v2169
    %v2171 = vpop.f32.mrf.mxu0
    %2172 = vdwg.mxu0
    %2173 = vmatpush.bf16.msra.mxu0 %v1744
    %2174 = vmatpush.bf16.msra.mxu0 %v1738
    %2175 = vmatpush.bf16.msra.mxu0 %v1732
    %2176 = vmatpush.bf16.msra.mxu0 %v1726
    %2177 = vmatpush.bf16.msra.mxu0 %v1720
    %2178 = vmatpush.bf16.msra.mxu0 %v1714
    %2179 = vmatpush.bf16.msra.mxu0 %v1708
    %2180 = vmatpush.bf16.msra.mxu0 %v1702
    %2181 = vmatmul.bf16.gmra.mxu0 %v389
    %v2182 = vpop.f32.mrf.mxu0
    %v2183 = vadd.f32 %v2170, %v2182
    %v2184 = vpop.f32.mrf.mxu0
    %2185 = vdwg.mxu0
    %2186 = vmatpush.bf16.msra.mxu0 %v1792
    %2187 = vmatpush.bf16.msra.mxu0 %v1786
    %2188 = vmatpush.bf16.msra.mxu0 %v1780
    %2189 = vmatpush.bf16.msra.mxu0 %v1774
    %2190 = vmatpush.bf16.msra.mxu0 %v1768
    %2191 = vmatpush.bf16.msra.mxu0 %v1762
    %2192 = vmatpush.bf16.msra.mxu0 %v1756
    %2193 = vmatpush.bf16.msra.mxu0 %v1750
    %2194 = vmatmul.bf16.gmra.mxu0 %v390
    %v2195 = vpop.f32.mrf.mxu0
    %v2196 = vadd.f32 %v2183, %v2195
    %v2197 = vpop.f32.mrf.mxu0
    %2198 = vdwg.mxu0
    %2199 = vmatpush.bf16.msra.mxu0 %v1840
    %2200 = vmatpush.bf16.msra.mxu0 %v1834
    %2201 = vmatpush.bf16.msra.mxu0 %v1828
    %2202 = vmatpush.bf16.msra.mxu0 %v1822
    %2203 = vmatpush.bf16.msra.mxu0 %v1816
    %2204 = vmatpush.bf16.msra.mxu0 %v1810
    %2205 = vmatpush.bf16.msra.mxu0 %v1804
    %2206 = vmatpush.bf16.msra.mxu0 %v1798
    %2207 = vmatmul.bf16.gmra.mxu0 %v391
    %v2208 = vpop.f32.mrf.mxu0
    %v2209 = vadd.f32 %v2196, %v2208
    %v2210 = vpop.f32.mrf.mxu0
    %2211 = vdwg.mxu0
    %2212 = vmatpush.bf16.msra.mxu0 %v1601
    %2213 = vmatpush.bf16.msra.mxu0 %v1595
    %2214 = vmatpush.bf16.msra.mxu0 %v1589
    %2215 = vmatpush.bf16.msra.mxu0 %v1583
    %2216 = vmatpush.bf16.msra.mxu0 %v1577
    %2217 = vmatpush.bf16.msra.mxu0 %v1571
    %2218 = vmatpush.bf16.msra.mxu0 %v1565
    %2219 = vmatpush.bf16.msra.mxu0 %v1559
    %2220 = vmatmul.bf16.gmra.mxu0 %v386
    %v2221 = vpop.f32.mrf.mxu0
    %v2222 = vadd.f32 %v683, %v2221
    %v2223 = vpop.f32.mrf.mxu0
    %2224 = vdwg.mxu0
    %2225 = vmatpush.bf16.msra.mxu0 %v1649
    %2226 = vmatpush.bf16.msra.mxu0 %v1643
    %2227 = vmatpush.bf16.msra.mxu0 %v1637
    %2228 = vmatpush.bf16.msra.mxu0 %v1631
    %2229 = vmatpush.bf16.msra.mxu0 %v1625
    %2230 = vmatpush.bf16.msra.mxu0 %v1619
    %2231 = vmatpush.bf16.msra.mxu0 %v1613
    %2232 = vmatpush.bf16.msra.mxu0 %v1607
    %2233 = vmatmul.bf16.gmra.mxu0 %v387
    %v2234 = vpop.f32.mrf.mxu0
    %v2235 = vadd.f32 %v2222, %v2234
    %v2236 = vpop.f32.mrf.mxu0
    %2237 = vdwg.mxu0
    %2238 = vmatpush.bf16.msra.mxu0 %v1697
    %2239 = vmatpush.bf16.msra.mxu0 %v1691
    %2240 = vmatpush.bf16.msra.mxu0 %v1685
    %2241 = vmatpush.bf16.msra.mxu0 %v1679
    %2242 = vmatpush.bf16.msra.mxu0 %v1673
    %2243 = vmatpush.bf16.msra.mxu0 %v1667
    %2244 = vmatpush.bf16.msra.mxu0 %v1661
    %2245 = vmatpush.bf16.msra.mxu0 %v1655
    %2246 = vmatmul.bf16.gmra.mxu0 %v388
    %v2247 = vpop.f32.mrf.mxu0
    %v2248 = vadd.f32 %v2235, %v2247
    %v2249 = vpop.f32.mrf.mxu0
    %2250 = vdwg.mxu0
    %2251 = vmatpush.bf16.msra.mxu0 %v1745
    %2252 = vmatpush.bf16.msra.mxu0 %v1739
    %2253 = vmatpush.bf16.msra.mxu0 %v1733
    %2254 = vmatpush.bf16.msra.mxu0 %v1727
    %2255 = vmatpush.bf16.msra.mxu0 %v1721
    %2256 = vmatpush.bf16.msra.mxu0 %v1715
    %2257 = vmatpush.bf16.msra.mxu0 %v1709
    %2258 = vmatpush.bf16.msra.mxu0 %v1703
    %2259 = vmatmul.bf16.gmra.mxu0 %v389
    %v2260 = vpop.f32.mrf.mxu0
    %v2261 = vadd.f32 %v2248, %v2260
    %v2262 = vpop.f32.mrf.mxu0
    %2263 = vdwg.mxu0
    %2264 = vmatpush.bf16.msra.mxu0 %v1793
    %2265 = vmatpush.bf16.msra.mxu0 %v1787
    %2266 = vmatpush.bf16.msra.mxu0 %v1781
    %2267 = vmatpush.bf16.msra.mxu0 %v1775
    %2268 = vmatpush.bf16.msra.mxu0 %v1769
    %2269 = vmatpush.bf16.msra.mxu0 %v1763
    %2270 = vmatpush.bf16.msra.mxu0 %v1757
    %2271 = vmatpush.bf16.msra.mxu0 %v1751
    %2272 = vmatmul.bf16.gmra.mxu0 %v390
    %v2273 = vpop.f32.mrf.mxu0
    %v2274 = vadd.f32 %v2261, %v2273
    %v2275 = vpop.f32.mrf.mxu0
    %2276 = vdwg.mxu0
    %2277 = vmatpush.bf16.msra.mxu0 %v1841
    %2278 = vmatpush.bf16.msra.mxu0 %v1835
    %2279 = vmatpush.bf16.msra.mxu0 %v1829
    %2280 = vmatpush.bf16.msra.mxu0 %v1823
    %2281 = vmatpush.bf16.msra.mxu0 %v1817
    %2282 = vmatpush.bf16.msra.mxu0 %v1811
    %2283 = vmatpush.bf16.msra.mxu0 %v1805
    %2284 = vmatpush.bf16.msra.mxu0 %v1799
    %2285 = vmatmul.bf16.gmra.mxu0 %v391
    %v2286 = vpop.f32.mrf.mxu0
    %v2287 = vadd.f32 %v2274, %v2286
    %v2288 = vpop.f32.mrf.mxu0
    %2289 = vdwg.mxu0
    %2290 = vmatpush.bf16.msra.mxu0 %v1602
    %2291 = vmatpush.bf16.msra.mxu0 %v1596
    %2292 = vmatpush.bf16.msra.mxu0 %v1590
    %2293 = vmatpush.bf16.msra.mxu0 %v1584
    %2294 = vmatpush.bf16.msra.mxu0 %v1578
    %2295 = vmatpush.bf16.msra.mxu0 %v1572
    %2296 = vmatpush.bf16.msra.mxu0 %v1566
    %2297 = vmatpush.bf16.msra.mxu0 %v1560
    %2298 = vmatmul.bf16.gmra.mxu0 %v386
    %v2299 = vpop.f32.mrf.mxu0
    %v2300 = vadd.f32 %v684, %v2299
    %v2301 = vpop.f32.mrf.mxu0
    %2302 = vdwg.mxu0
    %2303 = vmatpush.bf16.msra.mxu0 %v1650
    %2304 = vmatpush.bf16.msra.mxu0 %v1644
    %2305 = vmatpush.bf16.msra.mxu0 %v1638
    %2306 = vmatpush.bf16.msra.mxu0 %v1632
    %2307 = vmatpush.bf16.msra.mxu0 %v1626
    %2308 = vmatpush.bf16.msra.mxu0 %v1620
    %2309 = vmatpush.bf16.msra.mxu0 %v1614
    %2310 = vmatpush.bf16.msra.mxu0 %v1608
    %2311 = vmatmul.bf16.gmra.mxu0 %v387
    %v2312 = vpop.f32.mrf.mxu0
    %v2313 = vadd.f32 %v2300, %v2312
    %v2314 = vpop.f32.mrf.mxu0
    %2315 = vdwg.mxu0
    %2316 = vmatpush.bf16.msra.mxu0 %v1698
    %2317 = vmatpush.bf16.msra.mxu0 %v1692
    %2318 = vmatpush.bf16.msra.mxu0 %v1686
    %2319 = vmatpush.bf16.msra.mxu0 %v1680
    %2320 = vmatpush.bf16.msra.mxu0 %v1674
    %2321 = vmatpush.bf16.msra.mxu0 %v1668
    %2322 = vmatpush.bf16.msra.mxu0 %v1662
    %2323 = vmatpush.bf16.msra.mxu0 %v1656
    %2324 = vmatmul.bf16.gmra.mxu0 %v388
    %v2325 = vpop.f32.mrf.mxu0
    %v2326 = vadd.f32 %v2313, %v2325
    %v2327 = vpop.f32.mrf.mxu0
    %2328 = vdwg.mxu0
    %2329 = vmatpush.bf16.msra.mxu0 %v1746
    %2330 = vmatpush.bf16.msra.mxu0 %v1740
    %2331 = vmatpush.bf16.msra.mxu0 %v1734
    %2332 = vmatpush.bf16.msra.mxu0 %v1728
    %2333 = vmatpush.bf16.msra.mxu0 %v1722
    %2334 = vmatpush.bf16.msra.mxu0 %v1716
    %2335 = vmatpush.bf16.msra.mxu0 %v1710
    %2336 = vmatpush.bf16.msra.mxu0 %v1704
    %2337 = vmatmul.bf16.gmra.mxu0 %v389
    %v2338 = vpop.f32.mrf.mxu0
    %v2339 = vadd.f32 %v2326, %v2338
    %v2340 = vpop.f32.mrf.mxu0
    %2341 = vdwg.mxu0
    %2342 = vmatpush.bf16.msra.mxu0 %v1794
    %2343 = vmatpush.bf16.msra.mxu0 %v1788
    %2344 = vmatpush.bf16.msra.mxu0 %v1782
    %2345 = vmatpush.bf16.msra.mxu0 %v1776
    %2346 = vmatpush.bf16.msra.mxu0 %v1770
    %2347 = vmatpush.bf16.msra.mxu0 %v1764
    %2348 = vmatpush.bf16.msra.mxu0 %v1758
    %2349 = vmatpush.bf16.msra.mxu0 %v1752
    %2350 = vmatmul.bf16.gmra.mxu0 %v390
    %v2351 = vpop.f32.mrf.mxu0
    %v2352 = vadd.f32 %v2339, %v2351
    %v2353 = vpop.f32.mrf.mxu0
    %2354 = vdwg.mxu0
    %2355 = vmatpush.bf16.msra.mxu0 %v1842
    %2356 = vmatpush.bf16.msra.mxu0 %v1836
    %2357 = vmatpush.bf16.msra.mxu0 %v1830
    %2358 = vmatpush.bf16.msra.mxu0 %v1824
    %2359 = vmatpush.bf16.msra.mxu0 %v1818
    %2360 = vmatpush.bf16.msra.mxu0 %v1812
    %2361 = vmatpush.bf16.msra.mxu0 %v1806
    %2362 = vmatpush.bf16.msra.mxu0 %v1800
    %2363 = vmatmul.bf16.gmra.mxu0 %v391
    %v2364 = vpop.f32.mrf.mxu0
    %v2365 = vadd.f32 %v2352, %v2364
    %v2366 = vpop.f32.mrf.mxu0
    %2367 = vdwg.mxu0
    %2368 = vmatpush.bf16.msra.mxu0 %v1603
    %2369 = vmatpush.bf16.msra.mxu0 %v1597
    %2370 = vmatpush.bf16.msra.mxu0 %v1591
    %2371 = vmatpush.bf16.msra.mxu0 %v1585
    %2372 = vmatpush.bf16.msra.mxu0 %v1579
    %2373 = vmatpush.bf16.msra.mxu0 %v1573
    %2374 = vmatpush.bf16.msra.mxu0 %v1567
    %2375 = vmatpush.bf16.msra.mxu0 %v1561
    %2376 = vmatmul.bf16.gmra.mxu0 %v386
    %v2377 = vpop.f32.mrf.mxu0
    %v2378 = vadd.f32 %v685, %v2377
    %v2379 = vpop.f32.mrf.mxu0
    %2380 = vdwg.mxu0
    %2381 = vmatpush.bf16.msra.mxu0 %v1651
    %2382 = vmatpush.bf16.msra.mxu0 %v1645
    %2383 = vmatpush.bf16.msra.mxu0 %v1639
    %2384 = vmatpush.bf16.msra.mxu0 %v1633
    %2385 = vmatpush.bf16.msra.mxu0 %v1627
    %2386 = vmatpush.bf16.msra.mxu0 %v1621
    %2387 = vmatpush.bf16.msra.mxu0 %v1615
    %2388 = vmatpush.bf16.msra.mxu0 %v1609
    %2389 = vmatmul.bf16.gmra.mxu0 %v387
    %v2390 = vpop.f32.mrf.mxu0
    %v2391 = vadd.f32 %v2378, %v2390
    %v2392 = vpop.f32.mrf.mxu0
    %2393 = vdwg.mxu0
    %2394 = vmatpush.bf16.msra.mxu0 %v1699
    %2395 = vmatpush.bf16.msra.mxu0 %v1693
    %2396 = vmatpush.bf16.msra.mxu0 %v1687
    %2397 = vmatpush.bf16.msra.mxu0 %v1681
    %2398 = vmatpush.bf16.msra.mxu0 %v1675
    %2399 = vmatpush.bf16.msra.mxu0 %v1669
    %2400 = vmatpush.bf16.msra.mxu0 %v1663
    %2401 = vmatpush.bf16.msra.mxu0 %v1657
    %2402 = vmatmul.bf16.gmra.mxu0 %v388
    %v2403 = vpop.f32.mrf.mxu0
    %v2404 = vadd.f32 %v2391, %v2403
    %v2405 = vpop.f32.mrf.mxu0
    %2406 = vdwg.mxu0
    %2407 = vmatpush.bf16.msra.mxu0 %v1747
    %2408 = vmatpush.bf16.msra.mxu0 %v1741
    %2409 = vmatpush.bf16.msra.mxu0 %v1735
    %2410 = vmatpush.bf16.msra.mxu0 %v1729
    %2411 = vmatpush.bf16.msra.mxu0 %v1723
    %2412 = vmatpush.bf16.msra.mxu0 %v1717
    %2413 = vmatpush.bf16.msra.mxu0 %v1711
    %2414 = vmatpush.bf16.msra.mxu0 %v1705
    %2415 = vmatmul.bf16.gmra.mxu0 %v389
    %v2416 = vpop.f32.mrf.mxu0
    %v2417 = vadd.f32 %v2404, %v2416
    %v2418 = vpop.f32.mrf.mxu0
    %2419 = vdwg.mxu0
    %2420 = vmatpush.bf16.msra.mxu0 %v1795
    %2421 = vmatpush.bf16.msra.mxu0 %v1789
    %2422 = vmatpush.bf16.msra.mxu0 %v1783
    %2423 = vmatpush.bf16.msra.mxu0 %v1777
    %2424 = vmatpush.bf16.msra.mxu0 %v1771
    %2425 = vmatpush.bf16.msra.mxu0 %v1765
    %2426 = vmatpush.bf16.msra.mxu0 %v1759
    %2427 = vmatpush.bf16.msra.mxu0 %v1753
    %2428 = vmatmul.bf16.gmra.mxu0 %v390
    %v2429 = vpop.f32.mrf.mxu0
    %v2430 = vadd.f32 %v2417, %v2429
    %v2431 = vpop.f32.mrf.mxu0
    %2432 = vdwg.mxu0
    %2433 = vmatpush.bf16.msra.mxu0 %v1843
    %2434 = vmatpush.bf16.msra.mxu0 %v1837
    %2435 = vmatpush.bf16.msra.mxu0 %v1831
    %2436 = vmatpush.bf16.msra.mxu0 %v1825
    %2437 = vmatpush.bf16.msra.mxu0 %v1819
    %2438 = vmatpush.bf16.msra.mxu0 %v1813
    %2439 = vmatpush.bf16.msra.mxu0 %v1807
    %2440 = vmatpush.bf16.msra.mxu0 %v1801
    %2441 = vmatmul.bf16.gmra.mxu0 %v391
    %v2442 = vpop.f32.mrf.mxu0
    %v2443 = vadd.f32 %v2430, %v2442
    %v2444 = vpop.f32.mrf.mxu0
    %2445 = vdwg.mxu0
    %2446 = vmatpush.bf16.msra.mxu0 %v1604
    %2447 = vmatpush.bf16.msra.mxu0 %v1598
    %2448 = vmatpush.bf16.msra.mxu0 %v1592
    %2449 = vmatpush.bf16.msra.mxu0 %v1586
    %2450 = vmatpush.bf16.msra.mxu0 %v1580
    %2451 = vmatpush.bf16.msra.mxu0 %v1574
    %2452 = vmatpush.bf16.msra.mxu0 %v1568
    %2453 = vmatpush.bf16.msra.mxu0 %v1562
    %2454 = vmatmul.bf16.gmra.mxu0 %v386
    %v2455 = vpop.f32.mrf.mxu0
    %v2456 = vadd.f32 %v686, %v2455
    %v2457 = vpop.f32.mrf.mxu0
    %2458 = vdwg.mxu0
    %2459 = vmatpush.bf16.msra.mxu0 %v1652
    %2460 = vmatpush.bf16.msra.mxu0 %v1646
    %2461 = vmatpush.bf16.msra.mxu0 %v1640
    %2462 = vmatpush.bf16.msra.mxu0 %v1634
    %2463 = vmatpush.bf16.msra.mxu0 %v1628
    %2464 = vmatpush.bf16.msra.mxu0 %v1622
    %2465 = vmatpush.bf16.msra.mxu0 %v1616
    %2466 = vmatpush.bf16.msra.mxu0 %v1610
    %2467 = vmatmul.bf16.gmra.mxu0 %v387
    %v2468 = vpop.f32.mrf.mxu0
    %v2469 = vadd.f32 %v2456, %v2468
    %v2470 = vpop.f32.mrf.mxu0
    %2471 = vdwg.mxu0
    %2472 = vmatpush.bf16.msra.mxu0 %v1700
    %2473 = vmatpush.bf16.msra.mxu0 %v1694
    %2474 = vmatpush.bf16.msra.mxu0 %v1688
    %2475 = vmatpush.bf16.msra.mxu0 %v1682
    %2476 = vmatpush.bf16.msra.mxu0 %v1676
    %2477 = vmatpush.bf16.msra.mxu0 %v1670
    %2478 = vmatpush.bf16.msra.mxu0 %v1664
    %2479 = vmatpush.bf16.msra.mxu0 %v1658
    %2480 = vmatmul.bf16.gmra.mxu0 %v388
    %v2481 = vpop.f32.mrf.mxu0
    %v2482 = vadd.f32 %v2469, %v2481
    %v2483 = vpop.f32.mrf.mxu0
    %2484 = vdwg.mxu0
    %2485 = vmatpush.bf16.msra.mxu0 %v1748
    %2486 = vmatpush.bf16.msra.mxu0 %v1742
    %2487 = vmatpush.bf16.msra.mxu0 %v1736
    %2488 = vmatpush.bf16.msra.mxu0 %v1730
    %2489 = vmatpush.bf16.msra.mxu0 %v1724
    %2490 = vmatpush.bf16.msra.mxu0 %v1718
    %2491 = vmatpush.bf16.msra.mxu0 %v1712
    %2492 = vmatpush.bf16.msra.mxu0 %v1706
    %2493 = vmatmul.bf16.gmra.mxu0 %v389
    %v2494 = vpop.f32.mrf.mxu0
    %v2495 = vadd.f32 %v2482, %v2494
    %v2496 = vpop.f32.mrf.mxu0
    %2497 = vdwg.mxu0
    %2498 = vmatpush.bf16.msra.mxu0 %v1796
    %2499 = vmatpush.bf16.msra.mxu0 %v1790
    %2500 = vmatpush.bf16.msra.mxu0 %v1784
    %2501 = vmatpush.bf16.msra.mxu0 %v1778
    %2502 = vmatpush.bf16.msra.mxu0 %v1772
    %2503 = vmatpush.bf16.msra.mxu0 %v1766
    %2504 = vmatpush.bf16.msra.mxu0 %v1760
    %2505 = vmatpush.bf16.msra.mxu0 %v1754
    %2506 = vmatmul.bf16.gmra.mxu0 %v390
    %v2507 = vpop.f32.mrf.mxu0
    %v2508 = vadd.f32 %v2495, %v2507
    %v2509 = vpop.f32.mrf.mxu0
    %2510 = vdwg.mxu0
    %2511 = vmatpush.bf16.msra.mxu0 %v1844
    %2512 = vmatpush.bf16.msra.mxu0 %v1838
    %2513 = vmatpush.bf16.msra.mxu0 %v1832
    %2514 = vmatpush.bf16.msra.mxu0 %v1826
    %2515 = vmatpush.bf16.msra.mxu0 %v1820
    %2516 = vmatpush.bf16.msra.mxu0 %v1814
    %2517 = vmatpush.bf16.msra.mxu0 %v1808
    %2518 = vmatpush.bf16.msra.mxu0 %v1802
    %2519 = vmatmul.bf16.gmra.mxu0 %v391
    %v2520 = vpop.f32.mrf.mxu0
    %v2521 = vadd.f32 %v2508, %v2520
    %v2522 = vpop.f32.mrf.mxu0
    %2523 = vdwg.mxu0
    %2524 = vmatpush.bf16.msra.mxu0 %v1605
    %2525 = vmatpush.bf16.msra.mxu0 %v1599
    %2526 = vmatpush.bf16.msra.mxu0 %v1593
    %2527 = vmatpush.bf16.msra.mxu0 %v1587
    %2528 = vmatpush.bf16.msra.mxu0 %v1581
    %2529 = vmatpush.bf16.msra.mxu0 %v1575
    %2530 = vmatpush.bf16.msra.mxu0 %v1569
    %2531 = vmatpush.bf16.msra.mxu0 %v1563
    %2532 = vmatmul.bf16.gmra.mxu0 %v386
    %v2533 = vpop.f32.mrf.mxu0
    %v2534 = vadd.f32 %v687, %v2533
    %v2535 = vpop.f32.mrf.mxu0
    %2536 = vdwg.mxu0
    %2537 = vmatpush.bf16.msra.mxu0 %v1653
    %2538 = vmatpush.bf16.msra.mxu0 %v1647
    %2539 = vmatpush.bf16.msra.mxu0 %v1641
    %2540 = vmatpush.bf16.msra.mxu0 %v1635
    %2541 = vmatpush.bf16.msra.mxu0 %v1629
    %2542 = vmatpush.bf16.msra.mxu0 %v1623
    %2543 = vmatpush.bf16.msra.mxu0 %v1617
    %2544 = vmatpush.bf16.msra.mxu0 %v1611
    %2545 = vmatmul.bf16.gmra.mxu0 %v387
    %v2546 = vpop.f32.mrf.mxu0
    %v2547 = vadd.f32 %v2534, %v2546
    %v2548 = vpop.f32.mrf.mxu0
    %2549 = vdwg.mxu0
    %2550 = vmatpush.bf16.msra.mxu0 %v1701
    %2551 = vmatpush.bf16.msra.mxu0 %v1695
    %2552 = vmatpush.bf16.msra.mxu0 %v1689
    %2553 = vmatpush.bf16.msra.mxu0 %v1683
    %2554 = vmatpush.bf16.msra.mxu0 %v1677
    %2555 = vmatpush.bf16.msra.mxu0 %v1671
    %2556 = vmatpush.bf16.msra.mxu0 %v1665
    %2557 = vmatpush.bf16.msra.mxu0 %v1659
    %2558 = vmatmul.bf16.gmra.mxu0 %v388
    %v2559 = vpop.f32.mrf.mxu0
    %v2560 = vadd.f32 %v2547, %v2559
    %v2561 = vpop.f32.mrf.mxu0
    %2562 = vdwg.mxu0
    %2563 = vmatpush.bf16.msra.mxu0 %v1749
    %2564 = vmatpush.bf16.msra.mxu0 %v1743
    %2565 = vmatpush.bf16.msra.mxu0 %v1737
    %2566 = vmatpush.bf16.msra.mxu0 %v1731
    %2567 = vmatpush.bf16.msra.mxu0 %v1725
    %2568 = vmatpush.bf16.msra.mxu0 %v1719
    %2569 = vmatpush.bf16.msra.mxu0 %v1713
    %2570 = vmatpush.bf16.msra.mxu0 %v1707
    %2571 = vmatmul.bf16.gmra.mxu0 %v389
    %v2572 = vpop.f32.mrf.mxu0
    %v2573 = vadd.f32 %v2560, %v2572
    %v2574 = vpop.f32.mrf.mxu0
    %2575 = vdwg.mxu0
    %2576 = vmatpush.bf16.msra.mxu0 %v1797
    %2577 = vmatpush.bf16.msra.mxu0 %v1791
    %2578 = vmatpush.bf16.msra.mxu0 %v1785
    %2579 = vmatpush.bf16.msra.mxu0 %v1779
    %2580 = vmatpush.bf16.msra.mxu0 %v1773
    %2581 = vmatpush.bf16.msra.mxu0 %v1767
    %2582 = vmatpush.bf16.msra.mxu0 %v1761
    %2583 = vmatpush.bf16.msra.mxu0 %v1755
    %2584 = vmatmul.bf16.gmra.mxu0 %v390
    %v2585 = vpop.f32.mrf.mxu0
    %v2586 = vadd.f32 %v2573, %v2585
    %v2587 = vpop.f32.mrf.mxu0
    %2588 = vdwg.mxu0
    %2589 = vmatpush.bf16.msra.mxu0 %v1845
    %2590 = vmatpush.bf16.msra.mxu0 %v1839
    %2591 = vmatpush.bf16.msra.mxu0 %v1833
    %2592 = vmatpush.bf16.msra.mxu0 %v1827
    %2593 = vmatpush.bf16.msra.mxu0 %v1821
    %2594 = vmatpush.bf16.msra.mxu0 %v1815
    %2595 = vmatpush.bf16.msra.mxu0 %v1809
    %2596 = vmatpush.bf16.msra.mxu0 %v1803
    %2597 = vmatmul.bf16.gmra.mxu0 %v391
    %v2598 = vpop.f32.mrf.mxu0
    %v2599 = vadd.f32 %v2586, %v2598
    %v2600 = vpop.f32.mrf.mxu0
    %2601 = vdwg.mxu0
    %v2602 = vmax.f32 %v2209, 0.0
    %v2603 = vmax.f32 %v2287, 0.0
    %v2604 = vmax.f32 %v2365, 0.0
    %v2605 = vmax.f32 %v2443, 0.0
    %v2606 = vmax.f32 %v2521, 0.0
    %v2607 = vmax.f32 %v2599, 0.0
    %v2608 = vpack.c.bf16 %v2602, %v2602
    %v2609 = vpack.c.bf16 %v2603, %v2603
    %v2610 = vpack.c.bf16 %v2604, %v2604
    %v2611 = vpack.c.bf16 %v2605, %v2605
    %v2612 = vpack.c.bf16 %v2606, %v2606
    %v2613 = vpack.c.bf16 %v2607, %v2607
    %v2614 = vld [vmem:[#allocation8] sm:$0xff]
    %v2615 = vld [vmem:[#allocation8 + $0x8] sm:$0xff]
    %v2616 = vld [vmem:[#allocation8 + $0x10] sm:$0xff]
    %v2617 = vld [vmem:[#allocation8 + $0x18] sm:$0xff]
    %v2618 = vld [vmem:[#allocation8 + $0x20] sm:$0xff]
    %v2619 = vld [vmem:[#allocation8 + $0x28] sm:$0xff]
    %v2620 = vld [vmem:[#allocation8 + $0x30] sm:$0xff]
    %v2621 = vld [vmem:[#allocation8 + $0x38] sm:$0xff]
    %v2622 = vld [vmem:[#allocation8 + $0x40] sm:$0xff]
    %v2623 = vld [vmem:[#allocation8 + $0x48] sm:$0xff]
    %v2624 = vld [vmem:[#allocation8 + $0x50] sm:$0xff]
    %v2625 = vld [vmem:[#allocation8 + $0x58] sm:$0xff]
    %v2626 = vld [vmem:[#allocation8 + $0x60] sm:$0xff]
    %v2627 = vld [vmem:[#allocation8 + $0x68] sm:$0xff]
    %v2628 = vld [vmem:[#allocation8 + $0x70] sm:$0xff]
    %v2629 = vld [vmem:[#allocation8 + $0x78] sm:$0xff]
    %v2630 = vld [vmem:[#allocation8 + $0x80] sm:$0xff]
    %v2631 = vld [vmem:[#allocation8 + $0x88] sm:$0xff]
    %v2632 = vld [vmem:[#allocation8 + $0x90] sm:$0xff]
    %v2633 = vld [vmem:[#allocation8 + $0x98] sm:$0xff]
    %v2634 = vld [vmem:[#allocation8 + $0xa0] sm:$0xff]
    %v2635 = vld [vmem:[#allocation8 + $0xa8] sm:$0xff]
    %v2636 = vld [vmem:[#allocation8 + $0xb0] sm:$0xff]
    %v2637 = vld [vmem:[#allocation8 + $0xb8] sm:$0xff]
    %v2638 = vld [vmem:[#allocation8 + $0xc0] sm:$0xff]
    %v2639 = vld [vmem:[#allocation8 + $0xc8] sm:$0xff]
    %v2640 = vld [vmem:[#allocation8 + $0xd0] sm:$0xff]
    %v2641 = vld [vmem:[#allocation8 + $0xd8] sm:$0xff]
    %v2642 = vld [vmem:[#allocation8 + $0xe0] sm:$0xff]
    %v2643 = vld [vmem:[#allocation8 + $0xe8] sm:$0xff]
    %v2644 = vld [vmem:[#allocation8 + $0xf0] sm:$0xff]
    %v2645 = vld [vmem:[#allocation8 + $0xf8] sm:$0xff]
    %v2646 = vld [vmem:[#allocation8 + $0x100] sm:$0xff]
    %v2647 = vld [vmem:[#allocation8 + $0x108] sm:$0xff]
    %v2648 = vld [vmem:[#allocation8 + $0x110] sm:$0xff]
    %v2649 = vld [vmem:[#allocation8 + $0x118] sm:$0xff]
    %v2650 = vld [vmem:[#allocation8 + $0x120] sm:$0xff]
    %v2651 = vld [vmem:[#allocation8 + $0x128] sm:$0xff]
    %v2652 = vld [vmem:[#allocation8 + $0x130] sm:$0xff]
    %v2653 = vld [vmem:[#allocation8 + $0x138] sm:$0xff]
    %v2654 = vld [vmem:[#allocation8 + $0x140] sm:$0xff]
    %v2655 = vld [vmem:[#allocation8 + $0x148] sm:$0xff]
    %v2656 = vld [vmem:[#allocation8 + $0x150] sm:$0xff]
    %v2657 = vld [vmem:[#allocation8 + $0x158] sm:$0xff]
    %v2658 = vld [vmem:[#allocation8 + $0x160] sm:$0xff]
    %v2659 = vld [vmem:[#allocation8 + $0x168] sm:$0xff]
    %v2660 = vld [vmem:[#allocation8 + $0x170] sm:$0xff]
    %v2661 = vld [vmem:[#allocation8 + $0x178] sm:$0xff]
    %v2662 = vld [vmem:[#allocation8 + $0x180] sm:$0xff]
    %v2663 = vld [vmem:[#allocation8 + $0x188] sm:$0xff]
    %v2664 = vld [vmem:[#allocation8 + $0x190] sm:$0xff]
    %v2665 = vld [vmem:[#allocation8 + $0x198] sm:$0xff]
    %v2666 = vld [vmem:[#allocation8 + $0x1a0] sm:$0xff]
    %v2667 = vld [vmem:[#allocation8 + $0x1a8] sm:$0xff]
    %v2668 = vld [vmem:[#allocation8 + $0x1b0] sm:$0xff]
    %v2669 = vld [vmem:[#allocation8 + $0x1b8] sm:$0xff]
    %v2670 = vld [vmem:[#allocation8 + $0x1c0] sm:$0xff]
    %v2671 = vld [vmem:[#allocation8 + $0x1c8] sm:$0xff]
    %v2672 = vld [vmem:[#allocation8 + $0x1d0] sm:$0xff]
    %v2673 = vld [vmem:[#allocation8 + $0x1d8] sm:$0xff]
    %v2674 = vld [vmem:[#allocation8 + $0x1e0] sm:$0xff]
    %v2675 = vld [vmem:[#allocation8 + $0x1e8] sm:$0xff]
    %v2676 = vld [vmem:[#allocation8 + $0x1f0] sm:$0xff]
    %v2677 = vld [vmem:[#allocation8 + $0x1f8] sm:$0xff]
    %v2678 = vld [vmem:[#allocation8 + $0x200] sm:$0xff]
    %v2679 = vld [vmem:[#allocation8 + $0x208] sm:$0xff]
    %v2680 = vld [vmem:[#allocation8 + $0x210] sm:$0xff]
    %v2681 = vld [vmem:[#allocation8 + $0x218] sm:$0xff]
    %v2682 = vld [vmem:[#allocation8 + $0x220] sm:$0xff]
    %v2683 = vld [vmem:[#allocation8 + $0x228] sm:$0xff]
    %v2684 = vld [vmem:[#allocation8 + $0x230] sm:$0xff]
    %v2685 = vld [vmem:[#allocation8 + $0x238] sm:$0xff]
    %v2686 = vld [vmem:[#allocation8 + $0x240] sm:$0xff]
    %v2687 = vld [vmem:[#allocation8 + $0x248] sm:$0xff]
    %v2688 = vld [vmem:[#allocation8 + $0x250] sm:$0xff]
    %v2689 = vld [vmem:[#allocation8 + $0x258] sm:$0xff]
    %v2690 = vld [vmem:[#allocation8 + $0x260] sm:$0xff]
    %v2691 = vld [vmem:[#allocation8 + $0x268] sm:$0xff]
    %v2692 = vld [vmem:[#allocation8 + $0x270] sm:$0xff]
    %v2693 = vld [vmem:[#allocation8 + $0x278] sm:$0xff]
    %v2694 = vld [vmem:[#allocation8 + $0x280] sm:$0xff]
    %v2695 = vld [vmem:[#allocation8 + $0x288] sm:$0xff]
    %v2696 = vld [vmem:[#allocation8 + $0x290] sm:$0xff]
    %v2697 = vld [vmem:[#allocation8 + $0x298] sm:$0xff]
    %v2698 = vld [vmem:[#allocation8 + $0x2a0] sm:$0xff]
    %v2699 = vld [vmem:[#allocation8 + $0x2a8] sm:$0xff]
    %v2700 = vld [vmem:[#allocation8 + $0x2b0] sm:$0xff]
    %v2701 = vld [vmem:[#allocation8 + $0x2b8] sm:$0xff]
    %v2702 = vld [vmem:[#allocation8 + $0x2c0] sm:$0xff]
    %v2703 = vld [vmem:[#allocation8 + $0x2c8] sm:$0xff]
    %v2704 = vld [vmem:[#allocation8 + $0x2d0] sm:$0xff]
    %v2705 = vld [vmem:[#allocation8 + $0x2d8] sm:$0xff]
    %v2706 = vld [vmem:[#allocation8 + $0x2e0] sm:$0xff]
    %v2707 = vld [vmem:[#allocation8 + $0x2e8] sm:$0xff]
    %v2708 = vld [vmem:[#allocation8 + $0x2f0] sm:$0xff]
    %v2709 = vld [vmem:[#allocation8 + $0x2f8] sm:$0xff]
    %v2710 = vld [vmem:[#allocation8 + $0x300] sm:$0xff]
    %v2711 = vld [vmem:[#allocation8 + $0x308] sm:$0xff]
    %v2712 = vld [vmem:[#allocation8 + $0x310] sm:$0xff]
    %v2713 = vld [vmem:[#allocation8 + $0x318] sm:$0xff]
    %v2714 = vld [vmem:[#allocation8 + $0x320] sm:$0xff]
    %v2715 = vld [vmem:[#allocation8 + $0x328] sm:$0xff]
    %v2716 = vld [vmem:[#allocation8 + $0x330] sm:$0xff]
    %v2717 = vld [vmem:[#allocation8 + $0x338] sm:$0xff]
    %v2718 = vld [vmem:[#allocation8 + $0x340] sm:$0xff]
    %v2719 = vld [vmem:[#allocation8 + $0x348] sm:$0xff]
    %v2720 = vld [vmem:[#allocation8 + $0x350] sm:$0xff]
    %v2721 = vld [vmem:[#allocation8 + $0x358] sm:$0xff]
    %v2722 = vld [vmem:[#allocation8 + $0x360] sm:$0xff]
    %v2723 = vld [vmem:[#allocation8 + $0x368] sm:$0xff]
    %v2724 = vld [vmem:[#allocation8 + $0x370] sm:$0xff]
    %v2725 = vld [vmem:[#allocation8 + $0x378] sm:$0xff]
    %v2726 = vld [vmem:[#allocation8 + $0x380] sm:$0xff]
    %v2727 = vld [vmem:[#allocation8 + $0x388] sm:$0xff]
    %v2728 = vld [vmem:[#allocation8 + $0x390] sm:$0xff]
    %v2729 = vld [vmem:[#allocation8 + $0x398] sm:$0xff]
    %v2730 = vld [vmem:[#allocation8 + $0x3a0] sm:$0xff]
    %v2731 = vld [vmem:[#allocation8 + $0x3a8] sm:$0xff]
    %v2732 = vld [vmem:[#allocation8 + $0x3b0] sm:$0xff]
    %v2733 = vld [vmem:[#allocation8 + $0x3b8] sm:$0xff]
    %v2734 = vld [vmem:[#allocation8 + $0x3c0] sm:$0xff]
    %v2735 = vld [vmem:[#allocation8 + $0x3c8] sm:$0xff]
    %v2736 = vld [vmem:[#allocation8 + $0x3d0] sm:$0xff]
    %v2737 = vld [vmem:[#allocation8 + $0x3d8] sm:$0xff]
    %v2738 = vld [vmem:[#allocation8 + $0x3e0] sm:$0xff]
    %v2739 = vld [vmem:[#allocation8 + $0x3e8] sm:$0xff]
    %v2740 = vld [vmem:[#allocation8 + $0x3f0] sm:$0xff]
    %v2741 = vld [vmem:[#allocation8 + $0x3f8] sm:$0xff]
    %v2742 = vld [vmem:[#allocation8 + $0x400] sm:$0xff]
    %v2743 = vld [vmem:[#allocation8 + $0x408] sm:$0xff]
    %v2744 = vld [vmem:[#allocation8 + $0x410] sm:$0xff]
    %v2745 = vld [vmem:[#allocation8 + $0x418] sm:$0xff]
    %v2746 = vld [vmem:[#allocation8 + $0x420] sm:$0xff]
    %v2747 = vld [vmem:[#allocation8 + $0x428] sm:$0xff]
    %v2748 = vld [vmem:[#allocation8 + $0x430] sm:$0xff]
    %v2749 = vld [vmem:[#allocation8 + $0x438] sm:$0xff]
    %v2750 = vld [vmem:[#allocation8 + $0x440] sm:$0xff]
    %v2751 = vld [vmem:[#allocation8 + $0x448] sm:$0xff]
    %v2752 = vld [vmem:[#allocation8 + $0x450] sm:$0xff]
    %v2753 = vld [vmem:[#allocation8 + $0x458] sm:$0xff]
    %v2754 = vld [vmem:[#allocation8 + $0x460] sm:$0xff]
    %v2755 = vld [vmem:[#allocation8 + $0x468] sm:$0xff]
    %v2756 = vld [vmem:[#allocation8 + $0x470] sm:$0xff]
    %v2757 = vld [vmem:[#allocation8 + $0x478] sm:$0xff]
    %v2758 = vld [vmem:[#allocation8 + $0x480] sm:$0xff]
    %v2759 = vld [vmem:[#allocation8 + $0x488] sm:$0xff]
    %v2760 = vld [vmem:[#allocation8 + $0x490] sm:$0xff]
    %v2761 = vld [vmem:[#allocation8 + $0x498] sm:$0xff]
    %v2762 = vld [vmem:[#allocation8 + $0x4a0] sm:$0xff]
    %v2763 = vld [vmem:[#allocation8 + $0x4a8] sm:$0xff]
    %v2764 = vld [vmem:[#allocation8 + $0x4b0] sm:$0xff]
    %v2765 = vld [vmem:[#allocation8 + $0x4b8] sm:$0xff]
    %v2766 = vld [vmem:[#allocation8 + $0x4c0] sm:$0xff]
    %v2767 = vld [vmem:[#allocation8 + $0x4c8] sm:$0xff]
    %v2768 = vld [vmem:[#allocation8 + $0x4d0] sm:$0xff]
    %v2769 = vld [vmem:[#allocation8 + $0x4d8] sm:$0xff]
    %v2770 = vld [vmem:[#allocation8 + $0x4e0] sm:$0xff]
    %v2771 = vld [vmem:[#allocation8 + $0x4e8] sm:$0xff]
    %v2772 = vld [vmem:[#allocation8 + $0x4f0] sm:$0xff]
    %v2773 = vld [vmem:[#allocation8 + $0x4f8] sm:$0xff]
    %v2774 = vld [vmem:[#allocation8 + $0x500] sm:$0xff]
    %v2775 = vld [vmem:[#allocation8 + $0x508] sm:$0xff]
    %v2776 = vld [vmem:[#allocation8 + $0x510] sm:$0xff]
    %v2777 = vld [vmem:[#allocation8 + $0x518] sm:$0xff]
    %v2778 = vld [vmem:[#allocation8 + $0x520] sm:$0xff]
    %v2779 = vld [vmem:[#allocation8 + $0x528] sm:$0xff]
    %v2780 = vld [vmem:[#allocation8 + $0x530] sm:$0xff]
    %v2781 = vld [vmem:[#allocation8 + $0x538] sm:$0xff]
    %v2782 = vld [vmem:[#allocation8 + $0x540] sm:$0xff]
    %v2783 = vld [vmem:[#allocation8 + $0x548] sm:$0xff]
    %v2784 = vld [vmem:[#allocation8 + $0x550] sm:$0xff]
    %v2785 = vld [vmem:[#allocation8 + $0x558] sm:$0xff]
    %v2786 = vld [vmem:[#allocation8 + $0x560] sm:$0xff]
    %v2787 = vld [vmem:[#allocation8 + $0x568] sm:$0xff]
    %v2788 = vld [vmem:[#allocation8 + $0x570] sm:$0xff]
    %v2789 = vld [vmem:[#allocation8 + $0x578] sm:$0xff]
    %v2790 = vld [vmem:[#allocation8 + $0x580] sm:$0xff]
    %v2791 = vld [vmem:[#allocation8 + $0x588] sm:$0xff]
    %v2792 = vld [vmem:[#allocation8 + $0x590] sm:$0xff]
    %v2793 = vld [vmem:[#allocation8 + $0x598] sm:$0xff]
    %v2794 = vld [vmem:[#allocation8 + $0x5a0] sm:$0xff]
    %v2795 = vld [vmem:[#allocation8 + $0x5a8] sm:$0xff]
    %v2796 = vld [vmem:[#allocation8 + $0x5b0] sm:$0xff]
    %v2797 = vld [vmem:[#allocation8 + $0x5b8] sm:$0xff]
    %v2798 = vld [vmem:[#allocation8 + $0x5c0] sm:$0xff]
    %v2799 = vld [vmem:[#allocation8 + $0x5c8] sm:$0xff]
    %v2800 = vld [vmem:[#allocation8 + $0x5d0] sm:$0xff]
    %v2801 = vld [vmem:[#allocation8 + $0x5d8] sm:$0xff]
    %v2802 = vld [vmem:[#allocation8 + $0x5e0] sm:$0xff]
    %v2803 = vld [vmem:[#allocation8 + $0x5e8] sm:$0xff]
    %v2804 = vld [vmem:[#allocation8 + $0x5f0] sm:$0xff]
    %v2805 = vld [vmem:[#allocation8 + $0x5f8] sm:$0xff]
    %v2806 = vld [vmem:[#allocation10] sm:$0xf]
    %v2808 = vperm.slane %v2806, 0
    %v2809 = vperm.slane %v2806, 1
    %v2810 = vperm.slane %v2806, 2
    %v2811 = vperm.slane %v2806, 3
    %v3008 = vunpack.c.l.b16 %v2614
    %v3009 = vunpack.c.h.b16 %v2614
    %v3010 = vunpack.c.l.b16 %v2615
    %v3011 = vunpack.c.h.b16 %v2615
    %v3012 = vunpack.c.l.b16 %v2616
    %v3013 = vunpack.c.h.b16 %v2616
    %v3014 = vunpack.c.l.b16 %v2617
    %v3015 = vunpack.c.h.b16 %v2617
    %v3016 = vunpack.c.l.b16 %v2618
    %v3017 = vunpack.c.h.b16 %v2618
    %v3018 = vunpack.c.l.b16 %v2619
    %v3019 = vunpack.c.h.b16 %v2619
    %v3020 = vunpack.c.l.b16 %v2620
    %v3021 = vunpack.c.h.b16 %v2620
    %v3022 = vunpack.c.l.b16 %v2621
    %v3023 = vunpack.c.h.b16 %v2621
    %v3024 = vunpack.c.l.b16 %v2622
    %v3025 = vunpack.c.h.b16 %v2622
    %v3026 = vunpack.c.l.b16 %v2623
    %v3027 = vunpack.c.h.b16 %v2623
    %v3028 = vunpack.c.l.b16 %v2624
    %v3029 = vunpack.c.h.b16 %v2624
    %v3030 = vunpack.c.l.b16 %v2625
    %v3031 = vunpack.c.h.b16 %v2625
    %v3032 = vunpack.c.l.b16 %v2626
    %v3033 = vunpack.c.h.b16 %v2626
    %v3034 = vunpack.c.l.b16 %v2627
    %v3035 = vunpack.c.h.b16 %v2627
    %v3036 = vunpack.c.l.b16 %v2628
    %v3037 = vunpack.c.h.b16 %v2628
    %v3038 = vunpack.c.l.b16 %v2629
    %v3039 = vunpack.c.h.b16 %v2629
    %v3040 = vunpack.c.l.b16 %v2630
    %v3041 = vunpack.c.h.b16 %v2630
    %v3042 = vunpack.c.l.b16 %v2631
    %v3043 = vunpack.c.h.b16 %v2631
    %v3044 = vunpack.c.l.b16 %v2632
    %v3045 = vunpack.c.h.b16 %v2632
    %v3046 = vunpack.c.l.b16 %v2633
    %v3047 = vunpack.c.h.b16 %v2633
    %v3048 = vunpack.c.l.b16 %v2634
    %v3049 = vunpack.c.h.b16 %v2634
    %v3050 = vunpack.c.l.b16 %v2635
    %v3051 = vunpack.c.h.b16 %v2635
    %v3052 = vunpack.c.l.b16 %v2636
    %v3053 = vunpack.c.h.b16 %v2636
    %v3054 = vunpack.c.l.b16 %v2637
    %v3055 = vunpack.c.h.b16 %v2637
    %v3056 = vunpack.c.l.b16 %v2638
    %v3057 = vunpack.c.h.b16 %v2638
    %v3058 = vunpack.c.l.b16 %v2639
    %v3059 = vunpack.c.h.b16 %v2639
    %v3060 = vunpack.c.l.b16 %v2640
    %v3061 = vunpack.c.h.b16 %v2640
    %v3062 = vunpack.c.l.b16 %v2641
    %v3063 = vunpack.c.h.b16 %v2641
    %v3064 = vunpack.c.l.b16 %v2642
    %v3065 = vunpack.c.h.b16 %v2642
    %v3066 = vunpack.c.l.b16 %v2643
    %v3067 = vunpack.c.h.b16 %v2643
    %v3068 = vunpack.c.l.b16 %v2644
    %v3069 = vunpack.c.h.b16 %v2644
    %v3070 = vunpack.c.l.b16 %v2645
    %v3071 = vunpack.c.h.b16 %v2645
    %v3072 = vunpack.c.l.b16 %v2646
    %v3073 = vunpack.c.h.b16 %v2646
    %v3074 = vunpack.c.l.b16 %v2647
    %v3075 = vunpack.c.h.b16 %v2647
    %v3076 = vunpack.c.l.b16 %v2648
    %v3077 = vunpack.c.h.b16 %v2648
    %v3078 = vunpack.c.l.b16 %v2649
    %v3079 = vunpack.c.h.b16 %v2649
    %v3080 = vunpack.c.l.b16 %v2650
    %v3081 = vunpack.c.h.b16 %v2650
    %v3082 = vunpack.c.l.b16 %v2651
    %v3083 = vunpack.c.h.b16 %v2651
    %v3084 = vunpack.c.l.b16 %v2652
    %v3085 = vunpack.c.h.b16 %v2652
    %v3086 = vunpack.c.l.b16 %v2653
    %v3087 = vunpack.c.h.b16 %v2653
    %v3088 = vunpack.c.l.b16 %v2654
    %v3089 = vunpack.c.h.b16 %v2654
    %v3090 = vunpack.c.l.b16 %v2655
    %v3091 = vunpack.c.h.b16 %v2655
    %v3092 = vunpack.c.l.b16 %v2656
    %v3093 = vunpack.c.h.b16 %v2656
    %v3094 = vunpack.c.l.b16 %v2657
    %v3095 = vunpack.c.h.b16 %v2657
    %v3096 = vunpack.c.l.b16 %v2658
    %v3097 = vunpack.c.h.b16 %v2658
    %v3098 = vunpack.c.l.b16 %v2659
    %v3099 = vunpack.c.h.b16 %v2659
    %v3100 = vunpack.c.l.b16 %v2660
    %v3101 = vunpack.c.h.b16 %v2660
    %v3102 = vunpack.c.l.b16 %v2661
    %v3103 = vunpack.c.h.b16 %v2661
    %v3104 = vunpack.c.l.b16 %v2662
    %v3105 = vunpack.c.h.b16 %v2662
    %v3106 = vunpack.c.l.b16 %v2663
    %v3107 = vunpack.c.h.b16 %v2663
    %v3108 = vunpack.c.l.b16 %v2664
    %v3109 = vunpack.c.h.b16 %v2664
    %v3110 = vunpack.c.l.b16 %v2665
    %v3111 = vunpack.c.h.b16 %v2665
    %v3112 = vunpack.c.l.b16 %v2666
    %v3113 = vunpack.c.h.b16 %v2666
    %v3114 = vunpack.c.l.b16 %v2667
    %v3115 = vunpack.c.h.b16 %v2667
    %v3116 = vunpack.c.l.b16 %v2668
    %v3117 = vunpack.c.h.b16 %v2668
    %v3118 = vunpack.c.l.b16 %v2669
    %v3119 = vunpack.c.h.b16 %v2669
    %v3120 = vunpack.c.l.b16 %v2670
    %v3121 = vunpack.c.h.b16 %v2670
    %v3122 = vunpack.c.l.b16 %v2671
    %v3123 = vunpack.c.h.b16 %v2671
    %v3124 = vunpack.c.l.b16 %v2672
    %v3125 = vunpack.c.h.b16 %v2672
    %v3126 = vunpack.c.l.b16 %v2673
    %v3127 = vunpack.c.h.b16 %v2673
    %v3128 = vunpack.c.l.b16 %v2674
    %v3129 = vunpack.c.h.b16 %v2674
    %v3130 = vunpack.c.l.b16 %v2675
    %v3131 = vunpack.c.h.b16 %v2675
    %v3132 = vunpack.c.l.b16 %v2676
    %v3133 = vunpack.c.h.b16 %v2676
    %v3134 = vunpack.c.l.b16 %v2677
    %v3135 = vunpack.c.h.b16 %v2677
    %v3136 = vunpack.c.l.b16 %v2678
    %v3137 = vunpack.c.h.b16 %v2678
    %v3138 = vunpack.c.l.b16 %v2679
    %v3139 = vunpack.c.h.b16 %v2679
    %v3140 = vunpack.c.l.b16 %v2680
    %v3141 = vunpack.c.h.b16 %v2680
    %v3142 = vunpack.c.l.b16 %v2681
    %v3143 = vunpack.c.h.b16 %v2681
    %v3144 = vunpack.c.l.b16 %v2682
    %v3145 = vunpack.c.h.b16 %v2682
    %v3146 = vunpack.c.l.b16 %v2683
    %v3147 = vunpack.c.h.b16 %v2683
    %v3148 = vunpack.c.l.b16 %v2684
    %v3149 = vunpack.c.h.b16 %v2684
    %v3150 = vunpack.c.l.b16 %v2685
    %v3151 = vunpack.c.h.b16 %v2685
    %v3152 = vunpack.c.l.b16 %v2686
    %v3153 = vunpack.c.h.b16 %v2686
    %v3154 = vunpack.c.l.b16 %v2687
    %v3155 = vunpack.c.h.b16 %v2687
    %v3156 = vunpack.c.l.b16 %v2688
    %v3157 = vunpack.c.h.b16 %v2688
    %v3158 = vunpack.c.l.b16 %v2689
    %v3159 = vunpack.c.h.b16 %v2689
    %v3160 = vunpack.c.l.b16 %v2690
    %v3161 = vunpack.c.h.b16 %v2690
    %v3162 = vunpack.c.l.b16 %v2691
    %v3163 = vunpack.c.h.b16 %v2691
    %v3164 = vunpack.c.l.b16 %v2692
    %v3165 = vunpack.c.h.b16 %v2692
    %v3166 = vunpack.c.l.b16 %v2693
    %v3167 = vunpack.c.h.b16 %v2693
    %v3168 = vunpack.c.l.b16 %v2694
    %v3169 = vunpack.c.h.b16 %v2694
    %v3170 = vunpack.c.l.b16 %v2695
    %v3171 = vunpack.c.h.b16 %v2695
    %v3172 = vunpack.c.l.b16 %v2696
    %v3173 = vunpack.c.h.b16 %v2696
    %v3174 = vunpack.c.l.b16 %v2697
    %v3175 = vunpack.c.h.b16 %v2697
    %v3176 = vunpack.c.l.b16 %v2698
    %v3177 = vunpack.c.h.b16 %v2698
    %v3178 = vunpack.c.l.b16 %v2699
    %v3179 = vunpack.c.h.b16 %v2699
    %v3180 = vunpack.c.l.b16 %v2700
    %v3181 = vunpack.c.h.b16 %v2700
    %v3182 = vunpack.c.l.b16 %v2701
    %v3183 = vunpack.c.h.b16 %v2701
    %v3184 = vunpack.c.l.b16 %v2702
    %v3185 = vunpack.c.h.b16 %v2702
    %v3186 = vunpack.c.l.b16 %v2703
    %v3187 = vunpack.c.h.b16 %v2703
    %v3188 = vunpack.c.l.b16 %v2704
    %v3189 = vunpack.c.h.b16 %v2704
    %v3190 = vunpack.c.l.b16 %v2705
    %v3191 = vunpack.c.h.b16 %v2705
    %v3192 = vunpack.c.l.b16 %v2706
    %v3193 = vunpack.c.h.b16 %v2706
    %v3194 = vunpack.c.l.b16 %v2707
    %v3195 = vunpack.c.h.b16 %v2707
    %v3196 = vunpack.c.l.b16 %v2708
    %v3197 = vunpack.c.h.b16 %v2708
    %v3198 = vunpack.c.l.b16 %v2709
    %v3199 = vunpack.c.h.b16 %v2709
    %v3200 = vunpack.c.l.b16 %v2710
    %v3201 = vunpack.c.h.b16 %v2710
    %v3202 = vunpack.c.l.b16 %v2711
    %v3203 = vunpack.c.h.b16 %v2711
    %v3204 = vunpack.c.l.b16 %v2712
    %v3205 = vunpack.c.h.b16 %v2712
    %v3206 = vunpack.c.l.b16 %v2713
    %v3207 = vunpack.c.h.b16 %v2713
    %v3208 = vunpack.c.l.b16 %v2714
    %v3209 = vunpack.c.h.b16 %v2714
    %v3210 = vunpack.c.l.b16 %v2715
    %v3211 = vunpack.c.h.b16 %v2715
    %v3212 = vunpack.c.l.b16 %v2716
    %v3213 = vunpack.c.h.b16 %v2716
    %v3214 = vunpack.c.l.b16 %v2717
    %v3215 = vunpack.c.h.b16 %v2717
    %v3216 = vunpack.c.l.b16 %v2718
    %v3217 = vunpack.c.h.b16 %v2718
    %v3218 = vunpack.c.l.b16 %v2719
    %v3219 = vunpack.c.h.b16 %v2719
    %v3220 = vunpack.c.l.b16 %v2720
    %v3221 = vunpack.c.h.b16 %v2720
    %v3222 = vunpack.c.l.b16 %v2721
    %v3223 = vunpack.c.h.b16 %v2721
    %v3224 = vunpack.c.l.b16 %v2722
    %v3225 = vunpack.c.h.b16 %v2722
    %v3226 = vunpack.c.l.b16 %v2723
    %v3227 = vunpack.c.h.b16 %v2723
    %v3228 = vunpack.c.l.b16 %v2724
    %v3229 = vunpack.c.h.b16 %v2724
    %v3230 = vunpack.c.l.b16 %v2725
    %v3231 = vunpack.c.h.b16 %v2725
    %v3232 = vunpack.c.l.b16 %v2726
    %v3233 = vunpack.c.h.b16 %v2726
    %v3234 = vunpack.c.l.b16 %v2727
    %v3235 = vunpack.c.h.b16 %v2727
    %v3236 = vunpack.c.l.b16 %v2728
    %v3237 = vunpack.c.h.b16 %v2728
    %v3238 = vunpack.c.l.b16 %v2729
    %v3239 = vunpack.c.h.b16 %v2729
    %v3240 = vunpack.c.l.b16 %v2730
    %v3241 = vunpack.c.h.b16 %v2730
    %v3242 = vunpack.c.l.b16 %v2731
    %v3243 = vunpack.c.h.b16 %v2731
    %v3244 = vunpack.c.l.b16 %v2732
    %v3245 = vunpack.c.h.b16 %v2732
    %v3246 = vunpack.c.l.b16 %v2733
    %v3247 = vunpack.c.h.b16 %v2733
    %v3248 = vunpack.c.l.b16 %v2734
    %v3249 = vunpack.c.h.b16 %v2734
    %v3250 = vunpack.c.l.b16 %v2735
    %v3251 = vunpack.c.h.b16 %v2735
    %v3252 = vunpack.c.l.b16 %v2736
    %v3253 = vunpack.c.h.b16 %v2736
    %v3254 = vunpack.c.l.b16 %v2737
    %v3255 = vunpack.c.h.b16 %v2737
    %v3256 = vunpack.c.l.b16 %v2738
    %v3257 = vunpack.c.h.b16 %v2738
    %v3258 = vunpack.c.l.b16 %v2739
    %v3259 = vunpack.c.h.b16 %v2739
    %v3260 = vunpack.c.l.b16 %v2740
    %v3261 = vunpack.c.h.b16 %v2740
    %v3262 = vunpack.c.l.b16 %v2741
    %v3263 = vunpack.c.h.b16 %v2741
    %v3264 = vunpack.c.l.b16 %v2742
    %v3265 = vunpack.c.h.b16 %v2742
    %v3266 = vunpack.c.l.b16 %v2743
    %v3267 = vunpack.c.h.b16 %v2743
    %v3268 = vunpack.c.l.b16 %v2744
    %v3269 = vunpack.c.h.b16 %v2744
    %v3270 = vunpack.c.l.b16 %v2745
    %v3271 = vunpack.c.h.b16 %v2745
    %v3272 = vunpack.c.l.b16 %v2746
    %v3273 = vunpack.c.h.b16 %v2746
    %v3274 = vunpack.c.l.b16 %v2747
    %v3275 = vunpack.c.h.b16 %v2747
    %v3276 = vunpack.c.l.b16 %v2748
    %v3277 = vunpack.c.h.b16 %v2748
    %v3278 = vunpack.c.l.b16 %v2749
    %v3279 = vunpack.c.h.b16 %v2749
    %v3280 = vunpack.c.l.b16 %v2750
    %v3281 = vunpack.c.h.b16 %v2750
    %v3282 = vunpack.c.l.b16 %v2751
    %v3283 = vunpack.c.h.b16 %v2751
    %v3284 = vunpack.c.l.b16 %v2752
    %v3285 = vunpack.c.h.b16 %v2752
    %v3286 = vunpack.c.l.b16 %v2753
    %v3287 = vunpack.c.h.b16 %v2753
    %v3288 = vunpack.c.l.b16 %v2754
    %v3289 = vunpack.c.h.b16 %v2754
    %v3290 = vunpack.c.l.b16 %v2755
    %v3291 = vunpack.c.h.b16 %v2755
    %v3292 = vunpack.c.l.b16 %v2756
    %v3293 = vunpack.c.h.b16 %v2756
    %v3294 = vunpack.c.l.b16 %v2757
    %v3295 = vunpack.c.h.b16 %v2757
    %v3296 = vunpack.c.l.b16 %v2758
    %v3297 = vunpack.c.h.b16 %v2758
    %v3298 = vunpack.c.l.b16 %v2759
    %v3299 = vunpack.c.h.b16 %v2759
    %v3300 = vunpack.c.l.b16 %v2760
    %v3301 = vunpack.c.h.b16 %v2760
    %v3302 = vunpack.c.l.b16 %v2761
    %v3303 = vunpack.c.h.b16 %v2761
    %v3304 = vunpack.c.l.b16 %v2762
    %v3305 = vunpack.c.h.b16 %v2762
    %v3306 = vunpack.c.l.b16 %v2763
    %v3307 = vunpack.c.h.b16 %v2763
    %v3308 = vunpack.c.l.b16 %v2764
    %v3309 = vunpack.c.h.b16 %v2764
    %v3310 = vunpack.c.l.b16 %v2765
    %v3311 = vunpack.c.h.b16 %v2765
    %v3312 = vunpack.c.l.b16 %v2766
    %v3313 = vunpack.c.h.b16 %v2766
    %v3314 = vunpack.c.l.b16 %v2767
    %v3315 = vunpack.c.h.b16 %v2767
    %v3316 = vunpack.c.l.b16 %v2768
    %v3317 = vunpack.c.h.b16 %v2768
    %v3318 = vunpack.c.l.b16 %v2769
    %v3319 = vunpack.c.h.b16 %v2769
    %v3320 = vunpack.c.l.b16 %v2770
    %v3321 = vunpack.c.h.b16 %v2770
    %v3322 = vunpack.c.l.b16 %v2771
    %v3323 = vunpack.c.h.b16 %v2771
    %v3324 = vunpack.c.l.b16 %v2772
    %v3325 = vunpack.c.h.b16 %v2772
    %v3326 = vunpack.c.l.b16 %v2773
    %v3327 = vunpack.c.h.b16 %v2773
    %v3328 = vunpack.c.l.b16 %v2774
    %v3329 = vunpack.c.h.b16 %v2774
    %v3330 = vunpack.c.l.b16 %v2775
    %v3331 = vunpack.c.h.b16 %v2775
    %v3332 = vunpack.c.l.b16 %v2776
    %v3333 = vunpack.c.h.b16 %v2776
    %v3334 = vunpack.c.l.b16 %v2777
    %v3335 = vunpack.c.h.b16 %v2777
    %v3336 = vunpack.c.l.b16 %v2778
    %v3337 = vunpack.c.h.b16 %v2778
    %v3338 = vunpack.c.l.b16 %v2779
    %v3339 = vunpack.c.h.b16 %v2779
    %v3340 = vunpack.c.l.b16 %v2780
    %v3341 = vunpack.c.h.b16 %v2780
    %v3342 = vunpack.c.l.b16 %v2781
    %v3343 = vunpack.c.h.b16 %v2781
    %v3344 = vunpack.c.l.b16 %v2782
    %v3345 = vunpack.c.h.b16 %v2782
    %v3346 = vunpack.c.l.b16 %v2783
    %v3347 = vunpack.c.h.b16 %v2783
    %v3348 = vunpack.c.l.b16 %v2784
    %v3349 = vunpack.c.h.b16 %v2784
    %v3350 = vunpack.c.l.b16 %v2785
    %v3351 = vunpack.c.h.b16 %v2785
    %v3352 = vunpack.c.l.b16 %v2786
    %v3353 = vunpack.c.h.b16 %v2786
    %v3354 = vunpack.c.l.b16 %v2787
    %v3355 = vunpack.c.h.b16 %v2787
    %v3356 = vunpack.c.l.b16 %v2788
    %v3357 = vunpack.c.h.b16 %v2788
    %v3358 = vunpack.c.l.b16 %v2789
    %v3359 = vunpack.c.h.b16 %v2789
    %v3360 = vunpack.c.l.b16 %v2790
    %v3361 = vunpack.c.h.b16 %v2790
    %v3362 = vunpack.c.l.b16 %v2791
    %v3363 = vunpack.c.h.b16 %v2791
    %v3364 = vunpack.c.l.b16 %v2792
    %v3365 = vunpack.c.h.b16 %v2792
    %v3366 = vunpack.c.l.b16 %v2793
    %v3367 = vunpack.c.h.b16 %v2793
    %v3368 = vunpack.c.l.b16 %v2794
    %v3369 = vunpack.c.h.b16 %v2794
    %v3370 = vunpack.c.l.b16 %v2795
    %v3371 = vunpack.c.h.b16 %v2795
    %v3372 = vunpack.c.l.b16 %v2796
    %v3373 = vunpack.c.h.b16 %v2796
    %v3374 = vunpack.c.l.b16 %v2797
    %v3375 = vunpack.c.h.b16 %v2797
    %v3376 = vunpack.c.l.b16 %v2798
    %v3377 = vunpack.c.h.b16 %v2798
    %v3378 = vunpack.c.l.b16 %v2799
    %v3379 = vunpack.c.h.b16 %v2799
    %v3380 = vunpack.c.l.b16 %v2800
    %v3381 = vunpack.c.h.b16 %v2800
    %v3382 = vunpack.c.l.b16 %v2801
    %v3383 = vunpack.c.h.b16 %v2801
    %v3384 = vunpack.c.l.b16 %v2802
    %v3385 = vunpack.c.h.b16 %v2802
    %v3386 = vunpack.c.l.b16 %v2803
    %v3387 = vunpack.c.h.b16 %v2803
    %v3388 = vunpack.c.l.b16 %v2804
    %v3389 = vunpack.c.h.b16 %v2804
    %v3390 = vunpack.c.l.b16 %v2805
    %v3391 = vunpack.c.h.b16 %v2805
    %v3392 = vpack.c.b16 %v3012, %v3008
    %v3393 = vpack.c.b16 %v3013, %v3009
    %v3394 = vpack.c.b16 %v3014, %v3010
    %v3395 = vpack.c.b16 %v3015, %v3011
    %v3396 = vpack.c.b16 %v3020, %v3016
    %v3397 = vpack.c.b16 %v3021, %v3017
    %v3398 = vpack.c.b16 %v3022, %v3018
    %v3399 = vpack.c.b16 %v3023, %v3019
    %v3400 = vpack.c.b16 %v3028, %v3024
    %v3401 = vpack.c.b16 %v3029, %v3025
    %v3402 = vpack.c.b16 %v3030, %v3026
    %v3403 = vpack.c.b16 %v3031, %v3027
    %v3404 = vpack.c.b16 %v3036, %v3032
    %v3405 = vpack.c.b16 %v3037, %v3033
    %v3406 = vpack.c.b16 %v3038, %v3034
    %v3407 = vpack.c.b16 %v3039, %v3035
    %v3408 = vpack.c.b16 %v3044, %v3040
    %v3409 = vpack.c.b16 %v3045, %v3041
    %v3410 = vpack.c.b16 %v3046, %v3042
    %v3411 = vpack.c.b16 %v3047, %v3043
    %v3412 = vpack.c.b16 %v3052, %v3048
    %v3413 = vpack.c.b16 %v3053, %v3049
    %v3414 = vpack.c.b16 %v3054, %v3050
    %v3415 = vpack.c.b16 %v3055, %v3051
    %v3416 = vpack.c.b16 %v3060, %v3056
    %v3417 = vpack.c.b16 %v3061, %v3057
    %v3418 = vpack.c.b16 %v3062, %v3058
    %v3419 = vpack.c.b16 %v3063, %v3059
    %v3420 = vpack.c.b16 %v3068, %v3064
    %v3421 = vpack.c.b16 %v3069, %v3065
    %v3422 = vpack.c.b16 %v3070, %v3066
    %v3423 = vpack.c.b16 %v3071, %v3067
    %v3424 = vpack.c.b16 %v3076, %v3072
    %v3425 = vpack.c.b16 %v3077, %v3073
    %v3426 = vpack.c.b16 %v3078, %v3074
    %v3427 = vpack.c.b16 %v3079, %v3075
    %v3428 = vpack.c.b16 %v3084, %v3080
    %v3429 = vpack.c.b16 %v3085, %v3081
    %v3430 = vpack.c.b16 %v3086, %v3082
    %v3431 = vpack.c.b16 %v3087, %v3083
    %v3432 = vpack.c.b16 %v3092, %v3088
    %v3433 = vpack.c.b16 %v3093, %v3089
    %v3434 = vpack.c.b16 %v3094, %v3090
    %v3435 = vpack.c.b16 %v3095, %v3091
    %v3436 = vpack.c.b16 %v3100, %v3096
    %v3437 = vpack.c.b16 %v3101, %v3097
    %v3438 = vpack.c.b16 %v3102, %v3098
    %v3439 = vpack.c.b16 %v3103, %v3099
    %v3440 = vpack.c.b16 %v3108, %v3104
    %v3441 = vpack.c.b16 %v3109, %v3105
    %v3442 = vpack.c.b16 %v3110, %v3106
    %v3443 = vpack.c.b16 %v3111, %v3107
    %v3444 = vpack.c.b16 %v3116, %v3112
    %v3445 = vpack.c.b16 %v3117, %v3113
    %v3446 = vpack.c.b16 %v3118, %v3114
    %v3447 = vpack.c.b16 %v3119, %v3115
    %v3448 = vpack.c.b16 %v3124, %v3120
    %v3449 = vpack.c.b16 %v3125, %v3121
    %v3450 = vpack.c.b16 %v3126, %v3122
    %v3451 = vpack.c.b16 %v3127, %v3123
    %v3452 = vpack.c.b16 %v3132, %v3128
    %v3453 = vpack.c.b16 %v3133, %v3129
    %v3454 = vpack.c.b16 %v3134, %v3130
    %v3455 = vpack.c.b16 %v3135, %v3131
    %v3456 = vpack.c.b16 %v3140, %v3136
    %v3457 = vpack.c.b16 %v3141, %v3137
    %v3458 = vpack.c.b16 %v3142, %v3138
    %v3459 = vpack.c.b16 %v3143, %v3139
    %v3460 = vpack.c.b16 %v3148, %v3144
    %v3461 = vpack.c.b16 %v3149, %v3145
    %v3462 = vpack.c.b16 %v3150, %v3146
    %v3463 = vpack.c.b16 %v3151, %v3147
    %v3464 = vpack.c.b16 %v3156, %v3152
    %v3465 = vpack.c.b16 %v3157, %v3153
    %v3466 = vpack.c.b16 %v3158, %v3154
    %v3467 = vpack.c.b16 %v3159, %v3155
    %v3468 = vpack.c.b16 %v3164, %v3160
    %v3469 = vpack.c.b16 %v3165, %v3161
    %v3470 = vpack.c.b16 %v3166, %v3162
    %v3471 = vpack.c.b16 %v3167, %v3163
    %v3472 = vpack.c.b16 %v3172, %v3168
    %v3473 = vpack.c.b16 %v3173, %v3169
    %v3474 = vpack.c.b16 %v3174, %v3170
    %v3475 = vpack.c.b16 %v3175, %v3171
    %v3476 = vpack.c.b16 %v3180, %v3176
    %v3477 = vpack.c.b16 %v3181, %v3177
    %v3478 = vpack.c.b16 %v3182, %v3178
    %v3479 = vpack.c.b16 %v3183, %v3179
    %v3480 = vpack.c.b16 %v3188, %v3184
    %v3481 = vpack.c.b16 %v3189, %v3185
    %v3482 = vpack.c.b16 %v3190, %v3186
    %v3483 = vpack.c.b16 %v3191, %v3187
    %v3484 = vpack.c.b16 %v3196, %v3192
    %v3485 = vpack.c.b16 %v3197, %v3193
    %v3486 = vpack.c.b16 %v3198, %v3194
    %v3487 = vpack.c.b16 %v3199, %v3195
    %v3488 = vpack.c.b16 %v3204, %v3200
    %v3489 = vpack.c.b16 %v3205, %v3201
    %v3490 = vpack.c.b16 %v3206, %v3202
    %v3491 = vpack.c.b16 %v3207, %v3203
    %v3492 = vpack.c.b16 %v3212, %v3208
    %v3493 = vpack.c.b16 %v3213, %v3209
    %v3494 = vpack.c.b16 %v3214, %v3210
    %v3495 = vpack.c.b16 %v3215, %v3211
    %v3496 = vpack.c.b16 %v3220, %v3216
    %v3497 = vpack.c.b16 %v3221, %v3217
    %v3498 = vpack.c.b16 %v3222, %v3218
    %v3499 = vpack.c.b16 %v3223, %v3219
    %v3500 = vpack.c.b16 %v3228, %v3224
    %v3501 = vpack.c.b16 %v3229, %v3225
    %v3502 = vpack.c.b16 %v3230, %v3226
    %v3503 = vpack.c.b16 %v3231, %v3227
    %v3504 = vpack.c.b16 %v3236, %v3232
    %v3505 = vpack.c.b16 %v3237, %v3233
    %v3506 = vpack.c.b16 %v3238, %v3234
    %v3507 = vpack.c.b16 %v3239, %v3235
    %v3508 = vpack.c.b16 %v3244, %v3240
    %v3509 = vpack.c.b16 %v3245, %v3241
    %v3510 = vpack.c.b16 %v3246, %v3242
    %v3511 = vpack.c.b16 %v3247, %v3243
    %v3512 = vpack.c.b16 %v3252, %v3248
    %v3513 = vpack.c.b16 %v3253, %v3249
    %v3514 = vpack.c.b16 %v3254, %v3250
    %v3515 = vpack.c.b16 %v3255, %v3251
    %v3516 = vpack.c.b16 %v3260, %v3256
    %v3517 = vpack.c.b16 %v3261, %v3257
    %v3518 = vpack.c.b16 %v3262, %v3258
    %v3519 = vpack.c.b16 %v3263, %v3259
    %v3520 = vpack.c.b16 %v3268, %v3264
    %v3521 = vpack.c.b16 %v3269, %v3265
    %v3522 = vpack.c.b16 %v3270, %v3266
    %v3523 = vpack.c.b16 %v3271, %v3267
    %v3524 = vpack.c.b16 %v3276, %v3272
    %v3525 = vpack.c.b16 %v3277, %v3273
    %v3526 = vpack.c.b16 %v3278, %v3274
    %v3527 = vpack.c.b16 %v3279, %v3275
    %v3528 = vpack.c.b16 %v3284, %v3280
    %v3529 = vpack.c.b16 %v3285, %v3281
    %v3530 = vpack.c.b16 %v3286, %v3282
    %v3531 = vpack.c.b16 %v3287, %v3283
    %v3532 = vpack.c.b16 %v3292, %v3288
    %v3533 = vpack.c.b16 %v3293, %v3289
    %v3534 = vpack.c.b16 %v3294, %v3290
    %v3535 = vpack.c.b16 %v3295, %v3291
    %v3536 = vpack.c.b16 %v3300, %v3296
    %v3537 = vpack.c.b16 %v3301, %v3297
    %v3538 = vpack.c.b16 %v3302, %v3298
    %v3539 = vpack.c.b16 %v3303, %v3299
    %v3540 = vpack.c.b16 %v3308, %v3304
    %v3541 = vpack.c.b16 %v3309, %v3305
    %v3542 = vpack.c.b16 %v3310, %v3306
    %v3543 = vpack.c.b16 %v3311, %v3307
    %v3544 = vpack.c.b16 %v3316, %v3312
    %v3545 = vpack.c.b16 %v3317, %v3313
    %v3546 = vpack.c.b16 %v3318, %v3314
    %v3547 = vpack.c.b16 %v3319, %v3315
    %v3548 = vpack.c.b16 %v3324, %v3320
    %v3549 = vpack.c.b16 %v3325, %v3321
    %v3550 = vpack.c.b16 %v3326, %v3322
    %v3551 = vpack.c.b16 %v3327, %v3323
    %v3552 = vpack.c.b16 %v3332, %v3328
    %v3553 = vpack.c.b16 %v3333, %v3329
    %v3554 = vpack.c.b16 %v3334, %v3330
    %v3555 = vpack.c.b16 %v3335, %v3331
    %v3556 = vpack.c.b16 %v3340, %v3336
    %v3557 = vpack.c.b16 %v3341, %v3337
    %v3558 = vpack.c.b16 %v3342, %v3338
    %v3559 = vpack.c.b16 %v3343, %v3339
    %v3560 = vpack.c.b16 %v3348, %v3344
    %v3561 = vpack.c.b16 %v3349, %v3345
    %v3562 = vpack.c.b16 %v3350, %v3346
    %v3563 = vpack.c.b16 %v3351, %v3347
    %v3564 = vpack.c.b16 %v3356, %v3352
    %v3565 = vpack.c.b16 %v3357, %v3353
    %v3566 = vpack.c.b16 %v3358, %v3354
    %v3567 = vpack.c.b16 %v3359, %v3355
    %v3568 = vpack.c.b16 %v3364, %v3360
    %v3569 = vpack.c.b16 %v3365, %v3361
    %v3570 = vpack.c.b16 %v3366, %v3362
    %v3571 = vpack.c.b16 %v3367, %v3363
    %v3572 = vpack.c.b16 %v3372, %v3368
    %v3573 = vpack.c.b16 %v3373, %v3369
    %v3574 = vpack.c.b16 %v3374, %v3370
    %v3575 = vpack.c.b16 %v3375, %v3371
    %v3576 = vpack.c.b16 %v3380, %v3376
    %v3577 = vpack.c.b16 %v3381, %v3377
    %v3578 = vpack.c.b16 %v3382, %v3378
    %v3579 = vpack.c.b16 %v3383, %v3379
    %v3580 = vpack.c.b16 %v3388, %v3384
    %v3581 = vpack.c.b16 %v3389, %v3385
    %v3582 = vpack.c.b16 %v3390, %v3386
    %v3583 = vpack.c.b16 %v3391, %v3387
    %3776 = vmatpush.bf16.msra.mxu0 %v3420
    %3777 = vmatpush.bf16.msra.mxu0 %v3416
    %3778 = vmatpush.bf16.msra.mxu0 %v3412
    %3779 = vmatpush.bf16.msra.mxu0 %v3408
    %3780 = vmatpush.bf16.msra.mxu0 %v3404
    %3781 = vmatpush.bf16.msra.mxu0 %v3400
    %3782 = vmatpush.bf16.msra.mxu0 %v3396
    %3783 = vmatpush.bf16.msra.mxu0 %v3392
    %3784 = vmatmul.bf16.gmra.mxu0 %v2608
    %v3785 = vpop.f32.mrf.mxu0
    %v3786 = vadd.f32 %v2808, %v3785
    %v3787 = vpop.f32.mrf.mxu0
    %3788 = vdwg.mxu0
    %3789 = vmatpush.bf16.msra.mxu0 %v3452
    %3790 = vmatpush.bf16.msra.mxu0 %v3448
    %3791 = vmatpush.bf16.msra.mxu0 %v3444
    %3792 = vmatpush.bf16.msra.mxu0 %v3440
    %3793 = vmatpush.bf16.msra.mxu0 %v3436
    %3794 = vmatpush.bf16.msra.mxu0 %v3432
    %3795 = vmatpush.bf16.msra.mxu0 %v3428
    %3796 = vmatpush.bf16.msra.mxu0 %v3424
    %3797 = vmatmul.bf16.gmra.mxu0 %v2609
    %v3798 = vpop.f32.mrf.mxu0
    %v3799 = vadd.f32 %v3786, %v3798
    %v3800 = vpop.f32.mrf.mxu0
    %3801 = vdwg.mxu0
    %3802 = vmatpush.bf16.msra.mxu0 %v3484
    %3803 = vmatpush.bf16.msra.mxu0 %v3480
    %3804 = vmatpush.bf16.msra.mxu0 %v3476
    %3805 = vmatpush.bf16.msra.mxu0 %v3472
    %3806 = vmatpush.bf16.msra.mxu0 %v3468
    %3807 = vmatpush.bf16.msra.mxu0 %v3464
    %3808 = vmatpush.bf16.msra.mxu0 %v3460
    %3809 = vmatpush.bf16.msra.mxu0 %v3456
    %3810 = vmatmul.bf16.gmra.mxu0 %v2610
    %v3811 = vpop.f32.mrf.mxu0
    %v3812 = vadd.f32 %v3799, %v3811
    %v3813 = vpop.f32.mrf.mxu0
    %3814 = vdwg.mxu0
    %3815 = vmatpush.bf16.msra.mxu0 %v3516
    %3816 = vmatpush.bf16.msra.mxu0 %v3512
    %3817 = vmatpush.bf16.msra.mxu0 %v3508
    %3818 = vmatpush.bf16.msra.mxu0 %v3504
    %3819 = vmatpush.bf16.msra.mxu0 %v3500
    %3820 = vmatpush.bf16.msra.mxu0 %v3496
    %3821 = vmatpush.bf16.msra.mxu0 %v3492
    %3822 = vmatpush.bf16.msra.mxu0 %v3488
    %3823 = vmatmul.bf16.gmra.mxu0 %v2611
    %v3824 = vpop.f32.mrf.mxu0
    %v3825 = vadd.f32 %v3812, %v3824
    %v3826 = vpop.f32.mrf.mxu0
    %3827 = vdwg.mxu0
    %3828 = vmatpush.bf16.msra.mxu0 %v3548
    %3829 = vmatpush.bf16.msra.mxu0 %v3544
    %3830 = vmatpush.bf16.msra.mxu0 %v3540
    %3831 = vmatpush.bf16.msra.mxu0 %v3536
    %3832 = vmatpush.bf16.msra.mxu0 %v3532
    %3833 = vmatpush.bf16.msra.mxu0 %v3528
    %3834 = vmatpush.bf16.msra.mxu0 %v3524
    %3835 = vmatpush.bf16.msra.mxu0 %v3520
    %3836 = vmatmul.bf16.gmra.mxu0 %v2612
    %v3837 = vpop.f32.mrf.mxu0
    %v3838 = vadd.f32 %v3825, %v3837
    %v3839 = vpop.f32.mrf.mxu0
    %3840 = vdwg.mxu0
    %3841 = vmatpush.bf16.msra.mxu0 %v3580
    %3842 = vmatpush.bf16.msra.mxu0 %v3576
    %3843 = vmatpush.bf16.msra.mxu0 %v3572
    %3844 = vmatpush.bf16.msra.mxu0 %v3568
    %3845 = vmatpush.bf16.msra.mxu0 %v3564
    %3846 = vmatpush.bf16.msra.mxu0 %v3560
    %3847 = vmatpush.bf16.msra.mxu0 %v3556
    %3848 = vmatpush.bf16.msra.mxu0 %v3552
    %3849 = vmatmul.bf16.gmra.mxu0 %v2613
    %v3850 = vpop.f32.mrf.mxu0
    %v3851 = vadd.f32 %v3838, %v3850
    %v3852 = vpop.f32.mrf.mxu0
    %3853 = vdwg.mxu0
    %3854 = vmatpush.bf16.msra.mxu0 %v3421
    %3855 = vmatpush.bf16.msra.mxu0 %v3417
    %3856 = vmatpush.bf16.msra.mxu0 %v3413
    %3857 = vmatpush.bf16.msra.mxu0 %v3409
    %3858 = vmatpush.bf16.msra.mxu0 %v3405
    %3859 = vmatpush.bf16.msra.mxu0 %v3401
    %3860 = vmatpush.bf16.msra.mxu0 %v3397
    %3861 = vmatpush.bf16.msra.mxu0 %v3393
    %3862 = vmatmul.bf16.gmra.mxu0 %v2608
    %v3863 = vpop.f32.mrf.mxu0
    %v3864 = vadd.f32 %v2809, %v3863
    %v3865 = vpop.f32.mrf.mxu0
    %3866 = vdwg.mxu0
    %3867 = vmatpush.bf16.msra.mxu0 %v3453
    %3868 = vmatpush.bf16.msra.mxu0 %v3449
    %3869 = vmatpush.bf16.msra.mxu0 %v3445
    %3870 = vmatpush.bf16.msra.mxu0 %v3441
    %3871 = vmatpush.bf16.msra.mxu0 %v3437
    %3872 = vmatpush.bf16.msra.mxu0 %v3433
    %3873 = vmatpush.bf16.msra.mxu0 %v3429
    %3874 = vmatpush.bf16.msra.mxu0 %v3425
    %3875 = vmatmul.bf16.gmra.mxu0 %v2609
    %v3876 = vpop.f32.mrf.mxu0
    %v3877 = vadd.f32 %v3864, %v3876
    %v3878 = vpop.f32.mrf.mxu0
    %3879 = vdwg.mxu0
    %3880 = vmatpush.bf16.msra.mxu0 %v3485
    %3881 = vmatpush.bf16.msra.mxu0 %v3481
    %3882 = vmatpush.bf16.msra.mxu0 %v3477
    %3883 = vmatpush.bf16.msra.mxu0 %v3473
    %3884 = vmatpush.bf16.msra.mxu0 %v3469
    %3885 = vmatpush.bf16.msra.mxu0 %v3465
    %3886 = vmatpush.bf16.msra.mxu0 %v3461
    %3887 = vmatpush.bf16.msra.mxu0 %v3457
    %3888 = vmatmul.bf16.gmra.mxu0 %v2610
    %v3889 = vpop.f32.mrf.mxu0
    %v3890 = vadd.f32 %v3877, %v3889
    %v3891 = vpop.f32.mrf.mxu0
    %3892 = vdwg.mxu0
    %3893 = vmatpush.bf16.msra.mxu0 %v3517
    %3894 = vmatpush.bf16.msra.mxu0 %v3513
    %3895 = vmatpush.bf16.msra.mxu0 %v3509
    %3896 = vmatpush.bf16.msra.mxu0 %v3505
    %3897 = vmatpush.bf16.msra.mxu0 %v3501
    %3898 = vmatpush.bf16.msra.mxu0 %v3497
    %3899 = vmatpush.bf16.msra.mxu0 %v3493
    %3900 = vmatpush.bf16.msra.mxu0 %v3489
    %3901 = vmatmul.bf16.gmra.mxu0 %v2611
    %v3902 = vpop.f32.mrf.mxu0
    %v3903 = vadd.f32 %v3890, %v3902
    %v3904 = vpop.f32.mrf.mxu0
    %3905 = vdwg.mxu0
    %3906 = vmatpush.bf16.msra.mxu0 %v3549
    %3907 = vmatpush.bf16.msra.mxu0 %v3545
    %3908 = vmatpush.bf16.msra.mxu0 %v3541
    %3909 = vmatpush.bf16.msra.mxu0 %v3537
    %3910 = vmatpush.bf16.msra.mxu0 %v3533
    %3911 = vmatpush.bf16.msra.mxu0 %v3529
    %3912 = vmatpush.bf16.msra.mxu0 %v3525
    %3913 = vmatpush.bf16.msra.mxu0 %v3521
    %3914 = vmatmul.bf16.gmra.mxu0 %v2612
    %v3915 = vpop.f32.mrf.mxu0
    %v3916 = vadd.f32 %v3903, %v3915
    %v3917 = vpop.f32.mrf.mxu0
    %3918 = vdwg.mxu0
    %3919 = vmatpush.bf16.msra.mxu0 %v3581
    %3920 = vmatpush.bf16.msra.mxu0 %v3577
    %3921 = vmatpush.bf16.msra.mxu0 %v3573
    %3922 = vmatpush.bf16.msra.mxu0 %v3569
    %3923 = vmatpush.bf16.msra.mxu0 %v3565
    %3924 = vmatpush.bf16.msra.mxu0 %v3561
    %3925 = vmatpush.bf16.msra.mxu0 %v3557
    %3926 = vmatpush.bf16.msra.mxu0 %v3553
    %3927 = vmatmul.bf16.gmra.mxu0 %v2613
    %v3928 = vpop.f32.mrf.mxu0
    %v3929 = vadd.f32 %v3916, %v3928
    %v3930 = vpop.f32.mrf.mxu0
    %3931 = vdwg.mxu0
    %3932 = vmatpush.bf16.msra.mxu0 %v3422
    %3933 = vmatpush.bf16.msra.mxu0 %v3418
    %3934 = vmatpush.bf16.msra.mxu0 %v3414
    %3935 = vmatpush.bf16.msra.mxu0 %v3410
    %3936 = vmatpush.bf16.msra.mxu0 %v3406
    %3937 = vmatpush.bf16.msra.mxu0 %v3402
    %3938 = vmatpush.bf16.msra.mxu0 %v3398
    %3939 = vmatpush.bf16.msra.mxu0 %v3394
    %3940 = vmatmul.bf16.gmra.mxu0 %v2608
    %v3941 = vpop.f32.mrf.mxu0
    %v3942 = vadd.f32 %v2810, %v3941
    %v3943 = vpop.f32.mrf.mxu0
    %3944 = vdwg.mxu0
    %3945 = vmatpush.bf16.msra.mxu0 %v3454
    %3946 = vmatpush.bf16.msra.mxu0 %v3450
    %3947 = vmatpush.bf16.msra.mxu0 %v3446
    %3948 = vmatpush.bf16.msra.mxu0 %v3442
    %3949 = vmatpush.bf16.msra.mxu0 %v3438
    %3950 = vmatpush.bf16.msra.mxu0 %v3434
    %3951 = vmatpush.bf16.msra.mxu0 %v3430
    %3952 = vmatpush.bf16.msra.mxu0 %v3426
    %3953 = vmatmul.bf16.gmra.mxu0 %v2609
    %v3954 = vpop.f32.mrf.mxu0
    %v3955 = vadd.f32 %v3942, %v3954
    %v3956 = vpop.f32.mrf.mxu0
    %3957 = vdwg.mxu0
    %3958 = vmatpush.bf16.msra.mxu0 %v3486
    %3959 = vmatpush.bf16.msra.mxu0 %v3482
    %3960 = vmatpush.bf16.msra.mxu0 %v3478
    %3961 = vmatpush.bf16.msra.mxu0 %v3474
    %3962 = vmatpush.bf16.msra.mxu0 %v3470
    %3963 = vmatpush.bf16.msra.mxu0 %v3466
    %3964 = vmatpush.bf16.msra.mxu0 %v3462
    %3965 = vmatpush.bf16.msra.mxu0 %v3458
    %3966 = vmatmul.bf16.gmra.mxu0 %v2610
    %v3967 = vpop.f32.mrf.mxu0
    %v3968 = vadd.f32 %v3955, %v3967
    %v3969 = vpop.f32.mrf.mxu0
    %3970 = vdwg.mxu0
    %3971 = vmatpush.bf16.msra.mxu0 %v3518
    %3972 = vmatpush.bf16.msra.mxu0 %v3514
    %3973 = vmatpush.bf16.msra.mxu0 %v3510
    %3974 = vmatpush.bf16.msra.mxu0 %v3506
    %3975 = vmatpush.bf16.msra.mxu0 %v3502
    %3976 = vmatpush.bf16.msra.mxu0 %v3498
    %3977 = vmatpush.bf16.msra.mxu0 %v3494
    %3978 = vmatpush.bf16.msra.mxu0 %v3490
    %3979 = vmatmul.bf16.gmra.mxu0 %v2611
    %v3980 = vpop.f32.mrf.mxu0
    %v3981 = vadd.f32 %v3968, %v3980
    %v3982 = vpop.f32.mrf.mxu0
    %3983 = vdwg.mxu0
    %3984 = vmatpush.bf16.msra.mxu0 %v3550
    %3985 = vmatpush.bf16.msra.mxu0 %v3546
    %3986 = vmatpush.bf16.msra.mxu0 %v3542
    %3987 = vmatpush.bf16.msra.mxu0 %v3538
    %3988 = vmatpush.bf16.msra.mxu0 %v3534
    %3989 = vmatpush.bf16.msra.mxu0 %v3530
    %3990 = vmatpush.bf16.msra.mxu0 %v3526
    %3991 = vmatpush.bf16.msra.mxu0 %v3522
    %3992 = vmatmul.bf16.gmra.mxu0 %v2612
    %v3993 = vpop.f32.mrf.mxu0
    %v3994 = vadd.f32 %v3981, %v3993
    %v3995 = vpop.f32.mrf.mxu0
    %3996 = vdwg.mxu0
    %3997 = vmatpush.bf16.msra.mxu0 %v3582
    %3998 = vmatpush.bf16.msra.mxu0 %v3578
    %3999 = vmatpush.bf16.msra.mxu0 %v3574
    %4000 = vmatpush.bf16.msra.mxu0 %v3570
    %4001 = vmatpush.bf16.msra.mxu0 %v3566
    %4002 = vmatpush.bf16.msra.mxu0 %v3562
    %4003 = vmatpush.bf16.msra.mxu0 %v3558
    %4004 = vmatpush.bf16.msra.mxu0 %v3554
    %4005 = vmatmul.bf16.gmra.mxu0 %v2613
    %v4006 = vpop.f32.mrf.mxu0
    %v4007 = vadd.f32 %v3994, %v4006
    %v4008 = vpop.f32.mrf.mxu0
    %4009 = vdwg.mxu0
    %4010 = vmatpush.bf16.msra.mxu0 %v3423
    %4011 = vmatpush.bf16.msra.mxu0 %v3419
    %4012 = vmatpush.bf16.msra.mxu0 %v3415
    %4013 = vmatpush.bf16.msra.mxu0 %v3411
    %4014 = vmatpush.bf16.msra.mxu0 %v3407
    %4015 = vmatpush.bf16.msra.mxu0 %v3403
    %4016 = vmatpush.bf16.msra.mxu0 %v3399
    %4017 = vmatpush.bf16.msra.mxu0 %v3395
    %4018 = vmatmul.bf16.gmra.mxu0 %v2608
    %v4019 = vpop.f32.mrf.mxu0
    %v4020 = vadd.f32 %v2811, %v4019
    %v4021 = vpop.f32.mrf.mxu0
    %4022 = vdwg.mxu0
    %4023 = vmatpush.bf16.msra.mxu0 %v3455
    %4024 = vmatpush.bf16.msra.mxu0 %v3451
    %4025 = vmatpush.bf16.msra.mxu0 %v3447
    %4026 = vmatpush.bf16.msra.mxu0 %v3443
    %4027 = vmatpush.bf16.msra.mxu0 %v3439
    %4028 = vmatpush.bf16.msra.mxu0 %v3435
    %4029 = vmatpush.bf16.msra.mxu0 %v3431
    %4030 = vmatpush.bf16.msra.mxu0 %v3427
    %4031 = vmatmul.bf16.gmra.mxu0 %v2609
    %v4032 = vpop.f32.mrf.mxu0
    %v4033 = vadd.f32 %v4020, %v4032
    %v4034 = vpop.f32.mrf.mxu0
    %4035 = vdwg.mxu0
    %4036 = vmatpush.bf16.msra.mxu0 %v3487
    %4037 = vmatpush.bf16.msra.mxu0 %v3483
    %4038 = vmatpush.bf16.msra.mxu0 %v3479
    %4039 = vmatpush.bf16.msra.mxu0 %v3475
    %4040 = vmatpush.bf16.msra.mxu0 %v3471
    %4041 = vmatpush.bf16.msra.mxu0 %v3467
    %4042 = vmatpush.bf16.msra.mxu0 %v3463
    %4043 = vmatpush.bf16.msra.mxu0 %v3459
    %4044 = vmatmul.bf16.gmra.mxu0 %v2610
    %v4045 = vpop.f32.mrf.mxu0
    %v4046 = vadd.f32 %v4033, %v4045
    %v4047 = vpop.f32.mrf.mxu0
    %4048 = vdwg.mxu0
    %4049 = vmatpush.bf16.msra.mxu0 %v3519
    %4050 = vmatpush.bf16.msra.mxu0 %v3515
    %4051 = vmatpush.bf16.msra.mxu0 %v3511
    %4052 = vmatpush.bf16.msra.mxu0 %v3507
    %4053 = vmatpush.bf16.msra.mxu0 %v3503
    %4054 = vmatpush.bf16.msra.mxu0 %v3499
    %4055 = vmatpush.bf16.msra.mxu0 %v3495
    %4056 = vmatpush.bf16.msra.mxu0 %v3491
    %4057 = vmatmul.bf16.gmra.mxu0 %v2611
    %v4058 = vpop.f32.mrf.mxu0
    %v4059 = vadd.f32 %v4046, %v4058
    %v4060 = vpop.f32.mrf.mxu0
    %4061 = vdwg.mxu0
    %4062 = vmatpush.bf16.msra.mxu0 %v3551
    %4063 = vmatpush.bf16.msra.mxu0 %v3547
    %4064 = vmatpush.bf16.msra.mxu0 %v3543
    %4065 = vmatpush.bf16.msra.mxu0 %v3539
    %4066 = vmatpush.bf16.msra.mxu0 %v3535
    %4067 = vmatpush.bf16.msra.mxu0 %v3531
    %4068 = vmatpush.bf16.msra.mxu0 %v3527
    %4069 = vmatpush.bf16.msra.mxu0 %v3523
    %4070 = vmatmul.bf16.gmra.mxu0 %v2612
    %v4071 = vpop.f32.mrf.mxu0
    %v4072 = vadd.f32 %v4059, %v4071
    %v4073 = vpop.f32.mrf.mxu0
    %4074 = vdwg.mxu0
    %4075 = vmatpush.bf16.msra.mxu0 %v3583
    %4076 = vmatpush.bf16.msra.mxu0 %v3579
    %4077 = vmatpush.bf16.msra.mxu0 %v3575
    %4078 = vmatpush.bf16.msra.mxu0 %v3571
    %4079 = vmatpush.bf16.msra.mxu0 %v3567
    %4080 = vmatpush.bf16.msra.mxu0 %v3563
    %4081 = vmatpush.bf16.msra.mxu0 %v3559
    %4082 = vmatpush.bf16.msra.mxu0 %v3555
    %4083 = vmatmul.bf16.gmra.mxu0 %v2613
    %v4084 = vpop.f32.mrf.mxu0
    %v4085 = vadd.f32 %v4072, %v4084
    %v4086 = vpop.f32.mrf.mxu0
    %4087 = vdwg.mxu0
    %v4088 = vmax.f32 %v3851, 0.0
    %v4089 = vmax.f32 %v3929, 0.0
    %v4090 = vmax.f32 %v4007, 0.0
    %v4091 = vmax.f32 %v4085, 0.0
    %v4092 = vpack.c.bf16 %v4088, %v4088
    %v4093 = vpack.c.bf16 %v4089, %v4089
    %v4094 = vpack.c.bf16 %v4090, %v4090
    %v4095 = vpack.c.bf16 %v4091, %v4091
    %v4096 = vld [vmem:[#allocation11] sm:$0xff]
    %v4097 = vld [vmem:[#allocation11 + $0x8] sm:$0xff]
    %v4098 = vld [vmem:[#allocation11 + $0x10] sm:$0xff]
    %v4099 = vld [vmem:[#allocation11 + $0x18] sm:$0xff]
    %v4100 = vld [vmem:[#allocation11 + $0x20] sm:$0xff]
    %v4101 = vld [vmem:[#allocation11 + $0x28] sm:$0xff]
    %v4102 = vld [vmem:[#allocation11 + $0x30] sm:$0xff]
    %v4103 = vld [vmem:[#allocation11 + $0x38] sm:$0xff]
    %v4104 = vld [vmem:[#allocation11 + $0x40] sm:$0xff]
    %v4105 = vld [vmem:[#allocation11 + $0x48] sm:$0xff]
    %v4106 = vld [vmem:[#allocation11 + $0x50] sm:$0xff]
    %v4107 = vld [vmem:[#allocation11 + $0x58] sm:$0xff]
    %v4108 = vld [vmem:[#allocation11 + $0x60] sm:$0xff]
    %v4109 = vld [vmem:[#allocation11 + $0x68] sm:$0xff]
    %v4110 = vld [vmem:[#allocation11 + $0x70] sm:$0xff]
    %v4111 = vld [vmem:[#allocation11 + $0x78] sm:$0xff]
    %v4112 = vld [vmem:[#allocation11 + $0x80] sm:$0xff]
    %v4113 = vld [vmem:[#allocation11 + $0x88] sm:$0xff]
    %v4114 = vld [vmem:[#allocation11 + $0x90] sm:$0xff]
    %v4115 = vld [vmem:[#allocation11 + $0x98] sm:$0xff]
    %v4116 = vld [vmem:[#allocation11 + $0xa0] sm:$0xff]
    %v4117 = vld [vmem:[#allocation11 + $0xa8] sm:$0xff]
    %v4118 = vld [vmem:[#allocation11 + $0xb0] sm:$0xff]
    %v4119 = vld [vmem:[#allocation11 + $0xb8] sm:$0xff]
    %v4120 = vld [vmem:[#allocation11 + $0xc0] sm:$0xff]
    %v4121 = vld [vmem:[#allocation11 + $0xc8] sm:$0xff]
    %v4122 = vld [vmem:[#allocation11 + $0xd0] sm:$0xff]
    %v4123 = vld [vmem:[#allocation11 + $0xd8] sm:$0xff]
    %v4124 = vld [vmem:[#allocation11 + $0xe0] sm:$0xff]
    %v4125 = vld [vmem:[#allocation11 + $0xe8] sm:$0xff]
    %v4126 = vld [vmem:[#allocation11 + $0xf0] sm:$0xff]
    %v4127 = vld [vmem:[#allocation11 + $0xf8] sm:$0xff]
    %v4128 = vld [vmem:[#allocation11 + $0x100] sm:$0xff]
    %v4129 = vld [vmem:[#allocation11 + $0x108] sm:$0xff]
    %v4130 = vld [vmem:[#allocation11 + $0x110] sm:$0xff]
    %v4131 = vld [vmem:[#allocation11 + $0x118] sm:$0xff]
    %v4132 = vld [vmem:[#allocation11 + $0x120] sm:$0xff]
    %v4133 = vld [vmem:[#allocation11 + $0x128] sm:$0xff]
    %v4134 = vld [vmem:[#allocation11 + $0x130] sm:$0xff]
    %v4135 = vld [vmem:[#allocation11 + $0x138] sm:$0xff]
    %v4136 = vld [vmem:[#allocation11 + $0x140] sm:$0xff]
    %v4137 = vld [vmem:[#allocation11 + $0x148] sm:$0xff]
    %v4138 = vld [vmem:[#allocation11 + $0x150] sm:$0xff]
    %v4139 = vld [vmem:[#allocation11 + $0x158] sm:$0xff]
    %v4140 = vld [vmem:[#allocation11 + $0x160] sm:$0xff]
    %v4141 = vld [vmem:[#allocation11 + $0x168] sm:$0xff]
    %v4142 = vld [vmem:[#allocation11 + $0x170] sm:$0xff]
    %v4143 = vld [vmem:[#allocation11 + $0x178] sm:$0xff]
    %v4144 = vld [vmem:[#allocation11 + $0x180] sm:$0xff]
    %v4145 = vld [vmem:[#allocation11 + $0x188] sm:$0xff]
    %v4146 = vld [vmem:[#allocation11 + $0x190] sm:$0xff]
    %v4147 = vld [vmem:[#allocation11 + $0x198] sm:$0xff]
    %v4148 = vld [vmem:[#allocation11 + $0x1a0] sm:$0xff]
    %v4149 = vld [vmem:[#allocation11 + $0x1a8] sm:$0xff]
    %v4150 = vld [vmem:[#allocation11 + $0x1b0] sm:$0xff]
    %v4151 = vld [vmem:[#allocation11 + $0x1b8] sm:$0xff]
    %v4152 = vld [vmem:[#allocation11 + $0x1c0] sm:$0xff]
    %v4153 = vld [vmem:[#allocation11 + $0x1c8] sm:$0xff]
    %v4154 = vld [vmem:[#allocation11 + $0x1d0] sm:$0xff]
    %v4155 = vld [vmem:[#allocation11 + $0x1d8] sm:$0xff]
    %v4156 = vld [vmem:[#allocation11 + $0x1e0] sm:$0xff]
    %v4157 = vld [vmem:[#allocation11 + $0x1e8] sm:$0xff]
    %v4158 = vld [vmem:[#allocation11 + $0x1f0] sm:$0xff]
    %v4159 = vld [vmem:[#allocation11 + $0x1f8] sm:$0xff]
    %v4160 = vld [vmem:[#allocation13] sm:$0x3]
    %v4162 = vperm.slane %v4160, 0
    %v4163 = vperm.slane %v4160, 1
    %v4230 = vunpack.c.l.b16 %v4096
    %v4231 = vunpack.c.h.b16 %v4096
    %v4232 = vunpack.c.l.b16 %v4097
    %v4233 = vunpack.c.h.b16 %v4097
    %v4234 = vunpack.c.l.b16 %v4098
    %v4235 = vunpack.c.h.b16 %v4098
    %v4236 = vunpack.c.l.b16 %v4099
    %v4237 = vunpack.c.h.b16 %v4099
    %v4238 = vunpack.c.l.b16 %v4100
    %v4239 = vunpack.c.h.b16 %v4100
    %v4240 = vunpack.c.l.b16 %v4101
    %v4241 = vunpack.c.h.b16 %v4101
    %v4242 = vunpack.c.l.b16 %v4102
    %v4243 = vunpack.c.h.b16 %v4102
    %v4244 = vunpack.c.l.b16 %v4103
    %v4245 = vunpack.c.h.b16 %v4103
    %v4246 = vunpack.c.l.b16 %v4104
    %v4247 = vunpack.c.h.b16 %v4104
    %v4248 = vunpack.c.l.b16 %v4105
    %v4249 = vunpack.c.h.b16 %v4105
    %v4250 = vunpack.c.l.b16 %v4106
    %v4251 = vunpack.c.h.b16 %v4106
    %v4252 = vunpack.c.l.b16 %v4107
    %v4253 = vunpack.c.h.b16 %v4107
    %v4254 = vunpack.c.l.b16 %v4108
    %v4255 = vunpack.c.h.b16 %v4108
    %v4256 = vunpack.c.l.b16 %v4109
    %v4257 = vunpack.c.h.b16 %v4109
    %v4258 = vunpack.c.l.b16 %v4110
    %v4259 = vunpack.c.h.b16 %v4110
    %v4260 = vunpack.c.l.b16 %v4111
    %v4261 = vunpack.c.h.b16 %v4111
    %v4262 = vunpack.c.l.b16 %v4112
    %v4263 = vunpack.c.h.b16 %v4112
    %v4264 = vunpack.c.l.b16 %v4113
    %v4265 = vunpack.c.h.b16 %v4113
    %v4266 = vunpack.c.l.b16 %v4114
    %v4267 = vunpack.c.h.b16 %v4114
    %v4268 = vunpack.c.l.b16 %v4115
    %v4269 = vunpack.c.h.b16 %v4115
    %v4270 = vunpack.c.l.b16 %v4116
    %v4271 = vunpack.c.h.b16 %v4116
    %v4272 = vunpack.c.l.b16 %v4117
    %v4273 = vunpack.c.h.b16 %v4117
    %v4274 = vunpack.c.l.b16 %v4118
    %v4275 = vunpack.c.h.b16 %v4118
    %v4276 = vunpack.c.l.b16 %v4119
    %v4277 = vunpack.c.h.b16 %v4119
    %v4278 = vunpack.c.l.b16 %v4120
    %v4279 = vunpack.c.h.b16 %v4120
    %v4280 = vunpack.c.l.b16 %v4121
    %v4281 = vunpack.c.h.b16 %v4121
    %v4282 = vunpack.c.l.b16 %v4122
    %v4283 = vunpack.c.h.b16 %v4122
    %v4284 = vunpack.c.l.b16 %v4123
    %v4285 = vunpack.c.h.b16 %v4123
    %v4286 = vunpack.c.l.b16 %v4124
    %v4287 = vunpack.c.h.b16 %v4124
    %v4288 = vunpack.c.l.b16 %v4125
    %v4289 = vunpack.c.h.b16 %v4125
    %v4290 = vunpack.c.l.b16 %v4126
    %v4291 = vunpack.c.h.b16 %v4126
    %v4292 = vunpack.c.l.b16 %v4127
    %v4293 = vunpack.c.h.b16 %v4127
    %v4294 = vunpack.c.l.b16 %v4128
    %v4295 = vunpack.c.h.b16 %v4128
    %v4296 = vunpack.c.l.b16 %v4129
    %v4297 = vunpack.c.h.b16 %v4129
    %v4298 = vunpack.c.l.b16 %v4130
    %v4299 = vunpack.c.h.b16 %v4130
    %v4300 = vunpack.c.l.b16 %v4131
    %v4301 = vunpack.c.h.b16 %v4131
    %v4302 = vunpack.c.l.b16 %v4132
    %v4303 = vunpack.c.h.b16 %v4132
    %v4304 = vunpack.c.l.b16 %v4133
    %v4305 = vunpack.c.h.b16 %v4133
    %v4306 = vunpack.c.l.b16 %v4134
    %v4307 = vunpack.c.h.b16 %v4134
    %v4308 = vunpack.c.l.b16 %v4135
    %v4309 = vunpack.c.h.b16 %v4135
    %v4310 = vunpack.c.l.b16 %v4136
    %v4311 = vunpack.c.h.b16 %v4136
    %v4312 = vunpack.c.l.b16 %v4137
    %v4313 = vunpack.c.h.b16 %v4137
    %v4314 = vunpack.c.l.b16 %v4138
    %v4315 = vunpack.c.h.b16 %v4138
    %v4316 = vunpack.c.l.b16 %v4139
    %v4317 = vunpack.c.h.b16 %v4139
    %v4318 = vunpack.c.l.b16 %v4140
    %v4319 = vunpack.c.h.b16 %v4140
    %v4320 = vunpack.c.l.b16 %v4141
    %v4321 = vunpack.c.h.b16 %v4141
    %v4322 = vunpack.c.l.b16 %v4142
    %v4323 = vunpack.c.h.b16 %v4142
    %v4324 = vunpack.c.l.b16 %v4143
    %v4325 = vunpack.c.h.b16 %v4143
    %v4326 = vunpack.c.l.b16 %v4144
    %v4327 = vunpack.c.h.b16 %v4144
    %v4328 = vunpack.c.l.b16 %v4145
    %v4329 = vunpack.c.h.b16 %v4145
    %v4330 = vunpack.c.l.b16 %v4146
    %v4331 = vunpack.c.h.b16 %v4146
    %v4332 = vunpack.c.l.b16 %v4147
    %v4333 = vunpack.c.h.b16 %v4147
    %v4334 = vunpack.c.l.b16 %v4148
    %v4335 = vunpack.c.h.b16 %v4148
    %v4336 = vunpack.c.l.b16 %v4149
    %v4337 = vunpack.c.h.b16 %v4149
    %v4338 = vunpack.c.l.b16 %v4150
    %v4339 = vunpack.c.h.b16 %v4150
    %v4340 = vunpack.c.l.b16 %v4151
    %v4341 = vunpack.c.h.b16 %v4151
    %v4342 = vunpack.c.l.b16 %v4152
    %v4343 = vunpack.c.h.b16 %v4152
    %v4344 = vunpack.c.l.b16 %v4153
    %v4345 = vunpack.c.h.b16 %v4153
    %v4346 = vunpack.c.l.b16 %v4154
    %v4347 = vunpack.c.h.b16 %v4154
    %v4348 = vunpack.c.l.b16 %v4155
    %v4349 = vunpack.c.h.b16 %v4155
    %v4350 = vunpack.c.l.b16 %v4156
    %v4351 = vunpack.c.h.b16 %v4156
    %v4352 = vunpack.c.l.b16 %v4157
    %v4353 = vunpack.c.h.b16 %v4157
    %v4354 = vunpack.c.l.b16 %v4158
    %v4355 = vunpack.c.h.b16 %v4158
    %v4356 = vunpack.c.l.b16 %v4159
    %v4357 = vunpack.c.h.b16 %v4159
    %v4358 = vpack.c.b16 %v4232, %v4230
    %v4359 = vpack.c.b16 %v4233, %v4231
    %v4360 = vpack.c.b16 %v4236, %v4234
    %v4361 = vpack.c.b16 %v4237, %v4235
    %v4362 = vpack.c.b16 %v4240, %v4238
    %v4363 = vpack.c.b16 %v4241, %v4239
    %v4364 = vpack.c.b16 %v4244, %v4242
    %v4365 = vpack.c.b16 %v4245, %v4243
    %v4366 = vpack.c.b16 %v4248, %v4246
    %v4367 = vpack.c.b16 %v4249, %v4247
    %v4368 = vpack.c.b16 %v4252, %v4250
    %v4369 = vpack.c.b16 %v4253, %v4251
    %v4370 = vpack.c.b16 %v4256, %v4254
    %v4371 = vpack.c.b16 %v4257, %v4255
    %v4372 = vpack.c.b16 %v4260, %v4258
    %v4373 = vpack.c.b16 %v4261, %v4259
    %v4374 = vpack.c.b16 %v4264, %v4262
    %v4375 = vpack.c.b16 %v4265, %v4263
    %v4376 = vpack.c.b16 %v4268, %v4266
    %v4377 = vpack.c.b16 %v4269, %v4267
    %v4378 = vpack.c.b16 %v4272, %v4270
    %v4379 = vpack.c.b16 %v4273, %v4271
    %v4380 = vpack.c.b16 %v4276, %v4274
    %v4381 = vpack.c.b16 %v4277, %v4275
    %v4382 = vpack.c.b16 %v4280, %v4278
    %v4383 = vpack.c.b16 %v4281, %v4279
    %v4384 = vpack.c.b16 %v4284, %v4282
    %v4385 = vpack.c.b16 %v4285, %v4283
    %v4386 = vpack.c.b16 %v4288, %v4286
    %v4387 = vpack.c.b16 %v4289, %v4287
    %v4388 = vpack.c.b16 %v4292, %v4290
    %v4389 = vpack.c.b16 %v4293, %v4291
    %v4390 = vpack.c.b16 %v4296, %v4294
    %v4391 = vpack.c.b16 %v4297, %v4295
    %v4392 = vpack.c.b16 %v4300, %v4298
    %v4393 = vpack.c.b16 %v4301, %v4299
    %v4394 = vpack.c.b16 %v4304, %v4302
    %v4395 = vpack.c.b16 %v4305, %v4303
    %v4396 = vpack.c.b16 %v4308, %v4306
    %v4397 = vpack.c.b16 %v4309, %v4307
    %v4398 = vpack.c.b16 %v4312, %v4310
    %v4399 = vpack.c.b16 %v4313, %v4311
    %v4400 = vpack.c.b16 %v4316, %v4314
    %v4401 = vpack.c.b16 %v4317, %v4315
    %v4402 = vpack.c.b16 %v4320, %v4318
    %v4403 = vpack.c.b16 %v4321, %v4319
    %v4404 = vpack.c.b16 %v4324, %v4322
    %v4405 = vpack.c.b16 %v4325, %v4323
    %v4406 = vpack.c.b16 %v4328, %v4326
    %v4407 = vpack.c.b16 %v4329, %v4327
    %v4408 = vpack.c.b16 %v4332, %v4330
    %v4409 = vpack.c.b16 %v4333, %v4331
    %v4410 = vpack.c.b16 %v4336, %v4334
    %v4411 = vpack.c.b16 %v4337, %v4335
    %v4412 = vpack.c.b16 %v4340, %v4338
    %v4413 = vpack.c.b16 %v4341, %v4339
    %v4414 = vpack.c.b16 %v4344, %v4342
    %v4415 = vpack.c.b16 %v4345, %v4343
    %v4416 = vpack.c.b16 %v4348, %v4346
    %v4417 = vpack.c.b16 %v4349, %v4347
    %v4418 = vpack.c.b16 %v4352, %v4350
    %v4419 = vpack.c.b16 %v4353, %v4351
    %v4420 = vpack.c.b16 %v4356, %v4354
    %v4421 = vpack.c.b16 %v4357, %v4355
    %4486 = vmatpush.bf16.msra.mxu0 %v4372
    %4487 = vmatpush.bf16.msra.mxu0 %v4370
    %4488 = vmatpush.bf16.msra.mxu0 %v4368
    %4489 = vmatpush.bf16.msra.mxu0 %v4366
    %4490 = vmatpush.bf16.msra.mxu0 %v4364
    %4491 = vmatpush.bf16.msra.mxu0 %v4362
    %4492 = vmatpush.bf16.msra.mxu0 %v4360
    %4493 = vmatpush.bf16.msra.mxu0 %v4358
    %4494 = vmatmul.bf16.gmra.mxu0 %v4092
    %v4495 = vpop.f32.mrf.mxu0
    %v4496 = vadd.f32 %v4162, %v4495
    %v4497 = vpop.f32.mrf.mxu0
    %4498 = vdwg.mxu0
    %4499 = vmatpush.bf16.msra.mxu0 %v4388
    %4500 = vmatpush.bf16.msra.mxu0 %v4386
    %4501 = vmatpush.bf16.msra.mxu0 %v4384
    %4502 = vmatpush.bf16.msra.mxu0 %v4382
    %4503 = vmatpush.bf16.msra.mxu0 %v4380
    %4504 = vmatpush.bf16.msra.mxu0 %v4378
    %4505 = vmatpush.bf16.msra.mxu0 %v4376
    %4506 = vmatpush.bf16.msra.mxu0 %v4374
    %4507 = vmatmul.bf16.gmra.mxu0 %v4093
    %v4508 = vpop.f32.mrf.mxu0
    %v4509 = vadd.f32 %v4496, %v4508
    %v4510 = vpop.f32.mrf.mxu0
    %4511 = vdwg.mxu0
    %4512 = vmatpush.bf16.msra.mxu0 %v4404
    %4513 = vmatpush.bf16.msra.mxu0 %v4402
    %4514 = vmatpush.bf16.msra.mxu0 %v4400
    %4515 = vmatpush.bf16.msra.mxu0 %v4398
    %4516 = vmatpush.bf16.msra.mxu0 %v4396
    %4517 = vmatpush.bf16.msra.mxu0 %v4394
    %4518 = vmatpush.bf16.msra.mxu0 %v4392
    %4519 = vmatpush.bf16.msra.mxu0 %v4390
    %4520 = vmatmul.bf16.gmra.mxu0 %v4094
    %v4521 = vpop.f32.mrf.mxu0
    %v4522 = vadd.f32 %v4509, %v4521
    %v4523 = vpop.f32.mrf.mxu0
    %4524 = vdwg.mxu0
    %4525 = vmatpush.bf16.msra.mxu0 %v4420
    %4526 = vmatpush.bf16.msra.mxu0 %v4418
    %4527 = vmatpush.bf16.msra.mxu0 %v4416
    %4528 = vmatpush.bf16.msra.mxu0 %v4414
    %4529 = vmatpush.bf16.msra.mxu0 %v4412
    %4530 = vmatpush.bf16.msra.mxu0 %v4410
    %4531 = vmatpush.bf16.msra.mxu0 %v4408
    %4532 = vmatpush.bf16.msra.mxu0 %v4406
    %4533 = vmatmul.bf16.gmra.mxu0 %v4095
    %v4534 = vpop.f32.mrf.mxu0
    %v4535 = vadd.f32 %v4522, %v4534
    %v4536 = vpop.f32.mrf.mxu0
    %4537 = vdwg.mxu0
    %4538 = vmatpush.bf16.msra.mxu0 %v4373
    %4539 = vmatpush.bf16.msra.mxu0 %v4371
    %4540 = vmatpush.bf16.msra.mxu0 %v4369
    %4541 = vmatpush.bf16.msra.mxu0 %v4367
    %4542 = vmatpush.bf16.msra.mxu0 %v4365
    %4543 = vmatpush.bf16.msra.mxu0 %v4363
    %4544 = vmatpush.bf16.msra.mxu0 %v4361
    %4545 = vmatpush.bf16.msra.mxu0 %v4359
    %4546 = vmatmul.bf16.gmra.mxu0 %v4092
    %v4547 = vpop.f32.mrf.mxu0
    %v4548 = vadd.f32 %v4163, %v4547
    %v4549 = vpop.f32.mrf.mxu0
    %4550 = vdwg.mxu0
    %4551 = vmatpush.bf16.msra.mxu0 %v4389
    %4552 = vmatpush.bf16.msra.mxu0 %v4387
    %4553 = vmatpush.bf16.msra.mxu0 %v4385
    %4554 = vmatpush.bf16.msra.mxu0 %v4383
    %4555 = vmatpush.bf16.msra.mxu0 %v4381
    %4556 = vmatpush.bf16.msra.mxu0 %v4379
    %4557 = vmatpush.bf16.msra.mxu0 %v4377
    %4558 = vmatpush.bf16.msra.mxu0 %v4375
    %4559 = vmatmul.bf16.gmra.mxu0 %v4093
    %v4560 = vpop.f32.mrf.mxu0
    %v4561 = vadd.f32 %v4548, %v4560
    %v4562 = vpop.f32.mrf.mxu0
    %4563 = vdwg.mxu0
    %4564 = vmatpush.bf16.msra.mxu0 %v4405
    %4565 = vmatpush.bf16.msra.mxu0 %v4403
    %4566 = vmatpush.bf16.msra.mxu0 %v4401
    %4567 = vmatpush.bf16.msra.mxu0 %v4399
    %4568 = vmatpush.bf16.msra.mxu0 %v4397
    %4569 = vmatpush.bf16.msra.mxu0 %v4395
    %4570 = vmatpush.bf16.msra.mxu0 %v4393
    %4571 = vmatpush.bf16.msra.mxu0 %v4391
    %4572 = vmatmul.bf16.gmra.mxu0 %v4094
    %v4573 = vpop.f32.mrf.mxu0
    %v4574 = vadd.f32 %v4561, %v4573
    %v4575 = vpop.f32.mrf.mxu0
    %4576 = vdwg.mxu0
    %4577 = vmatpush.bf16.msra.mxu0 %v4421
    %4578 = vmatpush.bf16.msra.mxu0 %v4419
    %4579 = vmatpush.bf16.msra.mxu0 %v4417
    %4580 = vmatpush.bf16.msra.mxu0 %v4415
    %4581 = vmatpush.bf16.msra.mxu0 %v4413
    %4582 = vmatpush.bf16.msra.mxu0 %v4411
    %4583 = vmatpush.bf16.msra.mxu0 %v4409
    %4584 = vmatpush.bf16.msra.mxu0 %v4407
    %4585 = vmatmul.bf16.gmra.mxu0 %v4095
    %v4586 = vpop.f32.mrf.mxu0
    %v4587 = vadd.f32 %v4574, %v4586
    %v4588 = vpop.f32.mrf.mxu0
    %4589 = vdwg.mxu0
    %v4590 = vmax.f32 %v4535, 0.0
    %v4591 = vmax.f32 %v4587, 0.0
    %v4594 = vrot.slane %v4591, 6
    %vm4595 = vcmask 1041408
    %v4596 = vsel %vm4595, %v4590, %v4594
    %4598 = vst [vmem:[#allocation35] sm:$0xf] %v4596
    %v4599 = vpack.c.bf16 %v4590, %v4590
    %v4600 = vpack.c.bf16 %v4591, %v4591
    %v4601 = vld [vmem:[#allocation14] sm:$0xf]
    %v4602 = vld [vmem:[#allocation14 + $0x4] sm:$0xf]
    %v4603 = vld [vmem:[#allocation14 + $0x8] sm:$0xf]
    %v4604 = vld [vmem:[#allocation14 + $0xc] sm:$0xf]
    %v4605 = vld [vmem:[#allocation14 + $0x10] sm:$0xf]
    %v4606 = vld [vmem:[#allocation14 + $0x14] sm:$0xf]
    %v4607 = vld [vmem:[#allocation14 + $0x18] sm:$0xf]
    %v4608 = vld [vmem:[#allocation14 + $0x1c] sm:$0xf]
    %v4609 = vld [vmem:[#allocation14 + $0x20] sm:$0xf]
    %v4610 = vld [vmem:[#allocation14 + $0x24] sm:$0xf]
    %v4611 = vld [vmem:[#allocation14 + $0x28] sm:$0xf]
    %v4612 = vld [vmem:[#allocation14 + $0x2c] sm:$0xf]
    %v4613 = vld [vmem:[#allocation14 + $0x30] sm:$0xf]
    %v4614 = vld [vmem:[#allocation14 + $0x34] sm:$0xf]
    %v4615 = vld [vmem:[#allocation14 + $0x38] sm:$0xf]
    %v4616 = vld [vmem:[#allocation14 + $0x3c] sm:$0xf]
    %v4617 = vld [vmem:[#allocation14 + $0x40] sm:$0xf]
    %v4618 = vld [vmem:[#allocation14 + $0x44] sm:$0xf]
    %v4619 = vld [vmem:[#allocation14 + $0x48] sm:$0xf]
    %v4620 = vld [vmem:[#allocation14 + $0x4c] sm:$0xf]
    %v4621 = vld [vmem:[#allocation14 + $0x50] sm:$0xf]
    %v4622 = vld [vmem:[#allocation14 + $0x54] sm:$0xf]
    %v4623 = vld [vmem:[#allocation14 + $0x58] sm:$0xf]
    %v4624 = vld [vmem:[#allocation14 + $0x5c] sm:$0xf]
    %v4625 = vld [vmem:[#allocation14 + $0x60] sm:$0xf]
    %v4626 = vld [vmem:[#allocation14 + $0x64] sm:$0xf]
    %v4627 = vld [vmem:[#allocation14 + $0x68] sm:$0xf]
    %v4628 = vld [vmem:[#allocation14 + $0x6c] sm:$0xf]
    %v4629 = vld [vmem:[#allocation14 + $0x70] sm:$0xf]
    %v4630 = vld [vmem:[#allocation14 + $0x74] sm:$0xf]
    %v4631 = vld [vmem:[#allocation14 + $0x78] sm:$0xf]
    %v4632 = vld [vmem:[#allocation14 + $0x7c] sm:$0xf]
    %v4633 = vld [vmem:[#allocation16] sm:$0x1]
    %v4635 = vperm.slane %v4633, 0
    %v4669 = vunpack.c.l.b16 %v4601
    %v4670 = vunpack.c.l.b16 %v4602
    %v4671 = vunpack.c.l.b16 %v4603
    %v4672 = vunpack.c.l.b16 %v4604
    %v4673 = vunpack.c.l.b16 %v4605
    %v4674 = vunpack.c.l.b16 %v4606
    %v4675 = vunpack.c.l.b16 %v4607
    %v4676 = vunpack.c.l.b16 %v4608
    %v4677 = vunpack.c.l.b16 %v4609
    %v4678 = vunpack.c.l.b16 %v4610
    %v4679 = vunpack.c.l.b16 %v4611
    %v4680 = vunpack.c.l.b16 %v4612
    %v4681 = vunpack.c.l.b16 %v4613
    %v4682 = vunpack.c.l.b16 %v4614
    %v4683 = vunpack.c.l.b16 %v4615
    %v4684 = vunpack.c.l.b16 %v4616
    %v4685 = vunpack.c.l.b16 %v4617
    %v4686 = vunpack.c.l.b16 %v4618
    %v4687 = vunpack.c.l.b16 %v4619
    %v4688 = vunpack.c.l.b16 %v4620
    %v4689 = vunpack.c.l.b16 %v4621
    %v4690 = vunpack.c.l.b16 %v4622
    %v4691 = vunpack.c.l.b16 %v4623
    %v4692 = vunpack.c.l.b16 %v4624
    %v4693 = vunpack.c.l.b16 %v4625
    %v4694 = vunpack.c.l.b16 %v4626
    %v4695 = vunpack.c.l.b16 %v4627
    %v4696 = vunpack.c.l.b16 %v4628
    %v4697 = vunpack.c.l.b16 %v4629
    %v4698 = vunpack.c.l.b16 %v4630
    %v4699 = vunpack.c.l.b16 %v4631
    %v4700 = vunpack.c.l.b16 %v4632
    %v4701 = vpack.c.b16 %v4670, %v4669
    %v4702 = vpack.c.b16 %v4672, %v4671
    %v4703 = vpack.c.b16 %v4674, %v4673
    %v4704 = vpack.c.b16 %v4676, %v4675
    %v4705 = vpack.c.b16 %v4678, %v4677
    %v4706 = vpack.c.b16 %v4680, %v4679
    %v4707 = vpack.c.b16 %v4682, %v4681
    %v4708 = vpack.c.b16 %v4684, %v4683
    %v4709 = vpack.c.b16 %v4686, %v4685
    %v4710 = vpack.c.b16 %v4688, %v4687
    %v4711 = vpack.c.b16 %v4690, %v4689
    %v4712 = vpack.c.b16 %v4692, %v4691
    %v4713 = vpack.c.b16 %v4694, %v4693
    %v4714 = vpack.c.b16 %v4696, %v4695
    %v4715 = vpack.c.b16 %v4698, %v4697
    %v4716 = vpack.c.b16 %v4700, %v4699
    %4733 = vmatpush.bf16.msra.mxu0 %v4708
    %4734 = vmatpush.bf16.msra.mxu0 %v4707
    %4735 = vmatpush.bf16.msra.mxu0 %v4706
    %4736 = vmatpush.bf16.msra.mxu0 %v4705
    %4737 = vmatpush.bf16.msra.mxu0 %v4704
    %4738 = vmatpush.bf16.msra.mxu0 %v4703
    %4739 = vmatpush.bf16.msra.mxu0 %v4702
    %4740 = vmatpush.bf16.msra.mxu0 %v4701
    %4741 = vmatmul.bf16.gmra.mxu0 %v4599
    %v4742 = vpop.f32.mrf.mxu0
    %v4743 = vadd.f32 %v4635, %v4742
    %v4744 = vpop.f32.mrf.mxu0
    %4745 = vdwg.mxu0
    %4746 = vmatpush.bf16.msra.mxu0 %v4716
    %4747 = vmatpush.bf16.msra.mxu0 %v4715
    %4748 = vmatpush.bf16.msra.mxu0 %v4714
    %4749 = vmatpush.bf16.msra.mxu0 %v4713
    %4750 = vmatpush.bf16.msra.mxu0 %v4712
    %4751 = vmatpush.bf16.msra.mxu0 %v4711
    %4752 = vmatpush.bf16.msra.mxu0 %v4710
    %4753 = vmatpush.bf16.msra.mxu0 %v4709
    %4754 = vmatmul.bf16.gmra.mxu0 %v4600
    %v4755 = vpop.f32.mrf.mxu0
    %v4756 = vadd.f32 %v4743, %v4755
    %v4757 = vpop.f32.mrf.mxu0
    %4758 = vdwg.mxu0
    %4759 = vst [vmem:[%s23] sm:$0x3] %v4756
    %v4760 = vmul.f32 %v4756, 0.5
    %v4761 = vmul.f32 %v4760, 1.442695
    %v4762 = vpow.pop %v4761
    %v4763 = vld [vmem:[#allocation2] sm:$0x3]
    %4765 = vrot.lane.b32.xlu0 %v4763, 64
    %v4766 = vpop.permute.xlu0 %4765
    %v4768 = vmul.f32 %v4762, %v4766
    %4770 = vrot.lane.b32.xlu0 %v4768, 64
    %v4771 = vpop.permute.xlu0 %4770
    %v4773 = vadd.f32 %v4756, %v4771
    %v4774 = vpack.c.bf16 %v4773, %v4773
    %v4775 = vld [vmem:[#allocation17] sm:$0xff]
    %v4776 = vld [vmem:[#allocation17 + $0x8] sm:$0xff]
    %v4777 = vld [vmem:[#allocation17 + $0x10] sm:$0xff]
    %v4778 = vld [vmem:[#allocation17 + $0x18] sm:$0xff]
    %v4779 = vld [vmem:[#allocation17 + $0x20] sm:$0xff]
    %v4780 = vld [vmem:[#allocation17 + $0x28] sm:$0xff]
    %v4781 = vld [vmem:[#allocation17 + $0x30] sm:$0xff]
    %v4782 = vld [vmem:[#allocation17 + $0x38] sm:$0xff]
    %v4783 = vld [vmem:[#allocation19] sm:$0x3]
    %v4785 = vperm.slane %v4783, 0
    %v4786 = vperm.slane %v4783, 1
    %v4797 = vunpack.c.l.b16 %v4775
    %v4798 = vunpack.c.h.b16 %v4775
    %v4799 = vunpack.c.l.b16 %v4776
    %v4800 = vunpack.c.h.b16 %v4776
    %v4801 = vunpack.c.l.b16 %v4777
    %v4802 = vunpack.c.h.b16 %v4777
    %v4803 = vunpack.c.l.b16 %v4778
    %v4804 = vunpack.c.h.b16 %v4778
    %v4805 = vunpack.c.l.b16 %v4779
    %v4806 = vunpack.c.h.b16 %v4779
    %v4807 = vunpack.c.l.b16 %v4780
    %v4808 = vunpack.c.h.b16 %v4780
    %v4809 = vunpack.c.l.b16 %v4781
    %v4810 = vunpack.c.h.b16 %v4781
    %v4811 = vunpack.c.l.b16 %v4782
    %v4812 = vunpack.c.h.b16 %v4782
    %v4813 = vpack.c.b16 %v4799, %v4797
    %v4814 = vpack.c.b16 %v4800, %v4798
    %v4815 = vpack.c.b16 %v4803, %v4801
    %v4816 = vpack.c.b16 %v4804, %v4802
    %v4817 = vpack.c.b16 %v4807, %v4805
    %v4818 = vpack.c.b16 %v4808, %v4806
    %v4819 = vpack.c.b16 %v4811, %v4809
    %v4820 = vpack.c.b16 %v4812, %v4810
    %vm4829 = vcmask 523264
    %v4831 = vsel %vm4829, %v4774, 0
    %4833 = vmatpush.bf16.msra.mxu0 0
    %4834 = vmatpush.bf16.msra.mxu0 0
    %4835 = vmatpush.bf16.msra.mxu0 0
    %4836 = vmatpush.bf16.msra.mxu0 0
    %4837 = vmatpush.bf16.msra.mxu0 %v4819
    %4838 = vmatpush.bf16.msra.mxu0 %v4817
    %4839 = vmatpush.bf16.msra.mxu0 %v4815
    %4840 = vmatpush.bf16.msra.mxu0 %v4813
    %4841 = vmatmul.bf16.gmra.mxu0 %v4831
    %v4842 = vpop.f32.mrf.mxu0
    %v4843 = vadd.f32 %v4785, %v4842
    %v4844 = vpop.f32.mrf.mxu0
    %4845 = vdwg.mxu0
    %4846 = vmatpush.bf16.msra.mxu0 0
    %4847 = vmatpush.bf16.msra.mxu0 0
    %4848 = vmatpush.bf16.msra.mxu0 0
    %4849 = vmatpush.bf16.msra.mxu0 0
    %4850 = vmatpush.bf16.msra.mxu0 %v4820
    %4851 = vmatpush.bf16.msra.mxu0 %v4818
    %4852 = vmatpush.bf16.msra.mxu0 %v4816
    %4853 = vmatpush.bf16.msra.mxu0 %v4814
    %4854 = vmatmul.bf16.gmra.mxu0 %v4831
    %v4855 = vpop.f32.mrf.mxu0
    %v4856 = vadd.f32 %v4786, %v4855
    %v4857 = vpop.f32.mrf.mxu0
    %4858 = vdwg.mxu0
    %v4859 = vmax.f32 %v4843, 0.0
    %v4860 = vmax.f32 %v4856, 0.0
    %v4861 = vpack.c.bf16 %v4859, %v4859
    %v4862 = vpack.c.bf16 %v4860, %v4860
    %v4863 = vld [vmem:[#allocation20] sm:$0xff]
    %v4864 = vld [vmem:[#allocation20 + $0x8] sm:$0xff]
    %v4865 = vld [vmem:[#allocation20 + $0x10] sm:$0xff]
    %v4866 = vld [vmem:[#allocation20 + $0x18] sm:$0xff]
    %v4867 = vld [vmem:[#allocation20 + $0x20] sm:$0xff]
    %v4868 = vld [vmem:[#allocation20 + $0x28] sm:$0xff]
    %v4869 = vld [vmem:[#allocation20 + $0x30] sm:$0xff]
    %v4870 = vld [vmem:[#allocation20 + $0x38] sm:$0xff]
    %v4871 = vld [vmem:[#allocation20 + $0x40] sm:$0xff]
    %v4872 = vld [vmem:[#allocation20 + $0x48] sm:$0xff]
    %v4873 = vld [vmem:[#allocation20 + $0x50] sm:$0xff]
    %v4874 = vld [vmem:[#allocation20 + $0x58] sm:$0xff]
    %v4875 = vld [vmem:[#allocation20 + $0x60] sm:$0xff]
    %v4876 = vld [vmem:[#allocation20 + $0x68] sm:$0xff]
    %v4877 = vld [vmem:[#allocation20 + $0x70] sm:$0xff]
    %v4878 = vld [vmem:[#allocation20 + $0x78] sm:$0xff]
    %v4879 = vld [vmem:[#allocation20 + $0x80] sm:$0xff]
    %v4880 = vld [vmem:[#allocation20 + $0x88] sm:$0xff]
    %v4881 = vld [vmem:[#allocation20 + $0x90] sm:$0xff]
    %v4882 = vld [vmem:[#allocation20 + $0x98] sm:$0xff]
    %v4883 = vld [vmem:[#allocation20 + $0xa0] sm:$0xff]
    %v4884 = vld [vmem:[#allocation20 + $0xa8] sm:$0xff]
    %v4885 = vld [vmem:[#allocation20 + $0xb0] sm:$0xff]
    %v4886 = vld [vmem:[#allocation20 + $0xb8] sm:$0xff]
    %v4887 = vld [vmem:[#allocation20 + $0xc0] sm:$0xff]
    %v4888 = vld [vmem:[#allocation20 + $0xc8] sm:$0xff]
    %v4889 = vld [vmem:[#allocation20 + $0xd0] sm:$0xff]
    %v4890 = vld [vmem:[#allocation20 + $0xd8] sm:$0xff]
    %v4891 = vld [vmem:[#allocation20 + $0xe0] sm:$0xff]
    %v4892 = vld [vmem:[#allocation20 + $0xe8] sm:$0xff]
    %v4893 = vld [vmem:[#allocation20 + $0xf0] sm:$0xff]
    %v4894 = vld [vmem:[#allocation20 + $0xf8] sm:$0xff]
    %v4895 = vld [vmem:[#allocation20 + $0x100] sm:$0xff]
    %v4896 = vld [vmem:[#allocation20 + $0x108] sm:$0xff]
    %v4897 = vld [vmem:[#allocation20 + $0x110] sm:$0xff]
    %v4898 = vld [vmem:[#allocation20 + $0x118] sm:$0xff]
    %v4899 = vld [vmem:[#allocation20 + $0x120] sm:$0xff]
    %v4900 = vld [vmem:[#allocation20 + $0x128] sm:$0xff]
    %v4901 = vld [vmem:[#allocation20 + $0x130] sm:$0xff]
    %v4902 = vld [vmem:[#allocation20 + $0x138] sm:$0xff]
    %v4903 = vld [vmem:[#allocation20 + $0x140] sm:$0xff]
    %v4904 = vld [vmem:[#allocation20 + $0x148] sm:$0xff]
    %v4905 = vld [vmem:[#allocation20 + $0x150] sm:$0xff]
    %v4906 = vld [vmem:[#allocation20 + $0x158] sm:$0xff]
    %v4907 = vld [vmem:[#allocation20 + $0x160] sm:$0xff]
    %v4908 = vld [vmem:[#allocation20 + $0x168] sm:$0xff]
    %v4909 = vld [vmem:[#allocation20 + $0x170] sm:$0xff]
    %v4910 = vld [vmem:[#allocation20 + $0x178] sm:$0xff]
    %v4911 = vld [vmem:[#allocation20 + $0x180] sm:$0xff]
    %v4912 = vld [vmem:[#allocation20 + $0x188] sm:$0xff]
    %v4913 = vld [vmem:[#allocation20 + $0x190] sm:$0xff]
    %v4914 = vld [vmem:[#allocation20 + $0x198] sm:$0xff]
    %v4915 = vld [vmem:[#allocation20 + $0x1a0] sm:$0xff]
    %v4916 = vld [vmem:[#allocation20 + $0x1a8] sm:$0xff]
    %v4917 = vld [vmem:[#allocation20 + $0x1b0] sm:$0xff]
    %v4918 = vld [vmem:[#allocation20 + $0x1b8] sm:$0xff]
    %v4919 = vld [vmem:[#allocation20 + $0x1c0] sm:$0xff]
    %v4920 = vld [vmem:[#allocation20 + $0x1c8] sm:$0xff]
    %v4921 = vld [vmem:[#allocation20 + $0x1d0] sm:$0xff]
    %v4922 = vld [vmem:[#allocation20 + $0x1d8] sm:$0xff]
    %v4923 = vld [vmem:[#allocation20 + $0x1e0] sm:$0xff]
    %v4924 = vld [vmem:[#allocation20 + $0x1e8] sm:$0xff]
    %v4925 = vld [vmem:[#allocation20 + $0x1f0] sm:$0xff]
    %v4926 = vld [vmem:[#allocation20 + $0x1f8] sm:$0xff]
    %v4927 = vld [vmem:[#allocation22] sm:$0xf]
    %v4929 = vperm.slane %v4927, 0
    %v4930 = vperm.slane %v4927, 1
    %v4931 = vperm.slane %v4927, 2
    %v4932 = vperm.slane %v4927, 3
    %v5001 = vunpack.c.l.b16 %v4863
    %v5002 = vunpack.c.h.b16 %v4863
    %v5003 = vunpack.c.l.b16 %v4864
    %v5004 = vunpack.c.h.b16 %v4864
    %v5005 = vunpack.c.l.b16 %v4865
    %v5006 = vunpack.c.h.b16 %v4865
    %v5007 = vunpack.c.l.b16 %v4866
    %v5008 = vunpack.c.h.b16 %v4866
    %v5009 = vunpack.c.l.b16 %v4867
    %v5010 = vunpack.c.h.b16 %v4867
    %v5011 = vunpack.c.l.b16 %v4868
    %v5012 = vunpack.c.h.b16 %v4868
    %v5013 = vunpack.c.l.b16 %v4869
    %v5014 = vunpack.c.h.b16 %v4869
    %v5015 = vunpack.c.l.b16 %v4870
    %v5016 = vunpack.c.h.b16 %v4870
    %v5017 = vunpack.c.l.b16 %v4871
    %v5018 = vunpack.c.h.b16 %v4871
    %v5019 = vunpack.c.l.b16 %v4872
    %v5020 = vunpack.c.h.b16 %v4872
    %v5021 = vunpack.c.l.b16 %v4873
    %v5022 = vunpack.c.h.b16 %v4873
    %v5023 = vunpack.c.l.b16 %v4874
    %v5024 = vunpack.c.h.b16 %v4874
    %v5025 = vunpack.c.l.b16 %v4875
    %v5026 = vunpack.c.h.b16 %v4875
    %v5027 = vunpack.c.l.b16 %v4876
    %v5028 = vunpack.c.h.b16 %v4876
    %v5029 = vunpack.c.l.b16 %v4877
    %v5030 = vunpack.c.h.b16 %v4877
    %v5031 = vunpack.c.l.b16 %v4878
    %v5032 = vunpack.c.h.b16 %v4878
    %v5033 = vunpack.c.l.b16 %v4879
    %v5034 = vunpack.c.h.b16 %v4879
    %v5035 = vunpack.c.l.b16 %v4880
    %v5036 = vunpack.c.h.b16 %v4880
    %v5037 = vunpack.c.l.b16 %v4881
    %v5038 = vunpack.c.h.b16 %v4881
    %v5039 = vunpack.c.l.b16 %v4882
    %v5040 = vunpack.c.h.b16 %v4882
    %v5041 = vunpack.c.l.b16 %v4883
    %v5042 = vunpack.c.h.b16 %v4883
    %v5043 = vunpack.c.l.b16 %v4884
    %v5044 = vunpack.c.h.b16 %v4884
    %v5045 = vunpack.c.l.b16 %v4885
    %v5046 = vunpack.c.h.b16 %v4885
    %v5047 = vunpack.c.l.b16 %v4886
    %v5048 = vunpack.c.h.b16 %v4886
    %v5049 = vunpack.c.l.b16 %v4887
    %v5050 = vunpack.c.h.b16 %v4887
    %v5051 = vunpack.c.l.b16 %v4888
    %v5052 = vunpack.c.h.b16 %v4888
    %v5053 = vunpack.c.l.b16 %v4889
    %v5054 = vunpack.c.h.b16 %v4889
    %v5055 = vunpack.c.l.b16 %v4890
    %v5056 = vunpack.c.h.b16 %v4890
    %v5057 = vunpack.c.l.b16 %v4891
    %v5058 = vunpack.c.h.b16 %v4891
    %v5059 = vunpack.c.l.b16 %v4892
    %v5060 = vunpack.c.h.b16 %v4892
    %v5061 = vunpack.c.l.b16 %v4893
    %v5062 = vunpack.c.h.b16 %v4893
    %v5063 = vunpack.c.l.b16 %v4894
    %v5064 = vunpack.c.h.b16 %v4894
    %v5065 = vunpack.c.l.b16 %v4895
    %v5066 = vunpack.c.h.b16 %v4895
    %v5067 = vunpack.c.l.b16 %v4896
    %v5068 = vunpack.c.h.b16 %v4896
    %v5069 = vunpack.c.l.b16 %v4897
    %v5070 = vunpack.c.h.b16 %v4897
    %v5071 = vunpack.c.l.b16 %v4898
    %v5072 = vunpack.c.h.b16 %v4898
    %v5073 = vunpack.c.l.b16 %v4899
    %v5074 = vunpack.c.h.b16 %v4899
    %v5075 = vunpack.c.l.b16 %v4900
    %v5076 = vunpack.c.h.b16 %v4900
    %v5077 = vunpack.c.l.b16 %v4901
    %v5078 = vunpack.c.h.b16 %v4901
    %v5079 = vunpack.c.l.b16 %v4902
    %v5080 = vunpack.c.h.b16 %v4902
    %v5081 = vunpack.c.l.b16 %v4903
    %v5082 = vunpack.c.h.b16 %v4903
    %v5083 = vunpack.c.l.b16 %v4904
    %v5084 = vunpack.c.h.b16 %v4904
    %v5085 = vunpack.c.l.b16 %v4905
    %v5086 = vunpack.c.h.b16 %v4905
    %v5087 = vunpack.c.l.b16 %v4906
    %v5088 = vunpack.c.h.b16 %v4906
    %v5089 = vunpack.c.l.b16 %v4907
    %v5090 = vunpack.c.h.b16 %v4907
    %v5091 = vunpack.c.l.b16 %v4908
    %v5092 = vunpack.c.h.b16 %v4908
    %v5093 = vunpack.c.l.b16 %v4909
    %v5094 = vunpack.c.h.b16 %v4909
    %v5095 = vunpack.c.l.b16 %v4910
    %v5096 = vunpack.c.h.b16 %v4910
    %v5097 = vunpack.c.l.b16 %v4911
    %v5098 = vunpack.c.h.b16 %v4911
    %v5099 = vunpack.c.l.b16 %v4912
    %v5100 = vunpack.c.h.b16 %v4912
    %v5101 = vunpack.c.l.b16 %v4913
    %v5102 = vunpack.c.h.b16 %v4913
    %v5103 = vunpack.c.l.b16 %v4914
    %v5104 = vunpack.c.h.b16 %v4914
    %v5105 = vunpack.c.l.b16 %v4915
    %v5106 = vunpack.c.h.b16 %v4915
    %v5107 = vunpack.c.l.b16 %v4916
    %v5108 = vunpack.c.h.b16 %v4916
    %v5109 = vunpack.c.l.b16 %v4917
    %v5110 = vunpack.c.h.b16 %v4917
    %v5111 = vunpack.c.l.b16 %v4918
    %v5112 = vunpack.c.h.b16 %v4918
    %v5113 = vunpack.c.l.b16 %v4919
    %v5114 = vunpack.c.h.b16 %v4919
    %v5115 = vunpack.c.l.b16 %v4920
    %v5116 = vunpack.c.h.b16 %v4920
    %v5117 = vunpack.c.l.b16 %v4921
    %v5118 = vunpack.c.h.b16 %v4921
    %v5119 = vunpack.c.l.b16 %v4922
    %v5120 = vunpack.c.h.b16 %v4922
    %v5121 = vunpack.c.l.b16 %v4923
    %v5122 = vunpack.c.h.b16 %v4923
    %v5123 = vunpack.c.l.b16 %v4924
    %v5124 = vunpack.c.h.b16 %v4924
    %v5125 = vunpack.c.l.b16 %v4925
    %v5126 = vunpack.c.h.b16 %v4925
    %v5127 = vunpack.c.l.b16 %v4926
    %v5128 = vunpack.c.h.b16 %v4926
    %v5129 = vpack.c.b16 %v5005, %v5001
    %v5130 = vpack.c.b16 %v5006, %v5002
    %v5131 = vpack.c.b16 %v5007, %v5003
    %v5132 = vpack.c.b16 %v5008, %v5004
    %v5133 = vpack.c.b16 %v5013, %v5009
    %v5134 = vpack.c.b16 %v5014, %v5010
    %v5135 = vpack.c.b16 %v5015, %v5011
    %v5136 = vpack.c.b16 %v5016, %v5012
    %v5137 = vpack.c.b16 %v5021, %v5017
    %v5138 = vpack.c.b16 %v5022, %v5018
    %v5139 = vpack.c.b16 %v5023, %v5019
    %v5140 = vpack.c.b16 %v5024, %v5020
    %v5141 = vpack.c.b16 %v5029, %v5025
    %v5142 = vpack.c.b16 %v5030, %v5026
    %v5143 = vpack.c.b16 %v5031, %v5027
    %v5144 = vpack.c.b16 %v5032, %v5028
    %v5145 = vpack.c.b16 %v5037, %v5033
    %v5146 = vpack.c.b16 %v5038, %v5034
    %v5147 = vpack.c.b16 %v5039, %v5035
    %v5148 = vpack.c.b16 %v5040, %v5036
    %v5149 = vpack.c.b16 %v5045, %v5041
    %v5150 = vpack.c.b16 %v5046, %v5042
    %v5151 = vpack.c.b16 %v5047, %v5043
    %v5152 = vpack.c.b16 %v5048, %v5044
    %v5153 = vpack.c.b16 %v5053, %v5049
    %v5154 = vpack.c.b16 %v5054, %v5050
    %v5155 = vpack.c.b16 %v5055, %v5051
    %v5156 = vpack.c.b16 %v5056, %v5052
    %v5157 = vpack.c.b16 %v5061, %v5057
    %v5158 = vpack.c.b16 %v5062, %v5058
    %v5159 = vpack.c.b16 %v5063, %v5059
    %v5160 = vpack.c.b16 %v5064, %v5060
    %v5161 = vpack.c.b16 %v5069, %v5065
    %v5162 = vpack.c.b16 %v5070, %v5066
    %v5163 = vpack.c.b16 %v5071, %v5067
    %v5164 = vpack.c.b16 %v5072, %v5068
    %v5165 = vpack.c.b16 %v5077, %v5073
    %v5166 = vpack.c.b16 %v5078, %v5074
    %v5167 = vpack.c.b16 %v5079, %v5075
    %v5168 = vpack.c.b16 %v5080, %v5076
    %v5169 = vpack.c.b16 %v5085, %v5081
    %v5170 = vpack.c.b16 %v5086, %v5082
    %v5171 = vpack.c.b16 %v5087, %v5083
    %v5172 = vpack.c.b16 %v5088, %v5084
    %v5173 = vpack.c.b16 %v5093, %v5089
    %v5174 = vpack.c.b16 %v5094, %v5090
    %v5175 = vpack.c.b16 %v5095, %v5091
    %v5176 = vpack.c.b16 %v5096, %v5092
    %v5177 = vpack.c.b16 %v5101, %v5097
    %v5178 = vpack.c.b16 %v5102, %v5098
    %v5179 = vpack.c.b16 %v5103, %v5099
    %v5180 = vpack.c.b16 %v5104, %v5100
    %v5181 = vpack.c.b16 %v5109, %v5105
    %v5182 = vpack.c.b16 %v5110, %v5106
    %v5183 = vpack.c.b16 %v5111, %v5107
    %v5184 = vpack.c.b16 %v5112, %v5108
    %v5185 = vpack.c.b16 %v5117, %v5113
    %v5186 = vpack.c.b16 %v5118, %v5114
    %v5187 = vpack.c.b16 %v5119, %v5115
    %v5188 = vpack.c.b16 %v5120, %v5116
    %v5189 = vpack.c.b16 %v5125, %v5121
    %v5190 = vpack.c.b16 %v5126, %v5122
    %v5191 = vpack.c.b16 %v5127, %v5123
    %v5192 = vpack.c.b16 %v5128, %v5124
    %5257 = vmatpush.bf16.msra.mxu0 %v5157
    %5258 = vmatpush.bf16.msra.mxu0 %v5153
    %5259 = vmatpush.bf16.msra.mxu0 %v5149
    %5260 = vmatpush.bf16.msra.mxu0 %v5145
    %5261 = vmatpush.bf16.msra.mxu0 %v5141
    %5262 = vmatpush.bf16.msra.mxu0 %v5137
    %5263 = vmatpush.bf16.msra.mxu0 %v5133
    %5264 = vmatpush.bf16.msra.mxu0 %v5129
    %5265 = vmatmul.bf16.gmra.mxu0 %v4861
    %v5266 = vpop.f32.mrf.mxu0
    %v5267 = vadd.f32 %v4929, %v5266
    %v5268 = vpop.f32.mrf.mxu0
    %5269 = vdwg.mxu0
    %5270 = vmatpush.bf16.msra.mxu0 %v5189
    %5271 = vmatpush.bf16.msra.mxu0 %v5185
    %5272 = vmatpush.bf16.msra.mxu0 %v5181
    %5273 = vmatpush.bf16.msra.mxu0 %v5177
    %5274 = vmatpush.bf16.msra.mxu0 %v5173
    %5275 = vmatpush.bf16.msra.mxu0 %v5169
    %5276 = vmatpush.bf16.msra.mxu0 %v5165
    %5277 = vmatpush.bf16.msra.mxu0 %v5161
    %5278 = vmatmul.bf16.gmra.mxu0 %v4862
    %v5279 = vpop.f32.mrf.mxu0
    %v5280 = vadd.f32 %v5267, %v5279
    %v5281 = vpop.f32.mrf.mxu0
    %5282 = vdwg.mxu0
    %5283 = vmatpush.bf16.msra.mxu0 %v5158
    %5284 = vmatpush.bf16.msra.mxu0 %v5154
    %5285 = vmatpush.bf16.msra.mxu0 %v5150
    %5286 = vmatpush.bf16.msra.mxu0 %v5146
    %5287 = vmatpush.bf16.msra.mxu0 %v5142
    %5288 = vmatpush.bf16.msra.mxu0 %v5138
    %5289 = vmatpush.bf16.msra.mxu0 %v5134
    %5290 = vmatpush.bf16.msra.mxu0 %v5130
    %5291 = vmatmul.bf16.gmra.mxu0 %v4861
    %v5292 = vpop.f32.mrf.mxu0
    %v5293 = vadd.f32 %v4930, %v5292
    %v5294 = vpop.f32.mrf.mxu0
    %5295 = vdwg.mxu0
    %5296 = vmatpush.bf16.msra.mxu0 %v5190
    %5297 = vmatpush.bf16.msra.mxu0 %v5186
    %5298 = vmatpush.bf16.msra.mxu0 %v5182
    %5299 = vmatpush.bf16.msra.mxu0 %v5178
    %5300 = vmatpush.bf16.msra.mxu0 %v5174
    %5301 = vmatpush.bf16.msra.mxu0 %v5170
    %5302 = vmatpush.bf16.msra.mxu0 %v5166
    %5303 = vmatpush.bf16.msra.mxu0 %v5162
    %5304 = vmatmul.bf16.gmra.mxu0 %v4862
    %v5305 = vpop.f32.mrf.mxu0
    %v5306 = vadd.f32 %v5293, %v5305
    %v5307 = vpop.f32.mrf.mxu0
    %5308 = vdwg.mxu0
    %5309 = vmatpush.bf16.msra.mxu0 %v5159
    %5310 = vmatpush.bf16.msra.mxu0 %v5155
    %5311 = vmatpush.bf16.msra.mxu0 %v5151
    %5312 = vmatpush.bf16.msra.mxu0 %v5147
    %5313 = vmatpush.bf16.msra.mxu0 %v5143
    %5314 = vmatpush.bf16.msra.mxu0 %v5139
    %5315 = vmatpush.bf16.msra.mxu0 %v5135
    %5316 = vmatpush.bf16.msra.mxu0 %v5131
    %5317 = vmatmul.bf16.gmra.mxu0 %v4861
    %v5318 = vpop.f32.mrf.mxu0
    %v5319 = vadd.f32 %v4931, %v5318
    %v5320 = vpop.f32.mrf.mxu0
    %5321 = vdwg.mxu0
    %5322 = vmatpush.bf16.msra.mxu0 %v5191
    %5323 = vmatpush.bf16.msra.mxu0 %v5187
    %5324 = vmatpush.bf16.msra.mxu0 %v5183
    %5325 = vmatpush.bf16.msra.mxu0 %v5179
    %5326 = vmatpush.bf16.msra.mxu0 %v5175
    %5327 = vmatpush.bf16.msra.mxu0 %v5171
    %5328 = vmatpush.bf16.msra.mxu0 %v5167
    %5329 = vmatpush.bf16.msra.mxu0 %v5163
    %5330 = vmatmul.bf16.gmra.mxu0 %v4862
    %v5331 = vpop.f32.mrf.mxu0
    %v5332 = vadd.f32 %v5319, %v5331
    %v5333 = vpop.f32.mrf.mxu0
    %5334 = vdwg.mxu0
    %5335 = vmatpush.bf16.msra.mxu0 %v5160
    %5336 = vmatpush.bf16.msra.mxu0 %v5156
    %5337 = vmatpush.bf16.msra.mxu0 %v5152
    %5338 = vmatpush.bf16.msra.mxu0 %v5148
    %5339 = vmatpush.bf16.msra.mxu0 %v5144
    %5340 = vmatpush.bf16.msra.mxu0 %v5140
    %5341 = vmatpush.bf16.msra.mxu0 %v5136
    %5342 = vmatpush.bf16.msra.mxu0 %v5132
    %5343 = vmatmul.bf16.gmra.mxu0 %v4861
    %v5344 = vpop.f32.mrf.mxu0
    %v5345 = vadd.f32 %v4932, %v5344
    %v5346 = vpop.f32.mrf.mxu0
    %5347 = vdwg.mxu0
    %5348 = vmatpush.bf16.msra.mxu0 %v5192
    %5349 = vmatpush.bf16.msra.mxu0 %v5188
    %5350 = vmatpush.bf16.msra.mxu0 %v5184
    %5351 = vmatpush.bf16.msra.mxu0 %v5180
    %5352 = vmatpush.bf16.msra.mxu0 %v5176
    %5353 = vmatpush.bf16.msra.mxu0 %v5172
    %5354 = vmatpush.bf16.msra.mxu0 %v5168
    %5355 = vmatpush.bf16.msra.mxu0 %v5164
    %5356 = vmatmul.bf16.gmra.mxu0 %v4862
    %v5357 = vpop.f32.mrf.mxu0
    %v5358 = vadd.f32 %v5345, %v5357
    %v5359 = vpop.f32.mrf.mxu0
    %5360 = vdwg.mxu0
    %v5361 = vmax.f32 %v5280, 0.0
    %v5362 = vmax.f32 %v5306, 0.0
    %v5363 = vmax.f32 %v5332, 0.0
    %v5364 = vmax.f32 %v5358, 0.0
    %v5365 = vpack.c.bf16 %v5361, %v5361
    %v5366 = vpack.c.bf16 %v5362, %v5362
    %v5367 = vpack.c.bf16 %v5363, %v5363
    %v5368 = vpack.c.bf16 %v5364, %v5364
    %v5369 = vld [vmem:[#allocation23] sm:$0xff]
    %v5370 = vld [vmem:[#allocation23 + $0x8] sm:$0xff]
    %v5371 = vld [vmem:[#allocation23 + $0x10] sm:$0xff]
    %v5372 = vld [vmem:[#allocation23 + $0x18] sm:$0xff]
    %v5373 = vld [vmem:[#allocation23 + $0x20] sm:$0xff]
    %v5374 = vld [vmem:[#allocation23 + $0x28] sm:$0xff]
    %v5375 = vld [vmem:[#allocation23 + $0x30] sm:$0xff]
    %v5376 = vld [vmem:[#allocation23 + $0x38] sm:$0xff]
    %v5377 = vld [vmem:[#allocation23 + $0x40] sm:$0xff]
    %v5378 = vld [vmem:[#allocation23 + $0x48] sm:$0xff]
    %v5379 = vld [vmem:[#allocation23 + $0x50] sm:$0xff]
    %v5380 = vld [vmem:[#allocation23 + $0x58] sm:$0xff]
    %v5381 = vld [vmem:[#allocation23 + $0x60] sm:$0xff]
    %v5382 = vld [vmem:[#allocation23 + $0x68] sm:$0xff]
    %v5383 = vld [vmem:[#allocation23 + $0x70] sm:$0xff]
    %v5384 = vld [vmem:[#allocation23 + $0x78] sm:$0xff]
    %v5385 = vld [vmem:[#allocation23 + $0x80] sm:$0xff]
    %v5386 = vld [vmem:[#allocation23 + $0x88] sm:$0xff]
    %v5387 = vld [vmem:[#allocation23 + $0x90] sm:$0xff]
    %v5388 = vld [vmem:[#allocation23 + $0x98] sm:$0xff]
    %v5389 = vld [vmem:[#allocation23 + $0xa0] sm:$0xff]
    %v5390 = vld [vmem:[#allocation23 + $0xa8] sm:$0xff]
    %v5391 = vld [vmem:[#allocation23 + $0xb0] sm:$0xff]
    %v5392 = vld [vmem:[#allocation23 + $0xb8] sm:$0xff]
    %v5393 = vld [vmem:[#allocation23 + $0xc0] sm:$0xff]
    %v5394 = vld [vmem:[#allocation23 + $0xc8] sm:$0xff]
    %v5395 = vld [vmem:[#allocation23 + $0xd0] sm:$0xff]
    %v5396 = vld [vmem:[#allocation23 + $0xd8] sm:$0xff]
    %v5397 = vld [vmem:[#allocation23 + $0xe0] sm:$0xff]
    %v5398 = vld [vmem:[#allocation23 + $0xe8] sm:$0xff]
    %v5399 = vld [vmem:[#allocation23 + $0xf0] sm:$0xff]
    %v5400 = vld [vmem:[#allocation23 + $0xf8] sm:$0xff]
    %v5401 = vld [vmem:[#allocation23 + $0x100] sm:$0xff]
    %v5402 = vld [vmem:[#allocation23 + $0x108] sm:$0xff]
    %v5403 = vld [vmem:[#allocation23 + $0x110] sm:$0xff]
    %v5404 = vld [vmem:[#allocation23 + $0x118] sm:$0xff]
    %v5405 = vld [vmem:[#allocation23 + $0x120] sm:$0xff]
    %v5406 = vld [vmem:[#allocation23 + $0x128] sm:$0xff]
    %v5407 = vld [vmem:[#allocation23 + $0x130] sm:$0xff]
    %v5408 = vld [vmem:[#allocation23 + $0x138] sm:$0xff]
    %v5409 = vld [vmem:[#allocation23 + $0x140] sm:$0xff]
    %v5410 = vld [vmem:[#allocation23 + $0x148] sm:$0xff]
    %v5411 = vld [vmem:[#allocation23 + $0x150] sm:$0xff]
    %v5412 = vld [vmem:[#allocation23 + $0x158] sm:$0xff]
    %v5413 = vld [vmem:[#allocation23 + $0x160] sm:$0xff]
    %v5414 = vld [vmem:[#allocation23 + $0x168] sm:$0xff]
    %v5415 = vld [vmem:[#allocation23 + $0x170] sm:$0xff]
    %v5416 = vld [vmem:[#allocation23 + $0x178] sm:$0xff]
    %v5417 = vld [vmem:[#allocation23 + $0x180] sm:$0xff]
    %v5418 = vld [vmem:[#allocation23 + $0x188] sm:$0xff]
    %v5419 = vld [vmem:[#allocation23 + $0x190] sm:$0xff]
    %v5420 = vld [vmem:[#allocation23 + $0x198] sm:$0xff]
    %v5421 = vld [vmem:[#allocation23 + $0x1a0] sm:$0xff]
    %v5422 = vld [vmem:[#allocation23 + $0x1a8] sm:$0xff]
    %v5423 = vld [vmem:[#allocation23 + $0x1b0] sm:$0xff]
    %v5424 = vld [vmem:[#allocation23 + $0x1b8] sm:$0xff]
    %v5425 = vld [vmem:[#allocation23 + $0x1c0] sm:$0xff]
    %v5426 = vld [vmem:[#allocation23 + $0x1c8] sm:$0xff]
    %v5427 = vld [vmem:[#allocation23 + $0x1d0] sm:$0xff]
    %v5428 = vld [vmem:[#allocation23 + $0x1d8] sm:$0xff]
    %v5429 = vld [vmem:[#allocation23 + $0x1e0] sm:$0xff]
    %v5430 = vld [vmem:[#allocation23 + $0x1e8] sm:$0xff]
    %v5431 = vld [vmem:[#allocation23 + $0x1f0] sm:$0xff]
    %v5432 = vld [vmem:[#allocation23 + $0x1f8] sm:$0xff]
    %v5433 = vld [vmem:[#allocation23 + $0x200] sm:$0xff]
    %v5434 = vld [vmem:[#allocation23 + $0x208] sm:$0xff]
    %v5435 = vld [vmem:[#allocation23 + $0x210] sm:$0xff]
    %v5436 = vld [vmem:[#allocation23 + $0x218] sm:$0xff]
    %v5437 = vld [vmem:[#allocation23 + $0x220] sm:$0xff]
    %v5438 = vld [vmem:[#allocation23 + $0x228] sm:$0xff]
    %v5439 = vld [vmem:[#allocation23 + $0x230] sm:$0xff]
    %v5440 = vld [vmem:[#allocation23 + $0x238] sm:$0xff]
    %v5441 = vld [vmem:[#allocation23 + $0x240] sm:$0xff]
    %v5442 = vld [vmem:[#allocation23 + $0x248] sm:$0xff]
    %v5443 = vld [vmem:[#allocation23 + $0x250] sm:$0xff]
    %v5444 = vld [vmem:[#allocation23 + $0x258] sm:$0xff]
    %v5445 = vld [vmem:[#allocation23 + $0x260] sm:$0xff]
    %v5446 = vld [vmem:[#allocation23 + $0x268] sm:$0xff]
    %v5447 = vld [vmem:[#allocation23 + $0x270] sm:$0xff]
    %v5448 = vld [vmem:[#allocation23 + $0x278] sm:$0xff]
    %v5449 = vld [vmem:[#allocation23 + $0x280] sm:$0xff]
    %v5450 = vld [vmem:[#allocation23 + $0x288] sm:$0xff]
    %v5451 = vld [vmem:[#allocation23 + $0x290] sm:$0xff]
    %v5452 = vld [vmem:[#allocation23 + $0x298] sm:$0xff]
    %v5453 = vld [vmem:[#allocation23 + $0x2a0] sm:$0xff]
    %v5454 = vld [vmem:[#allocation23 + $0x2a8] sm:$0xff]
    %v5455 = vld [vmem:[#allocation23 + $0x2b0] sm:$0xff]
    %v5456 = vld [vmem:[#allocation23 + $0x2b8] sm:$0xff]
    %v5457 = vld [vmem:[#allocation23 + $0x2c0] sm:$0xff]
    %v5458 = vld [vmem:[#allocation23 + $0x2c8] sm:$0xff]
    %v5459 = vld [vmem:[#allocation23 + $0x2d0] sm:$0xff]
    %v5460 = vld [vmem:[#allocation23 + $0x2d8] sm:$0xff]
    %v5461 = vld [vmem:[#allocation23 + $0x2e0] sm:$0xff]
    %v5462 = vld [vmem:[#allocation23 + $0x2e8] sm:$0xff]
    %v5463 = vld [vmem:[#allocation23 + $0x2f0] sm:$0xff]
    %v5464 = vld [vmem:[#allocation23 + $0x2f8] sm:$0xff]
    %v5465 = vld [vmem:[#allocation23 + $0x300] sm:$0xff]
    %v5466 = vld [vmem:[#allocation23 + $0x308] sm:$0xff]
    %v5467 = vld [vmem:[#allocation23 + $0x310] sm:$0xff]
    %v5468 = vld [vmem:[#allocation23 + $0x318] sm:$0xff]
    %v5469 = vld [vmem:[#allocation23 + $0x320] sm:$0xff]
    %v5470 = vld [vmem:[#allocation23 + $0x328] sm:$0xff]
    %v5471 = vld [vmem:[#allocation23 + $0x330] sm:$0xff]
    %v5472 = vld [vmem:[#allocation23 + $0x338] sm:$0xff]
    %v5473 = vld [vmem:[#allocation23 + $0x340] sm:$0xff]
    %v5474 = vld [vmem:[#allocation23 + $0x348] sm:$0xff]
    %v5475 = vld [vmem:[#allocation23 + $0x350] sm:$0xff]
    %v5476 = vld [vmem:[#allocation23 + $0x358] sm:$0xff]
    %v5477 = vld [vmem:[#allocation23 + $0x360] sm:$0xff]
    %v5478 = vld [vmem:[#allocation23 + $0x368] sm:$0xff]
    %v5479 = vld [vmem:[#allocation23 + $0x370] sm:$0xff]
    %v5480 = vld [vmem:[#allocation23 + $0x378] sm:$0xff]
    %v5481 = vld [vmem:[#allocation23 + $0x380] sm:$0xff]
    %v5482 = vld [vmem:[#allocation23 + $0x388] sm:$0xff]
    %v5483 = vld [vmem:[#allocation23 + $0x390] sm:$0xff]
    %v5484 = vld [vmem:[#allocation23 + $0x398] sm:$0xff]
    %v5485 = vld [vmem:[#allocation23 + $0x3a0] sm:$0xff]
    %v5486 = vld [vmem:[#allocation23 + $0x3a8] sm:$0xff]
    %v5487 = vld [vmem:[#allocation23 + $0x3b0] sm:$0xff]
    %v5488 = vld [vmem:[#allocation23 + $0x3b8] sm:$0xff]
    %v5489 = vld [vmem:[#allocation23 + $0x3c0] sm:$0xff]
    %v5490 = vld [vmem:[#allocation23 + $0x3c8] sm:$0xff]
    %v5491 = vld [vmem:[#allocation23 + $0x3d0] sm:$0xff]
    %v5492 = vld [vmem:[#allocation23 + $0x3d8] sm:$0xff]
    %v5493 = vld [vmem:[#allocation23 + $0x3e0] sm:$0xff]
    %v5494 = vld [vmem:[#allocation23 + $0x3e8] sm:$0xff]
    %v5495 = vld [vmem:[#allocation23 + $0x3f0] sm:$0xff]
    %v5496 = vld [vmem:[#allocation23 + $0x3f8] sm:$0xff]
    %v5497 = vld [vmem:[#allocation23 + $0x400] sm:$0xff]
    %v5498 = vld [vmem:[#allocation23 + $0x408] sm:$0xff]
    %v5499 = vld [vmem:[#allocation23 + $0x410] sm:$0xff]
    %v5500 = vld [vmem:[#allocation23 + $0x418] sm:$0xff]
    %v5501 = vld [vmem:[#allocation23 + $0x420] sm:$0xff]
    %v5502 = vld [vmem:[#allocation23 + $0x428] sm:$0xff]
    %v5503 = vld [vmem:[#allocation23 + $0x430] sm:$0xff]
    %v5504 = vld [vmem:[#allocation23 + $0x438] sm:$0xff]
    %v5505 = vld [vmem:[#allocation23 + $0x440] sm:$0xff]
    %v5506 = vld [vmem:[#allocation23 + $0x448] sm:$0xff]
    %v5507 = vld [vmem:[#allocation23 + $0x450] sm:$0xff]
    %v5508 = vld [vmem:[#allocation23 + $0x458] sm:$0xff]
    %v5509 = vld [vmem:[#allocation23 + $0x460] sm:$0xff]
    %v5510 = vld [vmem:[#allocation23 + $0x468] sm:$0xff]
    %v5511 = vld [vmem:[#allocation23 + $0x470] sm:$0xff]
    %v5512 = vld [vmem:[#allocation23 + $0x478] sm:$0xff]
    %v5513 = vld [vmem:[#allocation23 + $0x480] sm:$0xff]
    %v5514 = vld [vmem:[#allocation23 + $0x488] sm:$0xff]
    %v5515 = vld [vmem:[#allocation23 + $0x490] sm:$0xff]
    %v5516 = vld [vmem:[#allocation23 + $0x498] sm:$0xff]
    %v5517 = vld [vmem:[#allocation23 + $0x4a0] sm:$0xff]
    %v5518 = vld [vmem:[#allocation23 + $0x4a8] sm:$0xff]
    %v5519 = vld [vmem:[#allocation23 + $0x4b0] sm:$0xff]
    %v5520 = vld [vmem:[#allocation23 + $0x4b8] sm:$0xff]
    %v5521 = vld [vmem:[#allocation23 + $0x4c0] sm:$0xff]
    %v5522 = vld [vmem:[#allocation23 + $0x4c8] sm:$0xff]
    %v5523 = vld [vmem:[#allocation23 + $0x4d0] sm:$0xff]
    %v5524 = vld [vmem:[#allocation23 + $0x4d8] sm:$0xff]
    %v5525 = vld [vmem:[#allocation23 + $0x4e0] sm:$0xff]
    %v5526 = vld [vmem:[#allocation23 + $0x4e8] sm:$0xff]
    %v5527 = vld [vmem:[#allocation23 + $0x4f0] sm:$0xff]
    %v5528 = vld [vmem:[#allocation23 + $0x4f8] sm:$0xff]
    %v5529 = vld [vmem:[#allocation23 + $0x500] sm:$0xff]
    %v5530 = vld [vmem:[#allocation23 + $0x508] sm:$0xff]
    %v5531 = vld [vmem:[#allocation23 + $0x510] sm:$0xff]
    %v5532 = vld [vmem:[#allocation23 + $0x518] sm:$0xff]
    %v5533 = vld [vmem:[#allocation23 + $0x520] sm:$0xff]
    %v5534 = vld [vmem:[#allocation23 + $0x528] sm:$0xff]
    %v5535 = vld [vmem:[#allocation23 + $0x530] sm:$0xff]
    %v5536 = vld [vmem:[#allocation23 + $0x538] sm:$0xff]
    %v5537 = vld [vmem:[#allocation23 + $0x540] sm:$0xff]
    %v5538 = vld [vmem:[#allocation23 + $0x548] sm:$0xff]
    %v5539 = vld [vmem:[#allocation23 + $0x550] sm:$0xff]
    %v5540 = vld [vmem:[#allocation23 + $0x558] sm:$0xff]
    %v5541 = vld [vmem:[#allocation23 + $0x560] sm:$0xff]
    %v5542 = vld [vmem:[#allocation23 + $0x568] sm:$0xff]
    %v5543 = vld [vmem:[#allocation23 + $0x570] sm:$0xff]
    %v5544 = vld [vmem:[#allocation23 + $0x578] sm:$0xff]
    %v5545 = vld [vmem:[#allocation23 + $0x580] sm:$0xff]
    %v5546 = vld [vmem:[#allocation23 + $0x588] sm:$0xff]
    %v5547 = vld [vmem:[#allocation23 + $0x590] sm:$0xff]
    %v5548 = vld [vmem:[#allocation23 + $0x598] sm:$0xff]
    %v5549 = vld [vmem:[#allocation23 + $0x5a0] sm:$0xff]
    %v5550 = vld [vmem:[#allocation23 + $0x5a8] sm:$0xff]
    %v5551 = vld [vmem:[#allocation23 + $0x5b0] sm:$0xff]
    %v5552 = vld [vmem:[#allocation23 + $0x5b8] sm:$0xff]
    %v5553 = vld [vmem:[#allocation23 + $0x5c0] sm:$0xff]
    %v5554 = vld [vmem:[#allocation23 + $0x5c8] sm:$0xff]
    %v5555 = vld [vmem:[#allocation23 + $0x5d0] sm:$0xff]
    %v5556 = vld [vmem:[#allocation23 + $0x5d8] sm:$0xff]
    %v5557 = vld [vmem:[#allocation23 + $0x5e0] sm:$0xff]
    %v5558 = vld [vmem:[#allocation23 + $0x5e8] sm:$0xff]
    %v5559 = vld [vmem:[#allocation23 + $0x5f0] sm:$0xff]
    %v5560 = vld [vmem:[#allocation23 + $0x5f8] sm:$0xff]
    %v5561 = vld [vmem:[#allocation25] sm:$0x3f]
    %v5563 = vperm.slane %v5561, 0
    %v5564 = vperm.slane %v5561, 1
    %v5565 = vperm.slane %v5561, 2
    %v5566 = vperm.slane %v5561, 3
    %v5567 = vperm.slane %v5561, 4
    %v5568 = vperm.slane %v5561, 5
    %v5767 = vunpack.c.l.b16 %v5369
    %v5768 = vunpack.c.h.b16 %v5369
    %v5769 = vunpack.c.l.b16 %v5370
    %v5770 = vunpack.c.h.b16 %v5370
    %v5771 = vunpack.c.l.b16 %v5371
    %v5772 = vunpack.c.h.b16 %v5371
    %v5773 = vunpack.c.l.b16 %v5372
    %v5774 = vunpack.c.h.b16 %v5372
    %v5775 = vunpack.c.l.b16 %v5373
    %v5776 = vunpack.c.h.b16 %v5373
    %v5777 = vunpack.c.l.b16 %v5374
    %v5778 = vunpack.c.h.b16 %v5374
    %v5779 = vunpack.c.l.b16 %v5375
    %v5780 = vunpack.c.h.b16 %v5375
    %v5781 = vunpack.c.l.b16 %v5376
    %v5782 = vunpack.c.h.b16 %v5376
    %v5783 = vunpack.c.l.b16 %v5377
    %v5784 = vunpack.c.h.b16 %v5377
    %v5785 = vunpack.c.l.b16 %v5378
    %v5786 = vunpack.c.h.b16 %v5378
    %v5787 = vunpack.c.l.b16 %v5379
    %v5788 = vunpack.c.h.b16 %v5379
    %v5789 = vunpack.c.l.b16 %v5380
    %v5790 = vunpack.c.h.b16 %v5380
    %v5791 = vunpack.c.l.b16 %v5381
    %v5792 = vunpack.c.h.b16 %v5381
    %v5793 = vunpack.c.l.b16 %v5382
    %v5794 = vunpack.c.h.b16 %v5382
    %v5795 = vunpack.c.l.b16 %v5383
    %v5796 = vunpack.c.h.b16 %v5383
    %v5797 = vunpack.c.l.b16 %v5384
    %v5798 = vunpack.c.h.b16 %v5384
    %v5799 = vunpack.c.l.b16 %v5385
    %v5800 = vunpack.c.h.b16 %v5385
    %v5801 = vunpack.c.l.b16 %v5386
    %v5802 = vunpack.c.h.b16 %v5386
    %v5803 = vunpack.c.l.b16 %v5387
    %v5804 = vunpack.c.h.b16 %v5387
    %v5805 = vunpack.c.l.b16 %v5388
    %v5806 = vunpack.c.h.b16 %v5388
    %v5807 = vunpack.c.l.b16 %v5389
    %v5808 = vunpack.c.h.b16 %v5389
    %v5809 = vunpack.c.l.b16 %v5390
    %v5810 = vunpack.c.h.b16 %v5390
    %v5811 = vunpack.c.l.b16 %v5391
    %v5812 = vunpack.c.h.b16 %v5391
    %v5813 = vunpack.c.l.b16 %v5392
    %v5814 = vunpack.c.h.b16 %v5392
    %v5815 = vunpack.c.l.b16 %v5393
    %v5816 = vunpack.c.h.b16 %v5393
    %v5817 = vunpack.c.l.b16 %v5394
    %v5818 = vunpack.c.h.b16 %v5394
    %v5819 = vunpack.c.l.b16 %v5395
    %v5820 = vunpack.c.h.b16 %v5395
    %v5821 = vunpack.c.l.b16 %v5396
    %v5822 = vunpack.c.h.b16 %v5396
    %v5823 = vunpack.c.l.b16 %v5397
    %v5824 = vunpack.c.h.b16 %v5397
    %v5825 = vunpack.c.l.b16 %v5398
    %v5826 = vunpack.c.h.b16 %v5398
    %v5827 = vunpack.c.l.b16 %v5399
    %v5828 = vunpack.c.h.b16 %v5399
    %v5829 = vunpack.c.l.b16 %v5400
    %v5830 = vunpack.c.h.b16 %v5400
    %v5831 = vunpack.c.l.b16 %v5401
    %v5832 = vunpack.c.h.b16 %v5401
    %v5833 = vunpack.c.l.b16 %v5402
    %v5834 = vunpack.c.h.b16 %v5402
    %v5835 = vunpack.c.l.b16 %v5403
    %v5836 = vunpack.c.h.b16 %v5403
    %v5837 = vunpack.c.l.b16 %v5404
    %v5838 = vunpack.c.h.b16 %v5404
    %v5839 = vunpack.c.l.b16 %v5405
    %v5840 = vunpack.c.h.b16 %v5405
    %v5841 = vunpack.c.l.b16 %v5406
    %v5842 = vunpack.c.h.b16 %v5406
    %v5843 = vunpack.c.l.b16 %v5407
    %v5844 = vunpack.c.h.b16 %v5407
    %v5845 = vunpack.c.l.b16 %v5408
    %v5846 = vunpack.c.h.b16 %v5408
    %v5847 = vunpack.c.l.b16 %v5409
    %v5848 = vunpack.c.h.b16 %v5409
    %v5849 = vunpack.c.l.b16 %v5410
    %v5850 = vunpack.c.h.b16 %v5410
    %v5851 = vunpack.c.l.b16 %v5411
    %v5852 = vunpack.c.h.b16 %v5411
    %v5853 = vunpack.c.l.b16 %v5412
    %v5854 = vunpack.c.h.b16 %v5412
    %v5855 = vunpack.c.l.b16 %v5413
    %v5856 = vunpack.c.h.b16 %v5413
    %v5857 = vunpack.c.l.b16 %v5414
    %v5858 = vunpack.c.h.b16 %v5414
    %v5859 = vunpack.c.l.b16 %v5415
    %v5860 = vunpack.c.h.b16 %v5415
    %v5861 = vunpack.c.l.b16 %v5416
    %v5862 = vunpack.c.h.b16 %v5416
    %v5863 = vunpack.c.l.b16 %v5417
    %v5864 = vunpack.c.h.b16 %v5417
    %v5865 = vunpack.c.l.b16 %v5418
    %v5866 = vunpack.c.h.b16 %v5418
    %v5867 = vunpack.c.l.b16 %v5419
    %v5868 = vunpack.c.h.b16 %v5419
    %v5869 = vunpack.c.l.b16 %v5420
    %v5870 = vunpack.c.h.b16 %v5420
    %v5871 = vunpack.c.l.b16 %v5421
    %v5872 = vunpack.c.h.b16 %v5421
    %v5873 = vunpack.c.l.b16 %v5422
    %v5874 = vunpack.c.h.b16 %v5422
    %v5875 = vunpack.c.l.b16 %v5423
    %v5876 = vunpack.c.h.b16 %v5423
    %v5877 = vunpack.c.l.b16 %v5424
    %v5878 = vunpack.c.h.b16 %v5424
    %v5879 = vunpack.c.l.b16 %v5425
    %v5880 = vunpack.c.h.b16 %v5425
    %v5881 = vunpack.c.l.b16 %v5426
    %v5882 = vunpack.c.h.b16 %v5426
    %v5883 = vunpack.c.l.b16 %v5427
    %v5884 = vunpack.c.h.b16 %v5427
    %v5885 = vunpack.c.l.b16 %v5428
    %v5886 = vunpack.c.h.b16 %v5428
    %v5887 = vunpack.c.l.b16 %v5429
    %v5888 = vunpack.c.h.b16 %v5429
    %v5889 = vunpack.c.l.b16 %v5430
    %v5890 = vunpack.c.h.b16 %v5430
    %v5891 = vunpack.c.l.b16 %v5431
    %v5892 = vunpack.c.h.b16 %v5431
    %v5893 = vunpack.c.l.b16 %v5432
    %v5894 = vunpack.c.h.b16 %v5432
    %v5895 = vunpack.c.l.b16 %v5433
    %v5896 = vunpack.c.h.b16 %v5433
    %v5897 = vunpack.c.l.b16 %v5434
    %v5898 = vunpack.c.h.b16 %v5434
    %v5899 = vunpack.c.l.b16 %v5435
    %v5900 = vunpack.c.h.b16 %v5435
    %v5901 = vunpack.c.l.b16 %v5436
    %v5902 = vunpack.c.h.b16 %v5436
    %v5903 = vunpack.c.l.b16 %v5437
    %v5904 = vunpack.c.h.b16 %v5437
    %v5905 = vunpack.c.l.b16 %v5438
    %v5906 = vunpack.c.h.b16 %v5438
    %v5907 = vunpack.c.l.b16 %v5439
    %v5908 = vunpack.c.h.b16 %v5439
    %v5909 = vunpack.c.l.b16 %v5440
    %v5910 = vunpack.c.h.b16 %v5440
    %v5911 = vunpack.c.l.b16 %v5441
    %v5912 = vunpack.c.h.b16 %v5441
    %v5913 = vunpack.c.l.b16 %v5442
    %v5914 = vunpack.c.h.b16 %v5442
    %v5915 = vunpack.c.l.b16 %v5443
    %v5916 = vunpack.c.h.b16 %v5443
    %v5917 = vunpack.c.l.b16 %v5444
    %v5918 = vunpack.c.h.b16 %v5444
    %v5919 = vunpack.c.l.b16 %v5445
    %v5920 = vunpack.c.h.b16 %v5445
    %v5921 = vunpack.c.l.b16 %v5446
    %v5922 = vunpack.c.h.b16 %v5446
    %v5923 = vunpack.c.l.b16 %v5447
    %v5924 = vunpack.c.h.b16 %v5447
    %v5925 = vunpack.c.l.b16 %v5448
    %v5926 = vunpack.c.h.b16 %v5448
    %v5927 = vunpack.c.l.b16 %v5449
    %v5928 = vunpack.c.h.b16 %v5449
    %v5929 = vunpack.c.l.b16 %v5450
    %v5930 = vunpack.c.h.b16 %v5450
    %v5931 = vunpack.c.l.b16 %v5451
    %v5932 = vunpack.c.h.b16 %v5451
    %v5933 = vunpack.c.l.b16 %v5452
    %v5934 = vunpack.c.h.b16 %v5452
    %v5935 = vunpack.c.l.b16 %v5453
    %v5936 = vunpack.c.h.b16 %v5453
    %v5937 = vunpack.c.l.b16 %v5454
    %v5938 = vunpack.c.h.b16 %v5454
    %v5939 = vunpack.c.l.b16 %v5455
    %v5940 = vunpack.c.h.b16 %v5455
    %v5941 = vunpack.c.l.b16 %v5456
    %v5942 = vunpack.c.h.b16 %v5456
    %v5943 = vunpack.c.l.b16 %v5457
    %v5944 = vunpack.c.h.b16 %v5457
    %v5945 = vunpack.c.l.b16 %v5458
    %v5946 = vunpack.c.h.b16 %v5458
    %v5947 = vunpack.c.l.b16 %v5459
    %v5948 = vunpack.c.h.b16 %v5459
    %v5949 = vunpack.c.l.b16 %v5460
    %v5950 = vunpack.c.h.b16 %v5460
    %v5951 = vunpack.c.l.b16 %v5461
    %v5952 = vunpack.c.h.b16 %v5461
    %v5953 = vunpack.c.l.b16 %v5462
    %v5954 = vunpack.c.h.b16 %v5462
    %v5955 = vunpack.c.l.b16 %v5463
    %v5956 = vunpack.c.h.b16 %v5463
    %v5957 = vunpack.c.l.b16 %v5464
    %v5958 = vunpack.c.h.b16 %v5464
    %v5959 = vunpack.c.l.b16 %v5465
    %v5960 = vunpack.c.h.b16 %v5465
    %v5961 = vunpack.c.l.b16 %v5466
    %v5962 = vunpack.c.h.b16 %v5466
    %v5963 = vunpack.c.l.b16 %v5467
    %v5964 = vunpack.c.h.b16 %v5467
    %v5965 = vunpack.c.l.b16 %v5468
    %v5966 = vunpack.c.h.b16 %v5468
    %v5967 = vunpack.c.l.b16 %v5469
    %v5968 = vunpack.c.h.b16 %v5469
    %v5969 = vunpack.c.l.b16 %v5470
    %v5970 = vunpack.c.h.b16 %v5470
    %v5971 = vunpack.c.l.b16 %v5471
    %v5972 = vunpack.c.h.b16 %v5471
    %v5973 = vunpack.c.l.b16 %v5472
    %v5974 = vunpack.c.h.b16 %v5472
    %v5975 = vunpack.c.l.b16 %v5473
    %v5976 = vunpack.c.h.b16 %v5473
    %v5977 = vunpack.c.l.b16 %v5474
    %v5978 = vunpack.c.h.b16 %v5474
    %v5979 = vunpack.c.l.b16 %v5475
    %v5980 = vunpack.c.h.b16 %v5475
    %v5981 = vunpack.c.l.b16 %v5476
    %v5982 = vunpack.c.h.b16 %v5476
    %v5983 = vunpack.c.l.b16 %v5477
    %v5984 = vunpack.c.h.b16 %v5477
    %v5985 = vunpack.c.l.b16 %v5478
    %v5986 = vunpack.c.h.b16 %v5478
    %v5987 = vunpack.c.l.b16 %v5479
    %v5988 = vunpack.c.h.b16 %v5479
    %v5989 = vunpack.c.l.b16 %v5480
    %v5990 = vunpack.c.h.b16 %v5480
    %v5991 = vunpack.c.l.b16 %v5481
    %v5992 = vunpack.c.h.b16 %v5481
    %v5993 = vunpack.c.l.b16 %v5482
    %v5994 = vunpack.c.h.b16 %v5482
    %v5995 = vunpack.c.l.b16 %v5483
    %v5996 = vunpack.c.h.b16 %v5483
    %v5997 = vunpack.c.l.b16 %v5484
    %v5998 = vunpack.c.h.b16 %v5484
    %v5999 = vunpack.c.l.b16 %v5485
    %v6000 = vunpack.c.h.b16 %v5485
    %v6001 = vunpack.c.l.b16 %v5486
    %v6002 = vunpack.c.h.b16 %v5486
    %v6003 = vunpack.c.l.b16 %v5487
    %v6004 = vunpack.c.h.b16 %v5487
    %v6005 = vunpack.c.l.b16 %v5488
    %v6006 = vunpack.c.h.b16 %v5488
    %v6007 = vunpack.c.l.b16 %v5489
    %v6008 = vunpack.c.h.b16 %v5489
    %v6009 = vunpack.c.l.b16 %v5490
    %v6010 = vunpack.c.h.b16 %v5490
    %v6011 = vunpack.c.l.b16 %v5491
    %v6012 = vunpack.c.h.b16 %v5491
    %v6013 = vunpack.c.l.b16 %v5492
    %v6014 = vunpack.c.h.b16 %v5492
    %v6015 = vunpack.c.l.b16 %v5493
    %v6016 = vunpack.c.h.b16 %v5493
    %v6017 = vunpack.c.l.b16 %v5494
    %v6018 = vunpack.c.h.b16 %v5494
    %v6019 = vunpack.c.l.b16 %v5495
    %v6020 = vunpack.c.h.b16 %v5495
    %v6021 = vunpack.c.l.b16 %v5496
    %v6022 = vunpack.c.h.b16 %v5496
    %v6023 = vunpack.c.l.b16 %v5497
    %v6024 = vunpack.c.h.b16 %v5497
    %v6025 = vunpack.c.l.b16 %v5498
    %v6026 = vunpack.c.h.b16 %v5498
    %v6027 = vunpack.c.l.b16 %v5499
    %v6028 = vunpack.c.h.b16 %v5499
    %v6029 = vunpack.c.l.b16 %v5500
    %v6030 = vunpack.c.h.b16 %v5500
    %v6031 = vunpack.c.l.b16 %v5501
    %v6032 = vunpack.c.h.b16 %v5501
    %v6033 = vunpack.c.l.b16 %v5502
    %v6034 = vunpack.c.h.b16 %v5502
    %v6035 = vunpack.c.l.b16 %v5503
    %v6036 = vunpack.c.h.b16 %v5503
    %v6037 = vunpack.c.l.b16 %v5504
    %v6038 = vunpack.c.h.b16 %v5504
    %v6039 = vunpack.c.l.b16 %v5505
    %v6040 = vunpack.c.h.b16 %v5505
    %v6041 = vunpack.c.l.b16 %v5506
    %v6042 = vunpack.c.h.b16 %v5506
    %v6043 = vunpack.c.l.b16 %v5507
    %v6044 = vunpack.c.h.b16 %v5507
    %v6045 = vunpack.c.l.b16 %v5508
    %v6046 = vunpack.c.h.b16 %v5508
    %v6047 = vunpack.c.l.b16 %v5509
    %v6048 = vunpack.c.h.b16 %v5509
    %v6049 = vunpack.c.l.b16 %v5510
    %v6050 = vunpack.c.h.b16 %v5510
    %v6051 = vunpack.c.l.b16 %v5511
    %v6052 = vunpack.c.h.b16 %v5511
    %v6053 = vunpack.c.l.b16 %v5512
    %v6054 = vunpack.c.h.b16 %v5512
    %v6055 = vunpack.c.l.b16 %v5513
    %v6056 = vunpack.c.h.b16 %v5513
    %v6057 = vunpack.c.l.b16 %v5514
    %v6058 = vunpack.c.h.b16 %v5514
    %v6059 = vunpack.c.l.b16 %v5515
    %v6060 = vunpack.c.h.b16 %v5515
    %v6061 = vunpack.c.l.b16 %v5516
    %v6062 = vunpack.c.h.b16 %v5516
    %v6063 = vunpack.c.l.b16 %v5517
    %v6064 = vunpack.c.h.b16 %v5517
    %v6065 = vunpack.c.l.b16 %v5518
    %v6066 = vunpack.c.h.b16 %v5518
    %v6067 = vunpack.c.l.b16 %v5519
    %v6068 = vunpack.c.h.b16 %v5519
    %v6069 = vunpack.c.l.b16 %v5520
    %v6070 = vunpack.c.h.b16 %v5520
    %v6071 = vunpack.c.l.b16 %v5521
    %v6072 = vunpack.c.h.b16 %v5521
    %v6073 = vunpack.c.l.b16 %v5522
    %v6074 = vunpack.c.h.b16 %v5522
    %v6075 = vunpack.c.l.b16 %v5523
    %v6076 = vunpack.c.h.b16 %v5523
    %v6077 = vunpack.c.l.b16 %v5524
    %v6078 = vunpack.c.h.b16 %v5524
    %v6079 = vunpack.c.l.b16 %v5525
    %v6080 = vunpack.c.h.b16 %v5525
    %v6081 = vunpack.c.l.b16 %v5526
    %v6082 = vunpack.c.h.b16 %v5526
    %v6083 = vunpack.c.l.b16 %v5527
    %v6084 = vunpack.c.h.b16 %v5527
    %v6085 = vunpack.c.l.b16 %v5528
    %v6086 = vunpack.c.h.b16 %v5528
    %v6087 = vunpack.c.l.b16 %v5529
    %v6088 = vunpack.c.h.b16 %v5529
    %v6089 = vunpack.c.l.b16 %v5530
    %v6090 = vunpack.c.h.b16 %v5530
    %v6091 = vunpack.c.l.b16 %v5531
    %v6092 = vunpack.c.h.b16 %v5531
    %v6093 = vunpack.c.l.b16 %v5532
    %v6094 = vunpack.c.h.b16 %v5532
    %v6095 = vunpack.c.l.b16 %v5533
    %v6096 = vunpack.c.h.b16 %v5533
    %v6097 = vunpack.c.l.b16 %v5534
    %v6098 = vunpack.c.h.b16 %v5534
    %v6099 = vunpack.c.l.b16 %v5535
    %v6100 = vunpack.c.h.b16 %v5535
    %v6101 = vunpack.c.l.b16 %v5536
    %v6102 = vunpack.c.h.b16 %v5536
    %v6103 = vunpack.c.l.b16 %v5537
    %v6104 = vunpack.c.h.b16 %v5537
    %v6105 = vunpack.c.l.b16 %v5538
    %v6106 = vunpack.c.h.b16 %v5538
    %v6107 = vunpack.c.l.b16 %v5539
    %v6108 = vunpack.c.h.b16 %v5539
    %v6109 = vunpack.c.l.b16 %v5540
    %v6110 = vunpack.c.h.b16 %v5540
    %v6111 = vunpack.c.l.b16 %v5541
    %v6112 = vunpack.c.h.b16 %v5541
    %v6113 = vunpack.c.l.b16 %v5542
    %v6114 = vunpack.c.h.b16 %v5542
    %v6115 = vunpack.c.l.b16 %v5543
    %v6116 = vunpack.c.h.b16 %v5543
    %v6117 = vunpack.c.l.b16 %v5544
    %v6118 = vunpack.c.h.b16 %v5544
    %v6119 = vunpack.c.l.b16 %v5545
    %v6120 = vunpack.c.h.b16 %v5545
    %v6121 = vunpack.c.l.b16 %v5546
    %v6122 = vunpack.c.h.b16 %v5546
    %v6123 = vunpack.c.l.b16 %v5547
    %v6124 = vunpack.c.h.b16 %v5547
    %v6125 = vunpack.c.l.b16 %v5548
    %v6126 = vunpack.c.h.b16 %v5548
    %v6127 = vunpack.c.l.b16 %v5549
    %v6128 = vunpack.c.h.b16 %v5549
    %v6129 = vunpack.c.l.b16 %v5550
    %v6130 = vunpack.c.h.b16 %v5550
    %v6131 = vunpack.c.l.b16 %v5551
    %v6132 = vunpack.c.h.b16 %v5551
    %v6133 = vunpack.c.l.b16 %v5552
    %v6134 = vunpack.c.h.b16 %v5552
    %v6135 = vunpack.c.l.b16 %v5553
    %v6136 = vunpack.c.h.b16 %v5553
    %v6137 = vunpack.c.l.b16 %v5554
    %v6138 = vunpack.c.h.b16 %v5554
    %v6139 = vunpack.c.l.b16 %v5555
    %v6140 = vunpack.c.h.b16 %v5555
    %v6141 = vunpack.c.l.b16 %v5556
    %v6142 = vunpack.c.h.b16 %v5556
    %v6143 = vunpack.c.l.b16 %v5557
    %v6144 = vunpack.c.h.b16 %v5557
    %v6145 = vunpack.c.l.b16 %v5558
    %v6146 = vunpack.c.h.b16 %v5558
    %v6147 = vunpack.c.l.b16 %v5559
    %v6148 = vunpack.c.h.b16 %v5559
    %v6149 = vunpack.c.l.b16 %v5560
    %v6150 = vunpack.c.h.b16 %v5560
    %v6151 = vpack.c.b16 %v5773, %v5767
    %v6152 = vpack.c.b16 %v5774, %v5768
    %v6153 = vpack.c.b16 %v5775, %v5769
    %v6154 = vpack.c.b16 %v5776, %v5770
    %v6155 = vpack.c.b16 %v5777, %v5771
    %v6156 = vpack.c.b16 %v5778, %v5772
    %v6157 = vpack.c.b16 %v5785, %v5779
    %v6158 = vpack.c.b16 %v5786, %v5780
    %v6159 = vpack.c.b16 %v5787, %v5781
    %v6160 = vpack.c.b16 %v5788, %v5782
    %v6161 = vpack.c.b16 %v5789, %v5783
    %v6162 = vpack.c.b16 %v5790, %v5784
    %v6163 = vpack.c.b16 %v5797, %v5791
    %v6164 = vpack.c.b16 %v5798, %v5792
    %v6165 = vpack.c.b16 %v5799, %v5793
    %v6166 = vpack.c.b16 %v5800, %v5794
    %v6167 = vpack.c.b16 %v5801, %v5795
    %v6168 = vpack.c.b16 %v5802, %v5796
    %v6169 = vpack.c.b16 %v5809, %v5803
    %v6170 = vpack.c.b16 %v5810, %v5804
    %v6171 = vpack.c.b16 %v5811, %v5805
    %v6172 = vpack.c.b16 %v5812, %v5806
    %v6173 = vpack.c.b16 %v5813, %v5807
    %v6174 = vpack.c.b16 %v5814, %v5808
    %v6175 = vpack.c.b16 %v5821, %v5815
    %v6176 = vpack.c.b16 %v5822, %v5816
    %v6177 = vpack.c.b16 %v5823, %v5817
    %v6178 = vpack.c.b16 %v5824, %v5818
    %v6179 = vpack.c.b16 %v5825, %v5819
    %v6180 = vpack.c.b16 %v5826, %v5820
    %v6181 = vpack.c.b16 %v5833, %v5827
    %v6182 = vpack.c.b16 %v5834, %v5828
    %v6183 = vpack.c.b16 %v5835, %v5829
    %v6184 = vpack.c.b16 %v5836, %v5830
    %v6185 = vpack.c.b16 %v5837, %v5831
    %v6186 = vpack.c.b16 %v5838, %v5832
    %v6187 = vpack.c.b16 %v5845, %v5839
    %v6188 = vpack.c.b16 %v5846, %v5840
    %v6189 = vpack.c.b16 %v5847, %v5841
    %v6190 = vpack.c.b16 %v5848, %v5842
    %v6191 = vpack.c.b16 %v5849, %v5843
    %v6192 = vpack.c.b16 %v5850, %v5844
    %v6193 = vpack.c.b16 %v5857, %v5851
    %v6194 = vpack.c.b16 %v5858, %v5852
    %v6195 = vpack.c.b16 %v5859, %v5853
    %v6196 = vpack.c.b16 %v5860, %v5854
    %v6197 = vpack.c.b16 %v5861, %v5855
    %v6198 = vpack.c.b16 %v5862, %v5856
    %v6199 = vpack.c.b16 %v5869, %v5863
    %v6200 = vpack.c.b16 %v5870, %v5864
    %v6201 = vpack.c.b16 %v5871, %v5865
    %v6202 = vpack.c.b16 %v5872, %v5866
    %v6203 = vpack.c.b16 %v5873, %v5867
    %v6204 = vpack.c.b16 %v5874, %v5868
    %v6205 = vpack.c.b16 %v5881, %v5875
    %v6206 = vpack.c.b16 %v5882, %v5876
    %v6207 = vpack.c.b16 %v5883, %v5877
    %v6208 = vpack.c.b16 %v5884, %v5878
    %v6209 = vpack.c.b16 %v5885, %v5879
    %v6210 = vpack.c.b16 %v5886, %v5880
    %v6211 = vpack.c.b16 %v5893, %v5887
    %v6212 = vpack.c.b16 %v5894, %v5888
    %v6213 = vpack.c.b16 %v5895, %v5889
    %v6214 = vpack.c.b16 %v5896, %v5890
    %v6215 = vpack.c.b16 %v5897, %v5891
    %v6216 = vpack.c.b16 %v5898, %v5892
    %v6217 = vpack.c.b16 %v5905, %v5899
    %v6218 = vpack.c.b16 %v5906, %v5900
    %v6219 = vpack.c.b16 %v5907, %v5901
    %v6220 = vpack.c.b16 %v5908, %v5902
    %v6221 = vpack.c.b16 %v5909, %v5903
    %v6222 = vpack.c.b16 %v5910, %v5904
    %v6223 = vpack.c.b16 %v5917, %v5911
    %v6224 = vpack.c.b16 %v5918, %v5912
    %v6225 = vpack.c.b16 %v5919, %v5913
    %v6226 = vpack.c.b16 %v5920, %v5914
    %v6227 = vpack.c.b16 %v5921, %v5915
    %v6228 = vpack.c.b16 %v5922, %v5916
    %v6229 = vpack.c.b16 %v5929, %v5923
    %v6230 = vpack.c.b16 %v5930, %v5924
    %v6231 = vpack.c.b16 %v5931, %v5925
    %v6232 = vpack.c.b16 %v5932, %v5926
    %v6233 = vpack.c.b16 %v5933, %v5927
    %v6234 = vpack.c.b16 %v5934, %v5928
    %v6235 = vpack.c.b16 %v5941, %v5935
    %v6236 = vpack.c.b16 %v5942, %v5936
    %v6237 = vpack.c.b16 %v5943, %v5937
    %v6238 = vpack.c.b16 %v5944, %v5938
    %v6239 = vpack.c.b16 %v5945, %v5939
    %v6240 = vpack.c.b16 %v5946, %v5940
    %v6241 = vpack.c.b16 %v5953, %v5947
    %v6242 = vpack.c.b16 %v5954, %v5948
    %v6243 = vpack.c.b16 %v5955, %v5949
    %v6244 = vpack.c.b16 %v5956, %v5950
    %v6245 = vpack.c.b16 %v5957, %v5951
    %v6246 = vpack.c.b16 %v5958, %v5952
    %v6247 = vpack.c.b16 %v5965, %v5959
    %v6248 = vpack.c.b16 %v5966, %v5960
    %v6249 = vpack.c.b16 %v5967, %v5961
    %v6250 = vpack.c.b16 %v5968, %v5962
    %v6251 = vpack.c.b16 %v5969, %v5963
    %v6252 = vpack.c.b16 %v5970, %v5964
    %v6253 = vpack.c.b16 %v5977, %v5971
    %v6254 = vpack.c.b16 %v5978, %v5972
    %v6255 = vpack.c.b16 %v5979, %v5973
    %v6256 = vpack.c.b16 %v5980, %v5974
    %v6257 = vpack.c.b16 %v5981, %v5975
    %v6258 = vpack.c.b16 %v5982, %v5976
    %v6259 = vpack.c.b16 %v5989, %v5983
    %v6260 = vpack.c.b16 %v5990, %v5984
    %v6261 = vpack.c.b16 %v5991, %v5985
    %v6262 = vpack.c.b16 %v5992, %v5986
    %v6263 = vpack.c.b16 %v5993, %v5987
    %v6264 = vpack.c.b16 %v5994, %v5988
    %v6265 = vpack.c.b16 %v6001, %v5995
    %v6266 = vpack.c.b16 %v6002, %v5996
    %v6267 = vpack.c.b16 %v6003, %v5997
    %v6268 = vpack.c.b16 %v6004, %v5998
    %v6269 = vpack.c.b16 %v6005, %v5999
    %v6270 = vpack.c.b16 %v6006, %v6000
    %v6271 = vpack.c.b16 %v6013, %v6007
    %v6272 = vpack.c.b16 %v6014, %v6008
    %v6273 = vpack.c.b16 %v6015, %v6009
    %v6274 = vpack.c.b16 %v6016, %v6010
    %v6275 = vpack.c.b16 %v6017, %v6011
    %v6276 = vpack.c.b16 %v6018, %v6012
    %v6277 = vpack.c.b16 %v6025, %v6019
    %v6278 = vpack.c.b16 %v6026, %v6020
    %v6279 = vpack.c.b16 %v6027, %v6021
    %v6280 = vpack.c.b16 %v6028, %v6022
    %v6281 = vpack.c.b16 %v6029, %v6023
    %v6282 = vpack.c.b16 %v6030, %v6024
    %v6283 = vpack.c.b16 %v6037, %v6031
    %v6284 = vpack.c.b16 %v6038, %v6032
    %v6285 = vpack.c.b16 %v6039, %v6033
    %v6286 = vpack.c.b16 %v6040, %v6034
    %v6287 = vpack.c.b16 %v6041, %v6035
    %v6288 = vpack.c.b16 %v6042, %v6036
    %v6289 = vpack.c.b16 %v6049, %v6043
    %v6290 = vpack.c.b16 %v6050, %v6044
    %v6291 = vpack.c.b16 %v6051, %v6045
    %v6292 = vpack.c.b16 %v6052, %v6046
    %v6293 = vpack.c.b16 %v6053, %v6047
    %v6294 = vpack.c.b16 %v6054, %v6048
    %v6295 = vpack.c.b16 %v6061, %v6055
    %v6296 = vpack.c.b16 %v6062, %v6056
    %v6297 = vpack.c.b16 %v6063, %v6057
    %v6298 = vpack.c.b16 %v6064, %v6058
    %v6299 = vpack.c.b16 %v6065, %v6059
    %v6300 = vpack.c.b16 %v6066, %v6060
    %v6301 = vpack.c.b16 %v6073, %v6067
    %v6302 = vpack.c.b16 %v6074, %v6068
    %v6303 = vpack.c.b16 %v6075, %v6069
    %v6304 = vpack.c.b16 %v6076, %v6070
    %v6305 = vpack.c.b16 %v6077, %v6071
    %v6306 = vpack.c.b16 %v6078, %v6072
    %v6307 = vpack.c.b16 %v6085, %v6079
    %v6308 = vpack.c.b16 %v6086, %v6080
    %v6309 = vpack.c.b16 %v6087, %v6081
    %v6310 = vpack.c.b16 %v6088, %v6082
    %v6311 = vpack.c.b16 %v6089, %v6083
    %v6312 = vpack.c.b16 %v6090, %v6084
    %v6313 = vpack.c.b16 %v6097, %v6091
    %v6314 = vpack.c.b16 %v6098, %v6092
    %v6315 = vpack.c.b16 %v6099, %v6093
    %v6316 = vpack.c.b16 %v6100, %v6094
    %v6317 = vpack.c.b16 %v6101, %v6095
    %v6318 = vpack.c.b16 %v6102, %v6096
    %v6319 = vpack.c.b16 %v6109, %v6103
    %v6320 = vpack.c.b16 %v6110, %v6104
    %v6321 = vpack.c.b16 %v6111, %v6105
    %v6322 = vpack.c.b16 %v6112, %v6106
    %v6323 = vpack.c.b16 %v6113, %v6107
    %v6324 = vpack.c.b16 %v6114, %v6108
    %v6325 = vpack.c.b16 %v6121, %v6115
    %v6326 = vpack.c.b16 %v6122, %v6116
    %v6327 = vpack.c.b16 %v6123, %v6117
    %v6328 = vpack.c.b16 %v6124, %v6118
    %v6329 = vpack.c.b16 %v6125, %v6119
    %v6330 = vpack.c.b16 %v6126, %v6120
    %v6331 = vpack.c.b16 %v6133, %v6127
    %v6332 = vpack.c.b16 %v6134, %v6128
    %v6333 = vpack.c.b16 %v6135, %v6129
    %v6334 = vpack.c.b16 %v6136, %v6130
    %v6335 = vpack.c.b16 %v6137, %v6131
    %v6336 = vpack.c.b16 %v6138, %v6132
    %v6337 = vpack.c.b16 %v6145, %v6139
    %v6338 = vpack.c.b16 %v6146, %v6140
    %v6339 = vpack.c.b16 %v6147, %v6141
    %v6340 = vpack.c.b16 %v6148, %v6142
    %v6341 = vpack.c.b16 %v6149, %v6143
    %v6342 = vpack.c.b16 %v6150, %v6144
    %6535 = vmatpush.bf16.msra.mxu0 %v6193
    %6536 = vmatpush.bf16.msra.mxu0 %v6187
    %6537 = vmatpush.bf16.msra.mxu0 %v6181
    %6538 = vmatpush.bf16.msra.mxu0 %v6175
    %6539 = vmatpush.bf16.msra.mxu0 %v6169
    %6540 = vmatpush.bf16.msra.mxu0 %v6163
    %6541 = vmatpush.bf16.msra.mxu0 %v6157
    %6542 = vmatpush.bf16.msra.mxu0 %v6151
    %6543 = vmatmul.bf16.gmra.mxu0 %v5365
    %v6544 = vpop.f32.mrf.mxu0
    %v6545 = vadd.f32 %v5563, %v6544
    %v6546 = vpop.f32.mrf.mxu0
    %6547 = vdwg.mxu0
    %6548 = vmatpush.bf16.msra.mxu0 %v6241
    %6549 = vmatpush.bf16.msra.mxu0 %v6235
    %6550 = vmatpush.bf16.msra.mxu0 %v6229
    %6551 = vmatpush.bf16.msra.mxu0 %v6223
    %6552 = vmatpush.bf16.msra.mxu0 %v6217
    %6553 = vmatpush.bf16.msra.mxu0 %v6211
    %6554 = vmatpush.bf16.msra.mxu0 %v6205
    %6555 = vmatpush.bf16.msra.mxu0 %v6199
    %6556 = vmatmul.bf16.gmra.mxu0 %v5366
    %v6557 = vpop.f32.mrf.mxu0
    %v6558 = vadd.f32 %v6545, %v6557
    %v6559 = vpop.f32.mrf.mxu0
    %6560 = vdwg.mxu0
    %6561 = vmatpush.bf16.msra.mxu0 %v6289
    %6562 = vmatpush.bf16.msra.mxu0 %v6283
    %6563 = vmatpush.bf16.msra.mxu0 %v6277
    %6564 = vmatpush.bf16.msra.mxu0 %v6271
    %6565 = vmatpush.bf16.msra.mxu0 %v6265
    %6566 = vmatpush.bf16.msra.mxu0 %v6259
    %6567 = vmatpush.bf16.msra.mxu0 %v6253
    %6568 = vmatpush.bf16.msra.mxu0 %v6247
    %6569 = vmatmul.bf16.gmra.mxu0 %v5367
    %v6570 = vpop.f32.mrf.mxu0
    %v6571 = vadd.f32 %v6558, %v6570
    %v6572 = vpop.f32.mrf.mxu0
    %6573 = vdwg.mxu0
    %6574 = vmatpush.bf16.msra.mxu0 %v6337
    %6575 = vmatpush.bf16.msra.mxu0 %v6331
    %6576 = vmatpush.bf16.msra.mxu0 %v6325
    %6577 = vmatpush.bf16.msra.mxu0 %v6319
    %6578 = vmatpush.bf16.msra.mxu0 %v6313
    %6579 = vmatpush.bf16.msra.mxu0 %v6307
    %6580 = vmatpush.bf16.msra.mxu0 %v6301
    %6581 = vmatpush.bf16.msra.mxu0 %v6295
    %6582 = vmatmul.bf16.gmra.mxu0 %v5368
    %v6583 = vpop.f32.mrf.mxu0
    %v6584 = vadd.f32 %v6571, %v6583
    %v6585 = vpop.f32.mrf.mxu0
    %6586 = vdwg.mxu0
    %6587 = vmatpush.bf16.msra.mxu0 %v6194
    %6588 = vmatpush.bf16.msra.mxu0 %v6188
    %6589 = vmatpush.bf16.msra.mxu0 %v6182
    %6590 = vmatpush.bf16.msra.mxu0 %v6176
    %6591 = vmatpush.bf16.msra.mxu0 %v6170
    %6592 = vmatpush.bf16.msra.mxu0 %v6164
    %6593 = vmatpush.bf16.msra.mxu0 %v6158
    %6594 = vmatpush.bf16.msra.mxu0 %v6152
    %6595 = vmatmul.bf16.gmra.mxu0 %v5365
    %v6596 = vpop.f32.mrf.mxu0
    %v6597 = vadd.f32 %v5564, %v6596
    %v6598 = vpop.f32.mrf.mxu0
    %6599 = vdwg.mxu0
    %6600 = vmatpush.bf16.msra.mxu0 %v6242
    %6601 = vmatpush.bf16.msra.mxu0 %v6236
    %6602 = vmatpush.bf16.msra.mxu0 %v6230
    %6603 = vmatpush.bf16.msra.mxu0 %v6224
    %6604 = vmatpush.bf16.msra.mxu0 %v6218
    %6605 = vmatpush.bf16.msra.mxu0 %v6212
    %6606 = vmatpush.bf16.msra.mxu0 %v6206
    %6607 = vmatpush.bf16.msra.mxu0 %v6200
    %6608 = vmatmul.bf16.gmra.mxu0 %v5366
    %v6609 = vpop.f32.mrf.mxu0
    %v6610 = vadd.f32 %v6597, %v6609
    %v6611 = vpop.f32.mrf.mxu0
    %6612 = vdwg.mxu0
    %6613 = vmatpush.bf16.msra.mxu0 %v6290
    %6614 = vmatpush.bf16.msra.mxu0 %v6284
    %6615 = vmatpush.bf16.msra.mxu0 %v6278
    %6616 = vmatpush.bf16.msra.mxu0 %v6272
    %6617 = vmatpush.bf16.msra.mxu0 %v6266
    %6618 = vmatpush.bf16.msra.mxu0 %v6260
    %6619 = vmatpush.bf16.msra.mxu0 %v6254
    %6620 = vmatpush.bf16.msra.mxu0 %v6248
    %6621 = vmatmul.bf16.gmra.mxu0 %v5367
    %v6622 = vpop.f32.mrf.mxu0
    %v6623 = vadd.f32 %v6610, %v6622
    %v6624 = vpop.f32.mrf.mxu0
    %6625 = vdwg.mxu0
    %6626 = vmatpush.bf16.msra.mxu0 %v6338
    %6627 = vmatpush.bf16.msra.mxu0 %v6332
    %6628 = vmatpush.bf16.msra.mxu0 %v6326
    %6629 = vmatpush.bf16.msra.mxu0 %v6320
    %6630 = vmatpush.bf16.msra.mxu0 %v6314
    %6631 = vmatpush.bf16.msra.mxu0 %v6308
    %6632 = vmatpush.bf16.msra.mxu0 %v6302
    %6633 = vmatpush.bf16.msra.mxu0 %v6296
    %6634 = vmatmul.bf16.gmra.mxu0 %v5368
    %v6635 = vpop.f32.mrf.mxu0
    %v6636 = vadd.f32 %v6623, %v6635
    %v6637 = vpop.f32.mrf.mxu0
    %6638 = vdwg.mxu0
    %6639 = vmatpush.bf16.msra.mxu0 %v6195
    %6640 = vmatpush.bf16.msra.mxu0 %v6189
    %6641 = vmatpush.bf16.msra.mxu0 %v6183
    %6642 = vmatpush.bf16.msra.mxu0 %v6177
    %6643 = vmatpush.bf16.msra.mxu0 %v6171
    %6644 = vmatpush.bf16.msra.mxu0 %v6165
    %6645 = vmatpush.bf16.msra.mxu0 %v6159
    %6646 = vmatpush.bf16.msra.mxu0 %v6153
    %6647 = vmatmul.bf16.gmra.mxu0 %v5365
    %v6648 = vpop.f32.mrf.mxu0
    %v6649 = vadd.f32 %v5565, %v6648
    %v6650 = vpop.f32.mrf.mxu0
    %6651 = vdwg.mxu0
    %6652 = vmatpush.bf16.msra.mxu0 %v6243
    %6653 = vmatpush.bf16.msra.mxu0 %v6237
    %6654 = vmatpush.bf16.msra.mxu0 %v6231
    %6655 = vmatpush.bf16.msra.mxu0 %v6225
    %6656 = vmatpush.bf16.msra.mxu0 %v6219
    %6657 = vmatpush.bf16.msra.mxu0 %v6213
    %6658 = vmatpush.bf16.msra.mxu0 %v6207
    %6659 = vmatpush.bf16.msra.mxu0 %v6201
    %6660 = vmatmul.bf16.gmra.mxu0 %v5366
    %v6661 = vpop.f32.mrf.mxu0
    %v6662 = vadd.f32 %v6649, %v6661
    %v6663 = vpop.f32.mrf.mxu0
    %6664 = vdwg.mxu0
    %6665 = vmatpush.bf16.msra.mxu0 %v6291
    %6666 = vmatpush.bf16.msra.mxu0 %v6285
    %6667 = vmatpush.bf16.msra.mxu0 %v6279
    %6668 = vmatpush.bf16.msra.mxu0 %v6273
    %6669 = vmatpush.bf16.msra.mxu0 %v6267
    %6670 = vmatpush.bf16.msra.mxu0 %v6261
    %6671 = vmatpush.bf16.msra.mxu0 %v6255
    %6672 = vmatpush.bf16.msra.mxu0 %v6249
    %6673 = vmatmul.bf16.gmra.mxu0 %v5367
    %v6674 = vpop.f32.mrf.mxu0
    %v6675 = vadd.f32 %v6662, %v6674
    %v6676 = vpop.f32.mrf.mxu0
    %6677 = vdwg.mxu0
    %6678 = vmatpush.bf16.msra.mxu0 %v6339
    %6679 = vmatpush.bf16.msra.mxu0 %v6333
    %6680 = vmatpush.bf16.msra.mxu0 %v6327
    %6681 = vmatpush.bf16.msra.mxu0 %v6321
    %6682 = vmatpush.bf16.msra.mxu0 %v6315
    %6683 = vmatpush.bf16.msra.mxu0 %v6309
    %6684 = vmatpush.bf16.msra.mxu0 %v6303
    %6685 = vmatpush.bf16.msra.mxu0 %v6297
    %6686 = vmatmul.bf16.gmra.mxu0 %v5368
    %v6687 = vpop.f32.mrf.mxu0
    %v6688 = vadd.f32 %v6675, %v6687
    %v6689 = vpop.f32.mrf.mxu0
    %6690 = vdwg.mxu0
    %6691 = vmatpush.bf16.msra.mxu0 %v6196
    %6692 = vmatpush.bf16.msra.mxu0 %v6190
    %6693 = vmatpush.bf16.msra.mxu0 %v6184
    %6694 = vmatpush.bf16.msra.mxu0 %v6178
    %6695 = vmatpush.bf16.msra.mxu0 %v6172
    %6696 = vmatpush.bf16.msra.mxu0 %v6166
    %6697 = vmatpush.bf16.msra.mxu0 %v6160
    %6698 = vmatpush.bf16.msra.mxu0 %v6154
    %6699 = vmatmul.bf16.gmra.mxu0 %v5365
    %v6700 = vpop.f32.mrf.mxu0
    %v6701 = vadd.f32 %v5566, %v6700
    %v6702 = vpop.f32.mrf.mxu0
    %6703 = vdwg.mxu0
    %6704 = vmatpush.bf16.msra.mxu0 %v6244
    %6705 = vmatpush.bf16.msra.mxu0 %v6238
    %6706 = vmatpush.bf16.msra.mxu0 %v6232
    %6707 = vmatpush.bf16.msra.mxu0 %v6226
    %6708 = vmatpush.bf16.msra.mxu0 %v6220
    %6709 = vmatpush.bf16.msra.mxu0 %v6214
    %6710 = vmatpush.bf16.msra.mxu0 %v6208
    %6711 = vmatpush.bf16.msra.mxu0 %v6202
    %6712 = vmatmul.bf16.gmra.mxu0 %v5366
    %v6713 = vpop.f32.mrf.mxu0
    %v6714 = vadd.f32 %v6701, %v6713
    %v6715 = vpop.f32.mrf.mxu0
    %6716 = vdwg.mxu0
    %6717 = vmatpush.bf16.msra.mxu0 %v6292
    %6718 = vmatpush.bf16.msra.mxu0 %v6286
    %6719 = vmatpush.bf16.msra.mxu0 %v6280
    %6720 = vmatpush.bf16.msra.mxu0 %v6274
    %6721 = vmatpush.bf16.msra.mxu0 %v6268
    %6722 = vmatpush.bf16.msra.mxu0 %v6262
    %6723 = vmatpush.bf16.msra.mxu0 %v6256
    %6724 = vmatpush.bf16.msra.mxu0 %v6250
    %6725 = vmatmul.bf16.gmra.mxu0 %v5367
    %v6726 = vpop.f32.mrf.mxu0
    %v6727 = vadd.f32 %v6714, %v6726
    %v6728 = vpop.f32.mrf.mxu0
    %6729 = vdwg.mxu0
    %6730 = vmatpush.bf16.msra.mxu0 %v6340
    %6731 = vmatpush.bf16.msra.mxu0 %v6334
    %6732 = vmatpush.bf16.msra.mxu0 %v6328
    %6733 = vmatpush.bf16.msra.mxu0 %v6322
    %6734 = vmatpush.bf16.msra.mxu0 %v6316
    %6735 = vmatpush.bf16.msra.mxu0 %v6310
    %6736 = vmatpush.bf16.msra.mxu0 %v6304
    %6737 = vmatpush.bf16.msra.mxu0 %v6298
    %6738 = vmatmul.bf16.gmra.mxu0 %v5368
    %v6739 = vpop.f32.mrf.mxu0
    %v6740 = vadd.f32 %v6727, %v6739
    %v6741 = vpop.f32.mrf.mxu0
    %6742 = vdwg.mxu0
    %6743 = vmatpush.bf16.msra.mxu0 %v6197
    %6744 = vmatpush.bf16.msra.mxu0 %v6191
    %6745 = vmatpush.bf16.msra.mxu0 %v6185
    %6746 = vmatpush.bf16.msra.mxu0 %v6179
    %6747 = vmatpush.bf16.msra.mxu0 %v6173
    %6748 = vmatpush.bf16.msra.mxu0 %v6167
    %6749 = vmatpush.bf16.msra.mxu0 %v6161
    %6750 = vmatpush.bf16.msra.mxu0 %v6155
    %6751 = vmatmul.bf16.gmra.mxu0 %v5365
    %v6752 = vpop.f32.mrf.mxu0
    %v6753 = vadd.f32 %v5567, %v6752
    %v6754 = vpop.f32.mrf.mxu0
    %6755 = vdwg.mxu0
    %6756 = vmatpush.bf16.msra.mxu0 %v6245
    %6757 = vmatpush.bf16.msra.mxu0 %v6239
    %6758 = vmatpush.bf16.msra.mxu0 %v6233
    %6759 = vmatpush.bf16.msra.mxu0 %v6227
    %6760 = vmatpush.bf16.msra.mxu0 %v6221
    %6761 = vmatpush.bf16.msra.mxu0 %v6215
    %6762 = vmatpush.bf16.msra.mxu0 %v6209
    %6763 = vmatpush.bf16.msra.mxu0 %v6203
    %6764 = vmatmul.bf16.gmra.mxu0 %v5366
    %v6765 = vpop.f32.mrf.mxu0
    %v6766 = vadd.f32 %v6753, %v6765
    %v6767 = vpop.f32.mrf.mxu0
    %6768 = vdwg.mxu0
    %6769 = vmatpush.bf16.msra.mxu0 %v6293
    %6770 = vmatpush.bf16.msra.mxu0 %v6287
    %6771 = vmatpush.bf16.msra.mxu0 %v6281
    %6772 = vmatpush.bf16.msra.mxu0 %v6275
    %6773 = vmatpush.bf16.msra.mxu0 %v6269
    %6774 = vmatpush.bf16.msra.mxu0 %v6263
    %6775 = vmatpush.bf16.msra.mxu0 %v6257
    %6776 = vmatpush.bf16.msra.mxu0 %v6251
    %6777 = vmatmul.bf16.gmra.mxu0 %v5367
    %v6778 = vpop.f32.mrf.mxu0
    %v6779 = vadd.f32 %v6766, %v6778
    %v6780 = vpop.f32.mrf.mxu0
    %6781 = vdwg.mxu0
    %6782 = vmatpush.bf16.msra.mxu0 %v6341
    %6783 = vmatpush.bf16.msra.mxu0 %v6335
    %6784 = vmatpush.bf16.msra.mxu0 %v6329
    %6785 = vmatpush.bf16.msra.mxu0 %v6323
    %6786 = vmatpush.bf16.msra.mxu0 %v6317
    %6787 = vmatpush.bf16.msra.mxu0 %v6311
    %6788 = vmatpush.bf16.msra.mxu0 %v6305
    %6789 = vmatpush.bf16.msra.mxu0 %v6299
    %6790 = vmatmul.bf16.gmra.mxu0 %v5368
    %v6791 = vpop.f32.mrf.mxu0
    %v6792 = vadd.f32 %v6779, %v6791
    %v6793 = vpop.f32.mrf.mxu0
    %6794 = vdwg.mxu0
    %6795 = vmatpush.bf16.msra.mxu0 %v6198
    %6796 = vmatpush.bf16.msra.mxu0 %v6192
    %6797 = vmatpush.bf16.msra.mxu0 %v6186
    %6798 = vmatpush.bf16.msra.mxu0 %v6180
    %6799 = vmatpush.bf16.msra.mxu0 %v6174
    %6800 = vmatpush.bf16.msra.mxu0 %v6168
    %6801 = vmatpush.bf16.msra.mxu0 %v6162
    %6802 = vmatpush.bf16.msra.mxu0 %v6156
    %6803 = vmatmul.bf16.gmra.mxu0 %v5365
    %v6804 = vpop.f32.mrf.mxu0
    %v6805 = vadd.f32 %v5568, %v6804
    %v6806 = vpop.f32.mrf.mxu0
    %6807 = vdwg.mxu0
    %6808 = vmatpush.bf16.msra.mxu0 %v6246
    %6809 = vmatpush.bf16.msra.mxu0 %v6240
    %6810 = vmatpush.bf16.msra.mxu0 %v6234
    %6811 = vmatpush.bf16.msra.mxu0 %v6228
    %6812 = vmatpush.bf16.msra.mxu0 %v6222
    %6813 = vmatpush.bf16.msra.mxu0 %v6216
    %6814 = vmatpush.bf16.msra.mxu0 %v6210
    %6815 = vmatpush.bf16.msra.mxu0 %v6204
    %6816 = vmatmul.bf16.gmra.mxu0 %v5366
    %v6817 = vpop.f32.mrf.mxu0
    %v6818 = vadd.f32 %v6805, %v6817
    %v6819 = vpop.f32.mrf.mxu0
    %6820 = vdwg.mxu0
    %6821 = vmatpush.bf16.msra.mxu0 %v6294
    %6822 = vmatpush.bf16.msra.mxu0 %v6288
    %6823 = vmatpush.bf16.msra.mxu0 %v6282
    %6824 = vmatpush.bf16.msra.mxu0 %v6276
    %6825 = vmatpush.bf16.msra.mxu0 %v6270
    %6826 = vmatpush.bf16.msra.mxu0 %v6264
    %6827 = vmatpush.bf16.msra.mxu0 %v6258
    %6828 = vmatpush.bf16.msra.mxu0 %v6252
    %6829 = vmatmul.bf16.gmra.mxu0 %v5367
    %v6830 = vpop.f32.mrf.mxu0
    %v6831 = vadd.f32 %v6818, %v6830
    %v6832 = vpop.f32.mrf.mxu0
    %6833 = vdwg.mxu0
    %6834 = vmatpush.bf16.msra.mxu0 %v6342
    %6835 = vmatpush.bf16.msra.mxu0 %v6336
    %6836 = vmatpush.bf16.msra.mxu0 %v6330
    %6837 = vmatpush.bf16.msra.mxu0 %v6324
    %6838 = vmatpush.bf16.msra.mxu0 %v6318
    %6839 = vmatpush.bf16.msra.mxu0 %v6312
    %6840 = vmatpush.bf16.msra.mxu0 %v6306
    %6841 = vmatpush.bf16.msra.mxu0 %v6300
    %6842 = vmatmul.bf16.gmra.mxu0 %v5368
    %v6843 = vpop.f32.mrf.mxu0
    %v6844 = vadd.f32 %v6831, %v6843
    %v6845 = vpop.f32.mrf.mxu0
    %6846 = vdwg.mxu0
    %v6847 = vmax.f32 %v6584, 0.0
    %v6848 = vmax.f32 %v6636, 0.0
    %v6849 = vmax.f32 %v6688, 0.0
    %v6850 = vmax.f32 %v6740, 0.0
    %v6851 = vmax.f32 %v6792, 0.0
    %v6852 = vmax.f32 %v6844, 0.0
    %v6859 = vrot.slane %v6848, 6
    %v6860 = vrot.slane %v6849, 4
    %v6861 = vrot.slane %v6850, 2
    %v6862 = vrot.slane %v6852, 6
    %v6863 = vsel %vm4595, %v6847, %v6859
    %vm6864 = vcmask 1045508
    %v6865 = vsel %vm6864, %v6860, %v6861
    %vm6866 = vcmask 1043456
    %v6867 = vsel %vm6866, %v6863, %v6865
    %v6868 = vsel %vm4595, %v6851, %v6862
    %6871 = vst [vmem:[#allocation34] sm:$0xff] %v6867
    %6872 = vst [vmem:[#allocation34 + $0x8] sm:$0xf] %v6868
    %v6873 = vld [vmem:[#allocation26] sm:$0xf]
    %v6874 = vld [vmem:[#allocation26 + $0x4] sm:$0xf]
    %v6875 = vld [vmem:[#allocation26 + $0x8] sm:$0xf]
    %v6876 = vld [vmem:[#allocation26 + $0xc] sm:$0xf]
    %v6877 = vld [vmem:[#allocation26 + $0x10] sm:$0xf]
    %v6878 = vld [vmem:[#allocation26 + $0x14] sm:$0xf]
    %v6879 = vld [vmem:[#allocation26 + $0x18] sm:$0xf]
    %v6880 = vld [vmem:[#allocation26 + $0x1c] sm:$0xf]
    %v6881 = vld [vmem:[#allocation26 + $0x20] sm:$0xf]
    %v6882 = vld [vmem:[#allocation26 + $0x24] sm:$0xf]
    %v6883 = vld [vmem:[#allocation26 + $0x28] sm:$0xf]
    %v6884 = vld [vmem:[#allocation26 + $0x2c] sm:$0xf]
    %v6885 = vld [vmem:[#allocation26 + $0x30] sm:$0xf]
    %v6886 = vld [vmem:[#allocation26 + $0x34] sm:$0xf]
    %v6887 = vld [vmem:[#allocation26 + $0x38] sm:$0xf]
    %v6888 = vld [vmem:[#allocation26 + $0x3c] sm:$0xf]
    %v6889 = vld [vmem:[#allocation26 + $0x40] sm:$0xf]
    %v6890 = vld [vmem:[#allocation26 + $0x44] sm:$0xf]
    %v6891 = vld [vmem:[#allocation26 + $0x48] sm:$0xf]
    %v6892 = vld [vmem:[#allocation26 + $0x4c] sm:$0xf]
    %v6893 = vld [vmem:[#allocation26 + $0x50] sm:$0xf]
    %v6894 = vld [vmem:[#allocation26 + $0x54] sm:$0xf]
    %v6895 = vld [vmem:[#allocation26 + $0x58] sm:$0xf]
    %v6896 = vld [vmem:[#allocation26 + $0x5c] sm:$0xf]
    %v6897 = vld [vmem:[#allocation26 + $0x60] sm:$0xf]
    %v6898 = vld [vmem:[#allocation26 + $0x64] sm:$0xf]
    %v6899 = vld [vmem:[#allocation26 + $0x68] sm:$0xf]
    %v6900 = vld [vmem:[#allocation26 + $0x6c] sm:$0xf]
    %v6901 = vld [vmem:[#allocation26 + $0x70] sm:$0xf]
    %v6902 = vld [vmem:[#allocation26 + $0x74] sm:$0xf]
    %v6903 = vld [vmem:[#allocation26 + $0x78] sm:$0xf]
    %v6904 = vld [vmem:[#allocation26 + $0x7c] sm:$0xf]
    %v6905 = vld [vmem:[#allocation28] sm:$0x1]
    %v6907 = vperm.slane %v6905, 0
    %v6941 = vunpack.c.l.b16 %v6873
    %v6942 = vunpack.c.l.b16 %v6874
    %v6943 = vunpack.c.l.b16 %v6875
    %v6944 = vunpack.c.l.b16 %v6876
    %v6945 = vunpack.c.l.b16 %v6877
    %v6946 = vunpack.c.l.b16 %v6878
    %v6947 = vunpack.c.l.b16 %v6879
    %v6948 = vunpack.c.l.b16 %v6880
    %v6949 = vunpack.c.l.b16 %v6881
    %v6950 = vunpack.c.l.b16 %v6882
    %v6951 = vunpack.c.l.b16 %v6883
    %v6952 = vunpack.c.l.b16 %v6884
    %v6953 = vunpack.c.l.b16 %v6885
    %v6954 = vunpack.c.l.b16 %v6886
    %v6955 = vunpack.c.l.b16 %v6887
    %v6956 = vunpack.c.l.b16 %v6888
    %v6957 = vunpack.c.l.b16 %v6889
    %v6958 = vunpack.c.l.b16 %v6890
    %v6959 = vunpack.c.l.b16 %v6891
    %v6960 = vunpack.c.l.b16 %v6892
    %v6961 = vunpack.c.l.b16 %v6893
    %v6962 = vunpack.c.l.b16 %v6894
    %v6963 = vunpack.c.l.b16 %v6895
    %v6964 = vunpack.c.l.b16 %v6896
    %v6965 = vunpack.c.l.b16 %v6897
    %v6966 = vunpack.c.l.b16 %v6898
    %v6967 = vunpack.c.l.b16 %v6899
    %v6968 = vunpack.c.l.b16 %v6900
    %v6969 = vunpack.c.l.b16 %v6901
    %v6970 = vunpack.c.l.b16 %v6902
    %v6971 = vunpack.c.l.b16 %v6903
    %v6972 = vunpack.c.l.b16 %v6904
    %v6973 = vpack.c.b16 %v6942, %v6941
    %v6974 = vpack.c.b16 %v6944, %v6943
    %v6975 = vpack.c.b16 %v6946, %v6945
    %v6976 = vpack.c.b16 %v6948, %v6947
    %v6977 = vpack.c.b16 %v6950, %v6949
    %v6978 = vpack.c.b16 %v6952, %v6951
    %v6979 = vpack.c.b16 %v6954, %v6953
    %v6980 = vpack.c.b16 %v6956, %v6955
    %v6981 = vpack.c.b16 %v6958, %v6957
    %v6982 = vpack.c.b16 %v6960, %v6959
    %v6983 = vpack.c.b16 %v6962, %v6961
    %v6984 = vpack.c.b16 %v6964, %v6963
    %v6985 = vpack.c.b16 %v6966, %v6965
    %v6986 = vpack.c.b16 %v6968, %v6967
    %v6987 = vpack.c.b16 %v6970, %v6969
    %v6988 = vpack.c.b16 %v6972, %v6971
    %7005 = vmatpush.bf16.msra.mxu0 %v6980
    %7006 = vmatpush.bf16.msra.mxu0 %v6979
    %7007 = vmatpush.bf16.msra.mxu0 %v6978
    %7008 = vmatpush.bf16.msra.mxu0 %v6977
    %7009 = vmatpush.bf16.msra.mxu0 %v6976
    %7010 = vmatpush.bf16.msra.mxu0 %v6975
    %7011 = vmatpush.bf16.msra.mxu0 %v6974
    %7012 = vmatpush.bf16.msra.mxu0 %v6973
    %7013 = vmatmul.bf16.gmra.mxu0 %v4599
    %v7014 = vpop.f32.mrf.mxu0
    %v7015 = vadd.f32 %v6907, %v7014
    %v7016 = vpop.f32.mrf.mxu0
    %7017 = vdwg.mxu0
    %7018 = vmatpush.bf16.msra.mxu0 %v6988
    %7019 = vmatpush.bf16.msra.mxu0 %v6987
    %7020 = vmatpush.bf16.msra.mxu0 %v6986
    %7021 = vmatpush.bf16.msra.mxu0 %v6985
    %7022 = vmatpush.bf16.msra.mxu0 %v6984
    %7023 = vmatpush.bf16.msra.mxu0 %v6983
    %7024 = vmatpush.bf16.msra.mxu0 %v6982
    %7025 = vmatpush.bf16.msra.mxu0 %v6981
    %7026 = vmatmul.bf16.gmra.mxu0 %v4600
    %v7027 = vpop.f32.mrf.mxu0
    %v7028 = vadd.f32 %v7015, %v7027
    %v7029 = vpop.f32.mrf.mxu0
    %7030 = vdwg.mxu0
    %v7031 = vmax.f32 %v7028, 0.0
    %v7032 = vpack.c.bf16 %v7031, %v7031
    %v7033 = vld [vmem:[%s18] sm:$0xf]
    %v7034 = vld [vmem:[%s18 + $0x4] sm:$0xf]
    %v7035 = vld [vmem:[%s18 + $0x8] sm:$0xf]
    %v7036 = vld [vmem:[%s18 + $0xc] sm:$0xf]
    %v7037 = vld [vmem:[%s18 + $0x10] sm:$0xf]
    %v7038 = vld [vmem:[%s18 + $0x14] sm:$0xf]
    %v7039 = vld [vmem:[%s18 + $0x18] sm:$0xf]
    %v7040 = vld [vmem:[%s18 + $0x1c] sm:$0xf]
    %v7041 = vld [vmem:[%s18 + $0x20] sm:$0xf]
    %v7042 = vld [vmem:[%s18 + $0x24] sm:$0xf]
    %v7043 = vld [vmem:[%s18 + $0x28] sm:$0xf]
    %v7044 = vld [vmem:[%s18 + $0x2c] sm:$0xf]
    %v7045 = vld [vmem:[%s18 + $0x30] sm:$0xf]
    %v7046 = vld [vmem:[%s18 + $0x34] sm:$0xf]
    %v7047 = vld [vmem:[%s18 + $0x38] sm:$0xf]
    %v7048 = vld [vmem:[%s18 + $0x3c] sm:$0xf]
    %v7049 = vld [vmem:[#allocation29] sm:$0x1]
    %v7051 = vperm.slane %v7049, 0
    %v7069 = vunpack.c.l.b16 %v7033
    %v7070 = vunpack.c.l.b16 %v7034
    %v7071 = vunpack.c.l.b16 %v7035
    %v7072 = vunpack.c.l.b16 %v7036
    %v7073 = vunpack.c.l.b16 %v7037
    %v7074 = vunpack.c.l.b16 %v7038
    %v7075 = vunpack.c.l.b16 %v7039
    %v7076 = vunpack.c.l.b16 %v7040
    %v7077 = vunpack.c.l.b16 %v7041
    %v7078 = vunpack.c.l.b16 %v7042
    %v7079 = vunpack.c.l.b16 %v7043
    %v7080 = vunpack.c.l.b16 %v7044
    %v7081 = vunpack.c.l.b16 %v7045
    %v7082 = vunpack.c.l.b16 %v7046
    %v7083 = vunpack.c.l.b16 %v7047
    %v7084 = vunpack.c.l.b16 %v7048
    %v7085 = vpack.c.b16 %v7070, %v7069
    %v7086 = vpack.c.b16 %v7072, %v7071
    %v7087 = vpack.c.b16 %v7074, %v7073
    %v7088 = vpack.c.b16 %v7076, %v7075
    %v7089 = vpack.c.b16 %v7078, %v7077
    %v7090 = vpack.c.b16 %v7080, %v7079
    %v7091 = vpack.c.b16 %v7082, %v7081
    %v7092 = vpack.c.b16 %v7084, %v7083
    %7101 = vmatpush.bf16.msra.mxu0 %v7092
    %7102 = vmatpush.bf16.msra.mxu0 %v7091
    %7103 = vmatpush.bf16.msra.mxu0 %v7090
    %7104 = vmatpush.bf16.msra.mxu0 %v7089
    %7105 = vmatpush.bf16.msra.mxu0 %v7088
    %7106 = vmatpush.bf16.msra.mxu0 %v7087
    %7107 = vmatpush.bf16.msra.mxu0 %v7086
    %7108 = vmatpush.bf16.msra.mxu0 %v7085
    %7109 = vmatmul.bf16.gmra.mxu0 %v7032
    %v7110 = vpop.f32.mrf.mxu0
    %v7111 = vadd.f32 %v7051, %v7110
    %v7112 = vpop.f32.mrf.mxu0
    %7113 = vdwg.mxu0
    %v7114 = vmax.f32 %v7111, 0.0
    %v7115 = vpack.c.bf16 %v7114, %v7114
    %v7116 = vld [vmem:[#allocation31] sm:$0xf]
    %v7117 = vld [vmem:[#allocation31 + $0x4] sm:$0xf]
    %v7118 = vld [vmem:[#allocation31 + $0x8] sm:$0xf]
    %v7119 = vld [vmem:[#allocation31 + $0xc] sm:$0xf]
    %v7120 = vld [vmem:[#allocation31 + $0x10] sm:$0xf]
    %v7121 = vld [vmem:[#allocation31 + $0x14] sm:$0xf]
    %v7122 = vld [vmem:[#allocation31 + $0x18] sm:$0xf]
    %v7123 = vld [vmem:[#allocation31 + $0x1c] sm:$0xf]
    %v7124 = vld [vmem:[#allocation32] sm:$0x1]
    %v7126 = vperm.slane %v7124, 0
    %v7136 = vunpack.c.l.b16 %v7116
    %v7137 = vunpack.c.l.b16 %v7117
    %v7138 = vunpack.c.l.b16 %v7118
    %v7139 = vunpack.c.l.b16 %v7119
    %v7140 = vunpack.c.l.b16 %v7120
    %v7141 = vunpack.c.l.b16 %v7121
    %v7142 = vunpack.c.l.b16 %v7122
    %v7143 = vunpack.c.l.b16 %v7123
    %v7144 = vpack.c.b16 %v7137, %v7136
    %v7145 = vpack.c.b16 %v7139, %v7138
    %v7146 = vpack.c.b16 %v7141, %v7140
    %v7147 = vpack.c.b16 %v7143, %v7142
    %v7153 = vsel %vm4829, %v7115, 0
    %7155 = vmatpush.bf16.msra.mxu0 0
    %7156 = vmatpush.bf16.msra.mxu0 0
    %7157 = vmatpush.bf16.msra.mxu0 0
    %7158 = vmatpush.bf16.msra.mxu0 0
    %7159 = vmatpush.bf16.msra.mxu0 %v7147
    %7160 = vmatpush.bf16.msra.mxu0 %v7146
    %7161 = vmatpush.bf16.msra.mxu0 %v7145
    %7162 = vmatpush.bf16.msra.mxu0 %v7144
    %7163 = vmatmul.bf16.gmra.mxu0 %v7153
    %v7164 = vpop.f32.mrf.mxu0
    %v7165 = vadd.f32 %v7126, %v7164
    %v7166 = vpop.f32.mrf.mxu0
    %7167 = vdwg.mxu0
    %7168 = vst [vmem:[%s25] sm:$0x3] %v7165
    // Predicated region
    $region170: #{vae_forward.1} parent=1 // pred_check
      _
    $region171: #{vae_forward.1} parent=1 // pred_check_branch
      %7170 = sbr.rel (0) target = $region173
    $region172: #{vae_forward.1} parent=1 // pred_region
      %7172 = vsyncadd [#allocation4], 0
      %s7174 = sshll.u32 [#allocation34], 4
      %s7175 = int_to_ptr.vmem [resolvable:$true] %s7174
      %s7176 = sshll.u32 %s22, 4
      %s7177 = int_to_ptr.hbm [resolvable:$true] %s7176
      %7179 = dma.vmem_to_hbm [thread:$0]  %s7175, 192, %s7177, [#allocation4]
    $region173: #{vae_forward.1} parent=1 // pred_fallthru
      _
    // Predicated region
    $region174: #{vae_forward.1} parent=1 // pred_check
      _
    $region175: #{vae_forward.1} parent=1 // pred_check_branch
      %7181 = sbr.rel (0) target = $region177
    $region176: #{vae_forward.1} parent=1 // pred_region
      _
    $region177: #{vae_forward.1} parent=1 // pred_fallthru
      _
    // Predicated region
    $region178: #{vae_forward.1} parent=1 // pred_check
      _
    $region179: #{vae_forward.1} parent=1 // pred_check_branch
      %7183 = sbr.rel (0) target = $region181
    $region180: #{vae_forward.1} parent=1 // pred_region
      %7185 = vsyncadd [#allocation36], 0
      %s7187 = sshll.u32 [#allocation35], 4
      %s7188 = int_to_ptr.vmem [resolvable:$true] %s7187
      %s7189 = sshll.u32 %s24, 4
      %s7190 = int_to_ptr.hbm [resolvable:$true] %s7189
      %7192 = dma.vmem_to_hbm [thread:$0]  %s7188, 64, %s7190, [#allocation36]
    $region181: #{vae_forward.1} parent=1 // pred_fallthru
      _
    // Predicated region
    $region182: #{vae_forward.1} parent=1 // pred_check
      _
    $region183: #{vae_forward.1} parent=1 // pred_check_branch
      %7194 = sbr.rel (0) target = $region185
    $region184: #{vae_forward.1} parent=1 // pred_region
      _
    $region185: #{vae_forward.1} parent=1 // pred_fallthru
      _
    // Predicated region
    $region186: #{vae_forward.1} parent=1 // pred_check
      _
    $region187: #{vae_forward.1} parent=1 // pred_check_branch
      %7196 = sbr.rel (0) target = $region189
    $region188: #{vae_forward.1} parent=1 // pred_region
      %7198 = dma.done [#allocation4], 192
    $region189: #{vae_forward.1} parent=1 // pred_fallthru
      _
    // Predicated region
    $region190: #{vae_forward.1} parent=1 // pred_check
      _
    $region191: #{vae_forward.1} parent=1 // pred_check_branch
      %7200 = sbr.rel (0) target = $region193
    $region192: #{vae_forward.1} parent=1 // pred_region
      _
    $region193: #{vae_forward.1} parent=1 // pred_fallthru
      _
    // Predicated region
    $region194: #{vae_forward.1} parent=1 // pred_check
      _
    $region195: #{vae_forward.1} parent=1 // pred_check_branch
      %7202 = sbr.rel (0) target = $region197
    $region196: #{vae_forward.1} parent=1 // pred_region
      %7204 = dma.done [#allocation36], 64
    $region197: #{vae_forward.1} parent=1 // pred_fallthru
      _
    // Predicated region
    $region198: #{vae_forward.1} parent=1 // pred_check
      _
    $region199: #{vae_forward.1} parent=1 // pred_check_branch
      %7206 = sbr.rel (0) target = $region201
    $region200: #{vae_forward.1} parent=1 // pred_region
      _
    $region201: #{vae_forward.1} parent=1 // pred_fallthru
      _
    %7207 = vsyncpa [#allocation3], 1
    %7208 = vsyncpa [#allocation6], 1
    %7209 = vsyncpa [#allocation9], 1
    %7210 = vsyncpa [#allocation12], 1
    %7211 = vsyncpa [#allocation15], 1
    %7212 = vsyncpa [#allocation18], 1
    %7213 = vsyncpa [#allocation21], 1
    %7214 = vsyncpa [#allocation24], 1
    %7215 = vsyncpa [#allocation27], 1
    %7216 = vsyncpa [#allocation30], 1
    %7217 = vsyncpa [#allocation33], 1
    %7218 = vsyncpa [#allocation4], 1
    %7219 = vsyncpa [#allocation36], 1

</llo_original>
